<compile_context>
chip_gen: v7x
topology: tpu7x:2x2x1
jax: 0.10.0
libtpu: 0.0.40
codegen_flags: <defaults>
</compile_context>

<pallas_src>
import functools

import jax
import jax.numpy as jnp
from jax import lax
from jax.experimental import pallas as pl
from jax.experimental.pallas import tpu as pltpu


def _round_up(n, m=128):
    return ((n + m - 1) // m) * m


# ---------------------------------------------------------------------------
# Fused kernel: GRU recurrence (in-kernel time loop) + MLP head.
# PyTorch GRU cell:
#   r = sigmoid(W_ir x + b_ir + W_hr h + b_hr)
#   z = sigmoid(W_iz x + b_iz + W_hz h + b_hz)
#   n = tanh  (W_in x + b_in + r * (W_hn h + b_hn))
#   h' = (1 - z) * n + z * h
# ---------------------------------------------------------------------------
def classifier_kernel(x_ref,                      # (T, Bp, E)   time-major embedded seq
                      h0_ref,                     # (Bp, Hp)
                      wi_ref, wh_ref,             # (E, 3Hp), (Hp, 3Hp)
                      b_rz_ref,                   # (1, 2Hp)  = [b_ir+b_hr | b_iz+b_hz]
                      b_in_ref, b_hn_ref,         # (1, Hp) each
                      w1_ref, b1_ref,             # (Hp, 512), (1, 512)
                      w2_ref, b2_ref,             # (512, 384), (1, 384)
                      w3_ref, b3_ref,             # (384, 256), (1, 256)
                      w4_ref, b4_ref,             # (256, Cp),  (1, Cp)
                      out_ref):                   # (Bp, Cp)
    T = x_ref.shape[0]
    Hp = h0_ref.shape[1]

    # Hoist resident weights/biases out of the time loop (loaded once).
    wi = wi_ref[...]
    wh = wh_ref[...]
    b_rz = b_rz_ref[...]
    b_in = b_in_ref[...]
    b_hn = b_hn_ref[...]

    def step(t, h):
        x = x_ref[t]                                                  # (Bp, E)
        gi = jnp.dot(x, wi, preferred_element_type=jnp.float32)      # (Bp, 3Hp)
        gh = jnp.dot(h, wh, preferred_element_type=jnp.float32)      # (Bp, 3Hp)
        rz = jax.nn.sigmoid(gi[:, :2 * Hp] + gh[:, :2 * Hp] + b_rz)  # lane-aligned split
        r = rz[:, :Hp]
        z = rz[:, Hp:]
        n = jnp.tanh(gi[:, 2 * Hp:] + b_in + r * (gh[:, 2 * Hp:] + b_hn))
        return (1.0 - z) * n + z * h

    h = lax.fori_loop(0, T, step, h0_ref[...], unroll=True)

    def dense(a, w_ref, b_ref):
        return jnp.dot(a, w_ref[...], preferred_element_type=jnp.float32) + b_ref[...]

    y = jnp.maximum(dense(h, w1_ref, b1_ref), 0.0)
    y = jnp.maximum(dense(y, w2_ref, b2_ref), 0.0)
    y = jnp.maximum(dense(y, w3_ref, b3_ref), 0.0)
    out_ref[...] = dense(y, w4_ref, b4_ref)                          # lane-dense store


def fused_classifier(emb_tbe, h0_p, packed):
    """emb_tbe: (T, Bp, E) f32, h0_p: (Bp, Hp) f32 -> padded logits (Bp, Cp)."""
    Bp = h0_p.shape[0]
    Cp = packed["b4"].shape[1]
    vmem = pl.BlockSpec(memory_space=pltpu.MemorySpace.VMEM)
    return pl.pallas_call(
        classifier_kernel,
        out_shape=jax.ShapeDtypeStruct((Bp, Cp), jnp.float32),
        in_specs=[vmem] * 15,
        out_specs=vmem,
    )(emb_tbe, h0_p,
      packed["w_i"], packed["w_h"],
      packed["b_rz"], packed["b_in"], packed["b_hn"],
      packed["w1"], packed["b1"], packed["w2"], packed["b2"],
      packed["w3"], packed["b3"], packed["w4"], packed["b4"])


# ---------------------------------------------------------------------------
# Parameter init (deterministic, PyTorch-style uniform ranges) at LOGICAL sizes,
# plus packing into the padded / fused layout the kernel consumes.
# ---------------------------------------------------------------------------
def init_params(key, voc_n, pad_idx, emb_size, hid_n, class_n):
    keys = jax.random.split(key, 6)

    def uniform(k, shape, fan_in):
        bound = 1.0 / jnp.sqrt(jnp.float32(fan_in))
        return jax.random.uniform(k, shape, jnp.float32, -bound, bound)

    emb = jax.random.normal(keys[0], (voc_n, emb_size), jnp.float32)
    emb = emb.at[pad_idx].set(0.0)  # padding_idx row is zero

    gk = jax.random.split(keys[1], 12)
    gru = {
        "w_ir": uniform(gk[0], (emb_size, hid_n), hid_n),
        "w_iz": uniform(gk[1], (emb_size, hid_n), hid_n),
        "w_in": uniform(gk[2], (emb_size, hid_n), hid_n),
        "w_hr": uniform(gk[3], (hid_n, hid_n), hid_n),
        "w_hz": uniform(gk[4], (hid_n, hid_n), hid_n),
        "w_hn": uniform(gk[5], (hid_n, hid_n), hid_n),
        "b_ir": uniform(gk[6], (1, hid_n), hid_n),
        "b_iz": uniform(gk[7], (1, hid_n), hid_n),
        "b_in": uniform(gk[8], (1, hid_n), hid_n),
        "b_hr": uniform(gk[9], (1, hid_n), hid_n),
        "b_hz": uniform(gk[10], (1, hid_n), hid_n),
        "b_hn": uniform(gk[11], (1, hid_n), hid_n),
    }

    def linear(k, fan_in, fan_out):
        kw, kb = jax.random.split(k)
        return uniform(kw, (fan_in, fan_out), fan_in), uniform(kb, (1, fan_out), fan_in)

    w1, b1 = linear(keys[2], hid_n, 500)
    w2, b2 = linear(keys[3], 500, 300)
    w3, b3 = linear(keys[4], 300, 200)
    w4, b4 = linear(keys[5], 200, class_n)

    return {"embedding": emb, "gru": gru,
            "w_fc1": w1, "b_fc1": b1, "w_fc2": w2, "b_fc2": b2,
            "w_fc3": w3, "b_fc3": b3, "w_fc4": w4, "b_fc4": b4}


def pack_params(p):
    """Zero-pad + fuse logical params into the kernel-ready layout."""
    g = p["gru"]
    E, H = g["w_ir"].shape
    Hp = _round_up(H)

    def padw(w, rows, cols):
        return jnp.pad(w, ((0, rows - w.shape[0]), (0, cols - w.shape[1])))

    # Gate-concatenated GRU weights, each gate padded to Hp lanes.
    w_i = jnp.concatenate([padw(g["w_ir"], E, Hp),
                           padw(g["w_iz"], E, Hp),
                           padw(g["w_in"], E, Hp)], axis=1)           # (E, 3Hp)
    w_h = jnp.concatenate([padw(g["w_hr"], Hp, Hp),
                           padw(g["w_hz"], Hp, Hp),
                           padw(g["w_hn"], Hp, Hp)], axis=1)          # (Hp, 3Hp)
    b_rz = jnp.concatenate([padw(g["b_ir"] + g["b_hr"], 1, Hp),
                            padw(g["b_iz"] + g["b_hz"], 1, Hp)], axis=1)  # (1, 2Hp)
    b_in = padw(g["b_in"], 1, Hp)
    b_hn = padw(g["b_hn"], 1, Hp)

    # MLP head, all dims padded to lane multiples (zero-padded => exact).
    H1p = _round_up(p["w_fc1"].shape[1])   # 500 -> 512
    H2p = _round_up(p["w_fc2"].shape[1])   # 300 -> 384
    H3p = _round_up(p["w_fc3"].shape[1])   # 200 -> 256
    Cp = _round_up(p["w_fc4"].shape[1])    # class_n -> 128

    return {
        "embedding": p["embedding"],
        "w_i": w_i, "w_h": w_h, "b_rz": b_rz, "b_in": b_in, "b_hn": b_hn,
        "w1": padw(p["w_fc1"], Hp, H1p), "b1": padw(p["b_fc1"], 1, H1p),
        "w2": padw(p["w_fc2"], H1p, H2p), "b2": padw(p["b_fc2"], 1, H2p),
        "w3": padw(p["w_fc3"], H2p, H3p), "b3": padw(p["b_fc3"], 1, H3p),
        "w4": padw(p["w_fc4"], H3p, Cp), "b4": padw(p["b_fc4"], 1, Cp),
    }


# ---------------------------------------------------------------------------
# Forward pass (single fused kernel) and pure-JAX reference.
# ---------------------------------------------------------------------------
@functools.partial(jax.jit, static_argnames=("class_n",))
def classifier_forward(packed, tokens, h0, *, class_n):
    """tokens: (B, T) int32, h0: (B, H) f32 -> logits (B, class_n)."""
    B, _ = tokens.shape
    H = h0.shape[1]
    Bp = _round_up(B, 8)                 # sublane-pad the batch
    Hp = packed["w_h"].shape[0]

    tokens_p = jnp.pad(tokens, ((0, Bp - B), (0, 0)))          # padded rows sliced off later
    h0_p = jnp.pad(h0, ((0, Bp - B), (0, Hp - H)))

    # Time-major embedding gather (no activation transpose needed).
    # TODO(synk): could fuse this gather into the kernel via scalar-prefetched ids.
    emb_tbe = jnp.take(packed["embedding"], tokens_p.T, axis=0)  # (T, Bp, E)

    out_p = fused_classifier(emb_tbe, h0_p, packed)              # (Bp, Cp)
    return out_p[:B, :class_n]


def reference_forward(params, tokens, h0):
    """Pure-JAX reference mirroring PyTorch semantics."""
    g = params["gru"]
    emb = jnp.take(params["embedding"], tokens, axis=0)

    def step(h, x):
        r = jax.nn.sigmoid(x @ g["w_ir"] + g["b_ir"] + h @ g["w_hr"] + g["b_hr"])
        z = jax.nn.sigmoid(x @ g["w_iz"] + g["b_iz"] + h @ g["w_hz"] + g["b_hz"])
        n = jnp.tanh(x @ g["w_in"] + g["b_in"] + r * (h @ g["w_hn"] + g["b_hn"]))
        return (1.0 - z) * n + z * h, None

    h, _ = jax.lax.scan(step, h0, jnp.transpose(emb, (1, 0, 2)))
    x = jax.nn.relu(h @ params["w_fc1"] + params["b_fc1"])
    x = jax.nn.relu(x @ params["w_fc2"] + params["b_fc2"])
    x = jax.nn.relu(x @ params["w_fc3"] + params["b_fc3"])
    return x @ params["w_fc4"] + params["b_fc4"]


if __name__ == "__main__":
    VOC_N, PAD_IDX, HID_N, EMB_SIZE, CLASS_N = 50, 0, 32, 16, 6
    B, T = 2, 8

    key = jax.random.PRNGKey(0)
    k_params, k_tok = jax.random.split(key)
    params = init_params(k_params, VOC_N, PAD_IDX, EMB_SIZE, HID_N, CLASS_N)
    packed = pack_params(params)

    tokens = jax.random.randint(k_tok, (B, T), 0, VOC_N, dtype=jnp.int32)
    h0 = jnp.zeros((B, HID_N), jnp.float32)  # init_hidden(), squeezed to (B, H)

    logits = classifier_forward(packed, tokens, h0, class_n=CLASS_N)
    logits = jax.block_until_ready(logits)

    ref = reference_forward(params, tokens, h0)
    assert logits.shape == (B, CLASS_N)
    assert jnp.allclose(logits, ref, atol=1e-3, rtol=1e-3), "mismatch vs reference"

    print("KERNEL_OK")
</pallas_src>

<mosaic_0001>
module attributes {stable_mosaic.version = 11 : i64} {
  func.func @classifier_kernel(%arg0: memref<8x8x16xf32, #tpu.memory_space<vmem>>, %arg1: memref<8x128xf32, #tpu.memory_space<vmem>>, %arg2: memref<16x384xf32, #tpu.memory_space<vmem>>, %arg3: memref<128x384xf32, #tpu.memory_space<vmem>>, %arg4: memref<1x256xf32, #tpu.memory_space<vmem>>, %arg5: memref<1x128xf32, #tpu.memory_space<vmem>>, %arg6: memref<1x128xf32, #tpu.memory_space<vmem>>, %arg7: memref<128x512xf32, #tpu.memory_space<vmem>>, %arg8: memref<1x512xf32, #tpu.memory_space<vmem>>, %arg9: memref<512x384xf32, #tpu.memory_space<vmem>>, %arg10: memref<1x384xf32, #tpu.memory_space<vmem>>, %arg11: memref<384x256xf32, #tpu.memory_space<vmem>>, %arg12: memref<1x256xf32, #tpu.memory_space<vmem>>, %arg13: memref<256x128xf32, #tpu.memory_space<vmem>>, %arg14: memref<1x128xf32, #tpu.memory_space<vmem>>, %arg15: memref<8x128xf32, #tpu.memory_space<vmem>>) attributes {dimension_semantics = [], scalar_prefetch = 0 : i64, scratch_operands = 0 : i64, tpu.core_type = #tpu.core_type<tc>} {
    %c0 = arith.constant 0 : index
    %c0_0 = arith.constant 0 : index
    %0 = vector.load %arg2[%c0, %c0_0] : memref<16x384xf32, #tpu.memory_space<vmem>>, vector<16x384xf32>
    %c0_1 = arith.constant 0 : index
    %c0_2 = arith.constant 0 : index
    %1 = vector.load %arg3[%c0_1, %c0_2] : memref<128x384xf32, #tpu.memory_space<vmem>>, vector<128x384xf32>
    %c0_3 = arith.constant 0 : index
    %c0_4 = arith.constant 0 : index
    %2 = vector.load %arg4[%c0_3, %c0_4] : memref<1x256xf32, #tpu.memory_space<vmem>>, vector<1x256xf32>
    %c0_5 = arith.constant 0 : index
    %c0_6 = arith.constant 0 : index
    %3 = vector.load %arg5[%c0_5, %c0_6] : memref<1x128xf32, #tpu.memory_space<vmem>>, vector<1x128xf32>
    %c0_7 = arith.constant 0 : index
    %c0_8 = arith.constant 0 : index
    %4 = vector.load %arg6[%c0_7, %c0_8] : memref<1x128xf32, #tpu.memory_space<vmem>>, vector<1x128xf32>
    %c0_9 = arith.constant 0 : index
    %c0_10 = arith.constant 0 : index
    %5 = vector.load %arg1[%c0_9, %c0_10] : memref<8x128xf32, #tpu.memory_space<vmem>>, vector<8x128xf32>
    %c0_i32 = arith.constant 0 : i32
    %6 = arith.index_cast %c0_i32 : i32 to index
    %c0_11 = arith.constant 0 : index
    %c0_12 = arith.constant 0 : index
    %7 = vector.load %arg0[%6, %c0_11, %c0_12] : memref<8x8x16xf32, #tpu.memory_space<vmem>>, vector<1x8x16xf32>
    %8 = vector.shape_cast %7 : vector<1x8x16xf32> to vector<8x16xf32>
    %cst = arith.constant dense<0.000000e+00> : vector<8x384xf32>
    %9 = tpu.matmul %8, %0, %cst {dimension_numbers = #tpu.dot_dimension_numbers<[1], [0], [0], [1], [0, 0, 1, 1], [], []>} : vector<8x16xf32>, vector<16x384xf32>, vector<8x384xf32> -> vector<8x384xf32>
    %cst_13 = arith.constant dense<0.000000e+00> : vector<8x384xf32>
    %10 = tpu.matmul %5, %1, %cst_13 {dimension_numbers = #tpu.dot_dimension_numbers<[1], [0], [0], [1], [0, 0, 1, 1], [], []>} : vector<8x128xf32>, vector<128x384xf32>, vector<8x384xf32> -> vector<8x384xf32>
    %11 = vector.extract_strided_slice %9 {offsets = [0, 0], sizes = [8, 256], strides = [1, 1]} : vector<8x384xf32> to vector<8x256xf32>
    %12 = vector.extract_strided_slice %10 {offsets = [0, 0], sizes = [8, 256], strides = [1, 1]} : vector<8x384xf32> to vector<8x256xf32>
    %13 = arith.addf %11, %12 : vector<8x256xf32>
    %14 = vector.broadcast %2 : vector<1x256xf32> to vector<8x256xf32>
    %15 = arith.addf %13, %14 : vector<8x256xf32>
    %16 = arith.negf %15 : vector<8x256xf32>
    %17 = math.exp %16 : vector<8x256xf32>
    %cst_14 = arith.constant 1.000000e+00 : f32
    %18 = vector.broadcast %cst_14 : f32 to vector<8x256xf32>
    %19 = arith.addf %18, %17 : vector<8x256xf32>
    %20 = arith.divf %18, %19 : vector<8x256xf32>
    %21 = vector.extract_strided_slice %20 {offsets = [0, 0], sizes = [8, 128], strides = [1, 1]} : vector<8x256xf32> to vector<8x128xf32>
    %22 = vector.extract_strided_slice %20 {offsets = [0, 128], sizes = [8, 128], strides = [1, 1]} : vector<8x256xf32> to vector<8x128xf32>
    %23 = vector.extract_strided_slice %9 {offsets = [0, 256], sizes = [8, 128], strides = [1, 1]} : vector<8x384xf32> to vector<8x128xf32>
    %24 = vector.broadcast %3 : vector<1x128xf32> to vector<8x128xf32>
    %25 = arith.addf %23, %24 : vector<8x128xf32>
    %26 = vector.extract_strided_slice %10 {offsets = [0, 256], sizes = [8, 128], strides = [1, 1]} : vector<8x384xf32> to vector<8x128xf32>
    %27 = vector.broadcast %4 : vector<1x128xf32> to vector<8x128xf32>
    %28 = arith.addf %26, %27 : vector<8x128xf32>
    %29 = arith.mulf %21, %28 : vector<8x128xf32>
    %30 = arith.addf %25, %29 : vector<8x128xf32>
    %31 = math.tanh %30 : vector<8x128xf32>
    %cst_15 = arith.constant 1.000000e+00 : f32
    %32 = vector.broadcast %cst_15 : f32 to vector<8x128xf32>
    %33 = arith.subf %32, %22 : vector<8x128xf32>
    %34 = arith.mulf %33, %31 : vector<8x128xf32>
    %35 = arith.mulf %22, %5 : vector<8x128xf32>
    %36 = arith.addf %34, %35 : vector<8x128xf32>
    %c1_i32 = arith.constant 1 : i32
    %37 = arith.index_cast %c1_i32 : i32 to index
    %c0_16 = arith.constant 0 : index
    %c0_17 = arith.constant 0 : index
    %38 = vector.load %arg0[%37, %c0_16, %c0_17] : memref<8x8x16xf32, #tpu.memory_space<vmem>>, vector<1x8x16xf32>
    %39 = vector.shape_cast %38 : vector<1x8x16xf32> to vector<8x16xf32>
    %cst_18 = arith.constant dense<0.000000e+00> : vector<8x384xf32>
    %40 = tpu.matmul %39, %0, %cst_18 {dimension_numbers = #tpu.dot_dimension_numbers<[1], [0], [0], [1], [0, 0, 1, 1], [], []>} : vector<8x16xf32>, vector<16x384xf32>, vector<8x384xf32> -> vector<8x384xf32>
    %cst_19 = arith.constant dense<0.000000e+00> : vector<8x384xf32>
    %41 = tpu.matmul %36, %1, %cst_19 {dimension_numbers = #tpu.dot_dimension_numbers<[1], [0], [0], [1], [0, 0, 1, 1], [], []>} : vector<8x128xf32>, vector<128x384xf32>, vector<8x384xf32> -> vector<8x384xf32>
    %42 = vector.extract_strided_slice %40 {offsets = [0, 0], sizes = [8, 256], strides = [1, 1]} : vector<8x384xf32> to vector<8x256xf32>
    %43 = vector.extract_strided_slice %41 {offsets = [0, 0], sizes = [8, 256], strides = [1, 1]} : vector<8x384xf32> to vector<8x256xf32>
    %44 = arith.addf %42, %43 : vector<8x256xf32>
    %45 = vector.broadcast %2 : vector<1x256xf32> to vector<8x256xf32>
    %46 = arith.addf %44, %45 : vector<8x256xf32>
    %47 = arith.negf %46 : vector<8x256xf32>
    %48 = math.exp %47 : vector<8x256xf32>
    %cst_20 = arith.constant 1.000000e+00 : f32
    %49 = vector.broadcast %cst_20 : f32 to vector<8x256xf32>
    %50 = arith.addf %49, %48 : vector<8x256xf32>
    %51 = arith.divf %49, %50 : vector<8x256xf32>
    %52 = vector.extract_strided_slice %51 {offsets = [0, 0], sizes = [8, 128], strides = [1, 1]} : vector<8x256xf32> to vector<8x128xf32>
    %53 = vector.extract_strided_slice %51 {offsets = [0, 128], sizes = [8, 128], strides = [1, 1]} : vector<8x256xf32> to vector<8x128xf32>
    %54 = vector.extract_strided_slice %40 {offsets = [0, 256], sizes = [8, 128], strides = [1, 1]} : vector<8x384xf32> to vector<8x128xf32>
    %55 = vector.broadcast %3 : vector<1x128xf32> to vector<8x128xf32>
    %56 = arith.addf %54, %55 : vector<8x128xf32>
    %57 = vector.extract_strided_slice %41 {offsets = [0, 256], sizes = [8, 128], strides = [1, 1]} : vector<8x384xf32> to vector<8x128xf32>
    %58 = vector.broadcast %4 : vector<1x128xf32> to vector<8x128xf32>
    %59 = arith.addf %57, %58 : vector<8x128xf32>
    %60 = arith.mulf %52, %59 : vector<8x128xf32>
    %61 = arith.addf %56, %60 : vector<8x128xf32>
    %62 = math.tanh %61 : vector<8x128xf32>
    %cst_21 = arith.constant 1.000000e+00 : f32
    %63 = vector.broadcast %cst_21 : f32 to vector<8x128xf32>
    %64 = arith.subf %63, %53 : vector<8x128xf32>
    %65 = arith.mulf %64, %62 : vector<8x128xf32>
    %66 = arith.mulf %53, %36 : vector<8x128xf32>
    %67 = arith.addf %65, %66 : vector<8x128xf32>
    %c2_i32 = arith.constant 2 : i32
    %68 = arith.index_cast %c2_i32 : i32 to index
    %c0_22 = arith.constant 0 : index
    %c0_23 = arith.constant 0 : index
    %69 = vector.load %arg0[%68, %c0_22, %c0_23] : memref<8x8x16xf32, #tpu.memory_space<vmem>>, vector<1x8x16xf32>
    %70 = vector.shape_cast %69 : vector<1x8x16xf32> to vector<8x16xf32>
    %cst_24 = arith.constant dense<0.000000e+00> : vector<8x384xf32>
    %71 = tpu.matmul %70, %0, %cst_24 {dimension_numbers = #tpu.dot_dimension_numbers<[1], [0], [0], [1], [0, 0, 1, 1], [], []>} : vector<8x16xf32>, vector<16x384xf32>, vector<8x384xf32> -> vector<8x384xf32>
    %cst_25 = arith.constant dense<0.000000e+00> : vector<8x384xf32>
    %72 = tpu.matmul %67, %1, %cst_25 {dimension_numbers = #tpu.dot_dimension_numbers<[1], [0], [0], [1], [0, 0, 1, 1], [], []>} : vector<8x128xf32>, vector<128x384xf32>, vector<8x384xf32> -> vector<8x384xf32>
    %73 = vector.extract_strided_slice %71 {offsets = [0, 0], sizes = [8, 256], strides = [1, 1]} : vector<8x384xf32> to vector<8x256xf32>
    %74 = vector.extract_strided_slice %72 {offsets = [0, 0], sizes = [8, 256], strides = [1, 1]} : vector<8x384xf32> to vector<8x256xf32>
    %75 = arith.addf %73, %74 : vector<8x256xf32>
    %76 = vector.broadcast %2 : vector<1x256xf32> to vector<8x256xf32>
    %77 = arith.addf %75, %76 : vector<8x256xf32>
    %78 = arith.negf %77 : vector<8x256xf32>
    %79 = math.exp %78 : vector<8x256xf32>
    %cst_26 = arith.constant 1.000000e+00 : f32
    %80 = vector.broadcast %cst_26 : f32 to vector<8x256xf32>
    %81 = arith.addf %80, %79 : vector<8x256xf32>
    %82 = arith.divf %80, %81 : vector<8x256xf32>
    %83 = vector.extract_strided_slice %82 {offsets = [0, 0], sizes = [8, 128], strides = [1, 1]} : vector<8x256xf32> to vector<8x128xf32>
    %84 = vector.extract_strided_slice %82 {offsets = [0, 128], sizes = [8, 128], strides = [1, 1]} : vector<8x256xf32> to vector<8x128xf32>
    %85 = vector.extract_strided_slice %71 {offsets = [0, 256], sizes = [8, 128], strides = [1, 1]} : vector<8x384xf32> to vector<8x128xf32>
    %86 = vector.broadcast %3 : vector<1x128xf32> to vector<8x128xf32>
    %87 = arith.addf %85, %86 : vector<8x128xf32>
    %88 = vector.extract_strided_slice %72 {offsets = [0, 256], sizes = [8, 128], strides = [1, 1]} : vector<8x384xf32> to vector<8x128xf32>
    %89 = vector.broadcast %4 : vector<1x128xf32> to vector<8x128xf32>
    %90 = arith.addf %88, %89 : vector<8x128xf32>
    %91 = arith.mulf %83, %90 : vector<8x128xf32>
    %92 = arith.addf %87, %91 : vector<8x128xf32>
    %93 = math.tanh %92 : vector<8x128xf32>
    %cst_27 = arith.constant 1.000000e+00 : f32
    %94 = vector.broadcast %cst_27 : f32 to vector<8x128xf32>
    %95 = arith.subf %94, %84 : vector<8x128xf32>
    %96 = arith.mulf %95, %93 : vector<8x128xf32>
    %97 = arith.mulf %84, %67 : vector<8x128xf32>
    %98 = arith.addf %96, %97 : vector<8x128xf32>
    %c3_i32 = arith.constant 3 : i32
    %99 = arith.index_cast %c3_i32 : i32 to index
    %c0_28 = arith.constant 0 : index
    %c0_29 = arith.constant 0 : index
    %100 = vector.load %arg0[%99, %c0_28, %c0_29] : memref<8x8x16xf32, #tpu.memory_space<vmem>>, vector<1x8x16xf32>
    %101 = vector.shape_cast %100 : vector<1x8x16xf32> to vector<8x16xf32>
    %cst_30 = arith.constant dense<0.000000e+00> : vector<8x384xf32>
    %102 = tpu.matmul %101, %0, %cst_30 {dimension_numbers = #tpu.dot_dimension_numbers<[1], [0], [0], [1], [0, 0, 1, 1], [], []>} : vector<8x16xf32>, vector<16x384xf32>, vector<8x384xf32> -> vector<8x384xf32>
    %cst_31 = arith.constant dense<0.000000e+00> : vector<8x384xf32>
    %103 = tpu.matmul %98, %1, %cst_31 {dimension_numbers = #tpu.dot_dimension_numbers<[1], [0], [0], [1], [0, 0, 1, 1], [], []>} : vector<8x128xf32>, vector<128x384xf32>, vector<8x384xf32> -> vector<8x384xf32>
    %104 = vector.extract_strided_slice %102 {offsets = [0, 0], sizes = [8, 256], strides = [1, 1]} : vector<8x384xf32> to vector<8x256xf32>
    %105 = vector.extract_strided_slice %103 {offsets = [0, 0], sizes = [8, 256], strides = [1, 1]} : vector<8x384xf32> to vector<8x256xf32>
    %106 = arith.addf %104, %105 : vector<8x256xf32>
    %107 = vector.broadcast %2 : vector<1x256xf32> to vector<8x256xf32>
    %108 = arith.addf %106, %107 : vector<8x256xf32>
    %109 = arith.negf %108 : vector<8x256xf32>
    %110 = math.exp %109 : vector<8x256xf32>
    %cst_32 = arith.constant 1.000000e+00 : f32
    %111 = vector.broadcast %cst_32 : f32 to vector<8x256xf32>
    %112 = arith.addf %111, %110 : vector<8x256xf32>
    %113 = arith.divf %111, %112 : vector<8x256xf32>
    %114 = vector.extract_strided_slice %113 {offsets = [0, 0], sizes = [8, 128], strides = [1, 1]} : vector<8x256xf32> to vector<8x128xf32>
    %115 = vector.extract_strided_slice %113 {offsets = [0, 128], sizes = [8, 128], strides = [1, 1]} : vector<8x256xf32> to vector<8x128xf32>
    %116 = vector.extract_strided_slice %102 {offsets = [0, 256], sizes = [8, 128], strides = [1, 1]} : vector<8x384xf32> to vector<8x128xf32>
    %117 = vector.broadcast %3 : vector<1x128xf32> to vector<8x128xf32>
    %118 = arith.addf %116, %117 : vector<8x128xf32>
    %119 = vector.extract_strided_slice %103 {offsets = [0, 256], sizes = [8, 128], strides = [1, 1]} : vector<8x384xf32> to vector<8x128xf32>
    %120 = vector.broadcast %4 : vector<1x128xf32> to vector<8x128xf32>
    %121 = arith.addf %119, %120 : vector<8x128xf32>
    %122 = arith.mulf %114, %121 : vector<8x128xf32>
    %123 = arith.addf %118, %122 : vector<8x128xf32>
    %124 = math.tanh %123 : vector<8x128xf32>
    %cst_33 = arith.constant 1.000000e+00 : f32
    %125 = vector.broadcast %cst_33 : f32 to vector<8x128xf32>
    %126 = arith.subf %125, %115 : vector<8x128xf32>
    %127 = arith.mulf %126, %124 : vector<8x128xf32>
    %128 = arith.mulf %115, %98 : vector<8x128xf32>
    %129 = arith.addf %127, %128 : vector<8x128xf32>
    %c4_i32 = arith.constant 4 : i32
    %130 = arith.index_cast %c4_i32 : i32 to index
    %c0_34 = arith.constant 0 : index
    %c0_35 = arith.constant 0 : index
    %131 = vector.load %arg0[%130, %c0_34, %c0_35] : memref<8x8x16xf32, #tpu.memory_space<vmem>>, vector<1x8x16xf32>
    %132 = vector.shape_cast %131 : vector<1x8x16xf32> to vector<8x16xf32>
    %cst_36 = arith.constant dense<0.000000e+00> : vector<8x384xf32>
    %133 = tpu.matmul %132, %0, %cst_36 {dimension_numbers = #tpu.dot_dimension_numbers<[1], [0], [0], [1], [0, 0, 1, 1], [], []>} : vector<8x16xf32>, vector<16x384xf32>, vector<8x384xf32> -> vector<8x384xf32>
    %cst_37 = arith.constant dense<0.000000e+00> : vector<8x384xf32>
    %134 = tpu.matmul %129, %1, %cst_37 {dimension_numbers = #tpu.dot_dimension_numbers<[1], [0], [0], [1], [0, 0, 1, 1], [], []>} : vector<8x128xf32>, vector<128x384xf32>, vector<8x384xf32> -> vector<8x384xf32>
    %135 = vector.extract_strided_slice %133 {offsets = [0, 0], sizes = [8, 256], strides = [1, 1]} : vector<8x384xf32> to vector<8x256xf32>
    %136 = vector.extract_strided_slice %134 {offsets = [0, 0], sizes = [8, 256], strides = [1, 1]} : vector<8x384xf32> to vector<8x256xf32>
    %137 = arith.addf %135, %136 : vector<8x256xf32>
    %138 = vector.broadcast %2 : vector<1x256xf32> to vector<8x256xf32>
    %139 = arith.addf %137, %138 : vector<8x256xf32>
    %140 = arith.negf %139 : vector<8x256xf32>
    %141 = math.exp %140 : vector<8x256xf32>
    %cst_38 = arith.constant 1.000000e+00 : f32
    %142 = vector.broadcast %cst_38 : f32 to vector<8x256xf32>
    %143 = arith.addf %142, %141 : vector<8x256xf32>
    %144 = arith.divf %142, %143 : vector<8x256xf32>
    %145 = vector.extract_strided_slice %144 {offsets = [0, 0], sizes = [8, 128], strides = [1, 1]} : vector<8x256xf32> to vector<8x128xf32>
    %146 = vector.extract_strided_slice %144 {offsets = [0, 128], sizes = [8, 128], strides = [1, 1]} : vector<8x256xf32> to vector<8x128xf32>
    %147 = vector.extract_strided_slice %133 {offsets = [0, 256], sizes = [8, 128], strides = [1, 1]} : vector<8x384xf32> to vector<8x128xf32>
    %148 = vector.broadcast %3 : vector<1x128xf32> to vector<8x128xf32>
    %149 = arith.addf %147, %148 : vector<8x128xf32>
    %150 = vector.extract_strided_slice %134 {offsets = [0, 256], sizes = [8, 128], strides = [1, 1]} : vector<8x384xf32> to vector<8x128xf32>
    %151 = vector.broadcast %4 : vector<1x128xf32> to vector<8x128xf32>
    %152 = arith.addf %150, %151 : vector<8x128xf32>
    %153 = arith.mulf %145, %152 : vector<8x128xf32>
    %154 = arith.addf %149, %153 : vector<8x128xf32>
    %155 = math.tanh %154 : vector<8x128xf32>
    %cst_39 = arith.constant 1.000000e+00 : f32
    %156 = vector.broadcast %cst_39 : f32 to vector<8x128xf32>
    %157 = arith.subf %156, %146 : vector<8x128xf32>
    %158 = arith.mulf %157, %155 : vector<8x128xf32>
    %159 = arith.mulf %146, %129 : vector<8x128xf32>
    %160 = arith.addf %158, %159 : vector<8x128xf32>
    %c5_i32 = arith.constant 5 : i32
    %161 = arith.index_cast %c5_i32 : i32 to index
    %c0_40 = arith.constant 0 : index
    %c0_41 = arith.constant 0 : index
    %162 = vector.load %arg0[%161, %c0_40, %c0_41] : memref<8x8x16xf32, #tpu.memory_space<vmem>>, vector<1x8x16xf32>
    %163 = vector.shape_cast %162 : vector<1x8x16xf32> to vector<8x16xf32>
    %cst_42 = arith.constant dense<0.000000e+00> : vector<8x384xf32>
    %164 = tpu.matmul %163, %0, %cst_42 {dimension_numbers = #tpu.dot_dimension_numbers<[1], [0], [0], [1], [0, 0, 1, 1], [], []>} : vector<8x16xf32>, vector<16x384xf32>, vector<8x384xf32> -> vector<8x384xf32>
    %cst_43 = arith.constant dense<0.000000e+00> : vector<8x384xf32>
    %165 = tpu.matmul %160, %1, %cst_43 {dimension_numbers = #tpu.dot_dimension_numbers<[1], [0], [0], [1], [0, 0, 1, 1], [], []>} : vector<8x128xf32>, vector<128x384xf32>, vector<8x384xf32> -> vector<8x384xf32>
    %166 = vector.extract_strided_slice %164 {offsets = [0, 0], sizes = [8, 256], strides = [1, 1]} : vector<8x384xf32> to vector<8x256xf32>
    %167 = vector.extract_strided_slice %165 {offsets = [0, 0], sizes = [8, 256], strides = [1, 1]} : vector<8x384xf32> to vector<8x256xf32>
    %168 = arith.addf %166, %167 : vector<8x256xf32>
    %169 = vector.broadcast %2 : vector<1x256xf32> to vector<8x256xf32>
    %170 = arith.addf %168, %169 : vector<8x256xf32>
    %171 = arith.negf %170 : vector<8x256xf32>
    %172 = math.exp %171 : vector<8x256xf32>
    %cst_44 = arith.constant 1.000000e+00 : f32
    %173 = vector.broadcast %cst_44 : f32 to vector<8x256xf32>
    %174 = arith.addf %173, %172 : vector<8x256xf32>
    %175 = arith.divf %173, %174 : vector<8x256xf32>
    %176 = vector.extract_strided_slice %175 {offsets = [0, 0], sizes = [8, 128], strides = [1, 1]} : vector<8x256xf32> to vector<8x128xf32>
    %177 = vector.extract_strided_slice %175 {offsets = [0, 128], sizes = [8, 128], strides = [1, 1]} : vector<8x256xf32> to vector<8x128xf32>
    %178 = vector.extract_strided_slice %164 {offsets = [0, 256], sizes = [8, 128], strides = [1, 1]} : vector<8x384xf32> to vector<8x128xf32>
    %179 = vector.broadcast %3 : vector<1x128xf32> to vector<8x128xf32>
    %180 = arith.addf %178, %179 : vector<8x128xf32>
    %181 = vector.extract_strided_slice %165 {offsets = [0, 256], sizes = [8, 128], strides = [1, 1]} : vector<8x384xf32> to vector<8x128xf32>
    %182 = vector.broadcast %4 : vector<1x128xf32> to vector<8x128xf32>
    %183 = arith.addf %181, %182 : vector<8x128xf32>
    %184 = arith.mulf %176, %183 : vector<8x128xf32>
    %185 = arith.addf %180, %184 : vector<8x128xf32>
    %186 = math.tanh %185 : vector<8x128xf32>
    %cst_45 = arith.constant 1.000000e+00 : f32
    %187 = vector.broadcast %cst_45 : f32 to vector<8x128xf32>
    %188 = arith.subf %187, %177 : vector<8x128xf32>
    %189 = arith.mulf %188, %186 : vector<8x128xf32>
    %190 = arith.mulf %177, %160 : vector<8x128xf32>
    %191 = arith.addf %189, %190 : vector<8x128xf32>
    %c6_i32 = arith.constant 6 : i32
    %192 = arith.index_cast %c6_i32 : i32 to index
    %c0_46 = arith.constant 0 : index
    %c0_47 = arith.constant 0 : index
    %193 = vector.load %arg0[%192, %c0_46, %c0_47] : memref<8x8x16xf32, #tpu.memory_space<vmem>>, vector<1x8x16xf32>
    %194 = vector.shape_cast %193 : vector<1x8x16xf32> to vector<8x16xf32>
    %cst_48 = arith.constant dense<0.000000e+00> : vector<8x384xf32>
    %195 = tpu.matmul %194, %0, %cst_48 {dimension_numbers = #tpu.dot_dimension_numbers<[1], [0], [0], [1], [0, 0, 1, 1], [], []>} : vector<8x16xf32>, vector<16x384xf32>, vector<8x384xf32> -> vector<8x384xf32>
    %cst_49 = arith.constant dense<0.000000e+00> : vector<8x384xf32>
    %196 = tpu.matmul %191, %1, %cst_49 {dimension_numbers = #tpu.dot_dimension_numbers<[1], [0], [0], [1], [0, 0, 1, 1], [], []>} : vector<8x128xf32>, vector<128x384xf32>, vector<8x384xf32> -> vector<8x384xf32>
    %197 = vector.extract_strided_slice %195 {offsets = [0, 0], sizes = [8, 256], strides = [1, 1]} : vector<8x384xf32> to vector<8x256xf32>
    %198 = vector.extract_strided_slice %196 {offsets = [0, 0], sizes = [8, 256], strides = [1, 1]} : vector<8x384xf32> to vector<8x256xf32>
    %199 = arith.addf %197, %198 : vector<8x256xf32>
    %200 = vector.broadcast %2 : vector<1x256xf32> to vector<8x256xf32>
    %201 = arith.addf %199, %200 : vector<8x256xf32>
    %202 = arith.negf %201 : vector<8x256xf32>
    %203 = math.exp %202 : vector<8x256xf32>
    %cst_50 = arith.constant 1.000000e+00 : f32
    %204 = vector.broadcast %cst_50 : f32 to vector<8x256xf32>
    %205 = arith.addf %204, %203 : vector<8x256xf32>
    %206 = arith.divf %204, %205 : vector<8x256xf32>
    %207 = vector.extract_strided_slice %206 {offsets = [0, 0], sizes = [8, 128], strides = [1, 1]} : vector<8x256xf32> to vector<8x128xf32>
    %208 = vector.extract_strided_slice %206 {offsets = [0, 128], sizes = [8, 128], strides = [1, 1]} : vector<8x256xf32> to vector<8x128xf32>
    %209 = vector.extract_strided_slice %195 {offsets = [0, 256], sizes = [8, 128], strides = [1, 1]} : vector<8x384xf32> to vector<8x128xf32>
    %210 = vector.broadcast %3 : vector<1x128xf32> to vector<8x128xf32>
    %211 = arith.addf %209, %210 : vector<8x128xf32>
    %212 = vector.extract_strided_slice %196 {offsets = [0, 256], sizes = [8, 128], strides = [1, 1]} : vector<8x384xf32> to vector<8x128xf32>
    %213 = vector.broadcast %4 : vector<1x128xf32> to vector<8x128xf32>
    %214 = arith.addf %212, %213 : vector<8x128xf32>
    %215 = arith.mulf %207, %214 : vector<8x128xf32>
    %216 = arith.addf %211, %215 : vector<8x128xf32>
    %217 = math.tanh %216 : vector<8x128xf32>
    %cst_51 = arith.constant 1.000000e+00 : f32
    %218 = vector.broadcast %cst_51 : f32 to vector<8x128xf32>
    %219 = arith.subf %218, %208 : vector<8x128xf32>
    %220 = arith.mulf %219, %217 : vector<8x128xf32>
    %221 = arith.mulf %208, %191 : vector<8x128xf32>
    %222 = arith.addf %220, %221 : vector<8x128xf32>
    %c7_i32 = arith.constant 7 : i32
    %223 = arith.index_cast %c7_i32 : i32 to index
    %c0_52 = arith.constant 0 : index
    %c0_53 = arith.constant 0 : index
    %224 = vector.load %arg0[%223, %c0_52, %c0_53] : memref<8x8x16xf32, #tpu.memory_space<vmem>>, vector<1x8x16xf32>
    %225 = vector.shape_cast %224 : vector<1x8x16xf32> to vector<8x16xf32>
    %cst_54 = arith.constant dense<0.000000e+00> : vector<8x384xf32>
    %226 = tpu.matmul %225, %0, %cst_54 {dimension_numbers = #tpu.dot_dimension_numbers<[1], [0], [0], [1], [0, 0, 1, 1], [], []>} : vector<8x16xf32>, vector<16x384xf32>, vector<8x384xf32> -> vector<8x384xf32>
    %cst_55 = arith.constant dense<0.000000e+00> : vector<8x384xf32>
    %227 = tpu.matmul %222, %1, %cst_55 {dimension_numbers = #tpu.dot_dimension_numbers<[1], [0], [0], [1], [0, 0, 1, 1], [], []>} : vector<8x128xf32>, vector<128x384xf32>, vector<8x384xf32> -> vector<8x384xf32>
    %228 = vector.extract_strided_slice %226 {offsets = [0, 0], sizes = [8, 256], strides = [1, 1]} : vector<8x384xf32> to vector<8x256xf32>
    %229 = vector.extract_strided_slice %227 {offsets = [0, 0], sizes = [8, 256], strides = [1, 1]} : vector<8x384xf32> to vector<8x256xf32>
    %230 = arith.addf %228, %229 : vector<8x256xf32>
    %231 = vector.broadcast %2 : vector<1x256xf32> to vector<8x256xf32>
    %232 = arith.addf %230, %231 : vector<8x256xf32>
    %233 = arith.negf %232 : vector<8x256xf32>
    %234 = math.exp %233 : vector<8x256xf32>
    %cst_56 = arith.constant 1.000000e+00 : f32
    %235 = vector.broadcast %cst_56 : f32 to vector<8x256xf32>
    %236 = arith.addf %235, %234 : vector<8x256xf32>
    %237 = arith.divf %235, %236 : vector<8x256xf32>
    %238 = vector.extract_strided_slice %237 {offsets = [0, 0], sizes = [8, 128], strides = [1, 1]} : vector<8x256xf32> to vector<8x128xf32>
    %239 = vector.extract_strided_slice %237 {offsets = [0, 128], sizes = [8, 128], strides = [1, 1]} : vector<8x256xf32> to vector<8x128xf32>
    %240 = vector.extract_strided_slice %226 {offsets = [0, 256], sizes = [8, 128], strides = [1, 1]} : vector<8x384xf32> to vector<8x128xf32>
    %241 = vector.broadcast %3 : vector<1x128xf32> to vector<8x128xf32>
    %242 = arith.addf %240, %241 : vector<8x128xf32>
    %243 = vector.extract_strided_slice %227 {offsets = [0, 256], sizes = [8, 128], strides = [1, 1]} : vector<8x384xf32> to vector<8x128xf32>
    %244 = vector.broadcast %4 : vector<1x128xf32> to vector<8x128xf32>
    %245 = arith.addf %243, %244 : vector<8x128xf32>
    %246 = arith.mulf %238, %245 : vector<8x128xf32>
    %247 = arith.addf %242, %246 : vector<8x128xf32>
    %248 = math.tanh %247 : vector<8x128xf32>
    %cst_57 = arith.constant 1.000000e+00 : f32
    %249 = vector.broadcast %cst_57 : f32 to vector<8x128xf32>
    %250 = arith.subf %249, %239 : vector<8x128xf32>
    %251 = arith.mulf %250, %248 : vector<8x128xf32>
    %252 = arith.mulf %239, %222 : vector<8x128xf32>
    %253 = arith.addf %251, %252 : vector<8x128xf32>
    %c8_i32 = arith.constant 8 : i32
    %c0_58 = arith.constant 0 : index
    %c0_59 = arith.constant 0 : index
    %254 = vector.load %arg7[%c0_58, %c0_59] : memref<128x512xf32, #tpu.memory_space<vmem>>, vector<128x512xf32>
    %cst_60 = arith.constant dense<0.000000e+00> : vector<8x512xf32>
    %255 = tpu.matmul %253, %254, %cst_60 {dimension_numbers = #tpu.dot_dimension_numbers<[1], [0], [0], [1], [0, 0, 1, 1], [], []>} : vector<8x128xf32>, vector<128x512xf32>, vector<8x512xf32> -> vector<8x512xf32>
    %c0_61 = arith.constant 0 : index
    %c0_62 = arith.constant 0 : index
    %256 = vector.load %arg8[%c0_61, %c0_62] : memref<1x512xf32, #tpu.memory_space<vmem>>, vector<1x512xf32>
    %257 = vector.broadcast %256 : vector<1x512xf32> to vector<8x512xf32>
    %258 = arith.addf %255, %257 : vector<8x512xf32>
    %cst_63 = arith.constant 0.000000e+00 : f32
    %259 = vector.broadcast %cst_63 : f32 to vector<8x512xf32>
    %260 = arith.maximumf %258, %259 : vector<8x512xf32>
    %c0_64 = arith.constant 0 : index
    %c0_65 = arith.constant 0 : index
    %261 = vector.load %arg9[%c0_64, %c0_65] : memref<512x384xf32, #tpu.memory_space<vmem>>, vector<512x384xf32>
    %cst_66 = arith.constant dense<0.000000e+00> : vector<8x384xf32>
    %262 = tpu.matmul %260, %261, %cst_66 {dimension_numbers = #tpu.dot_dimension_numbers<[1], [0], [0], [1], [0, 0, 1, 1], [], []>} : vector<8x512xf32>, vector<512x384xf32>, vector<8x384xf32> -> vector<8x384xf32>
    %c0_67 = arith.constant 0 : index
    %c0_68 = arith.constant 0 : index
    %263 = vector.load %arg10[%c0_67, %c0_68] : memref<1x384xf32, #tpu.memory_space<vmem>>, vector<1x384xf32>
    %264 = vector.broadcast %263 : vector<1x384xf32> to vector<8x384xf32>
    %265 = arith.addf %262, %264 : vector<8x384xf32>
    %cst_69 = arith.constant 0.000000e+00 : f32
    %266 = vector.broadcast %cst_69 : f32 to vector<8x384xf32>
    %267 = arith.maximumf %265, %266 : vector<8x384xf32>
    %c0_70 = arith.constant 0 : index
    %c0_71 = arith.constant 0 : index
    %268 = vector.load %arg11[%c0_70, %c0_71] : memref<384x256xf32, #tpu.memory_space<vmem>>, vector<384x256xf32>
    %cst_72 = arith.constant dense<0.000000e+00> : vector<8x256xf32>
    %269 = tpu.matmul %267, %268, %cst_72 {dimension_numbers = #tpu.dot_dimension_numbers<[1], [0], [0], [1], [0, 0, 1, 1], [], []>} : vector<8x384xf32>, vector<384x256xf32>, vector<8x256xf32> -> vector<8x256xf32>
    %c0_73 = arith.constant 0 : index
    %c0_74 = arith.constant 0 : index
    %270 = vector.load %arg12[%c0_73, %c0_74] : memref<1x256xf32, #tpu.memory_space<vmem>>, vector<1x256xf32>
    %271 = vector.broadcast %270 : vector<1x256xf32> to vector<8x256xf32>
    %272 = arith.addf %269, %271 : vector<8x256xf32>
    %cst_75 = arith.constant 0.000000e+00 : f32
    %273 = vector.broadcast %cst_75 : f32 to vector<8x256xf32>
    %274 = arith.maximumf %272, %273 : vector<8x256xf32>
    %c0_76 = arith.constant 0 : index
    %c0_77 = arith.constant 0 : index
    %275 = vector.load %arg13[%c0_76, %c0_77] : memref<256x128xf32, #tpu.memory_space<vmem>>, vector<256x128xf32>
    %cst_78 = arith.constant dense<0.000000e+00> : vector<8x128xf32>
    %276 = tpu.matmul %274, %275, %cst_78 {dimension_numbers = #tpu.dot_dimension_numbers<[1], [0], [0], [1], [0, 0, 1, 1], [], []>} : vector<8x256xf32>, vector<256x128xf32>, vector<8x128xf32> -> vector<8x128xf32>
    %c0_79 = arith.constant 0 : index
    %c0_80 = arith.constant 0 : index
    %277 = vector.load %arg14[%c0_79, %c0_80] : memref<1x128xf32, #tpu.memory_space<vmem>>, vector<1x128xf32>
    %278 = vector.broadcast %277 : vector<1x128xf32> to vector<8x128xf32>
    %279 = arith.addf %276, %278 : vector<8x128xf32>
    %c0_81 = arith.constant 0 : index
    %c0_82 = arith.constant 0 : index
    %280 = vector.load %arg15[%c0_81, %c0_82] : memref<8x128xf32, #tpu.memory_space<vmem>>, vector<8x128xf32>
    tpu.vector_store %arg15[%c0_81, %c0_82], %279 {strides = array<i32>} : memref<8x128xf32, #tpu.memory_space<vmem>>, vector<8x128xf32>,
    return
  }
}

</mosaic_0001>

<llo_original>
// kernel: classifier_forward.1
$region0: #{classifier_forward.1}
  #allocation0 [shape = 'u32[]', space=smem, size = 0x4, offset = 0x4, fixed_abs, tag = 'smem constant byte address 0x4 - core index']
  #allocation1 [shape = 'u32[144,128]{1,0:T(1,128)}', space=vmem, size = 0x12000, scoped, tag = 'internal scratch']
  %s0 = inlined_call_operand.vmem [shape: f32[8,8,16], index: 0, kind: input, shape index: {}]
  %s1 = inlined_call_operand.vmem [shape: f32[8,128], index: 1, kind: input, shape index: {}]
  %s2 = inlined_call_operand.vmem [shape: f32[16,384], index: 2, kind: input, shape index: {}]
  %s3 = inlined_call_operand.hbm [shape: f32[128,384], index: 3, kind: input, shape index: {}]
  %s4 = inlined_call_operand.vmem [shape: f32[1,256], index: 4, kind: input, shape index: {}]
  %s5 = inlined_call_operand.vmem [shape: f32[1,128], index: 5, kind: input, shape index: {}]
  %s6 = inlined_call_operand.vmem [shape: f32[1,128], index: 6, kind: input, shape index: {}]
  %s7 = inlined_call_operand.hbm [shape: f32[128,512], index: 7, kind: input, shape index: {}]
  %s8 = inlined_call_operand.vmem [shape: f32[1,512], index: 8, kind: input, shape index: {}]
  %s9 = inlined_call_operand.hbm [shape: f32[512,384], index: 9, kind: input, shape index: {}]
  %s10 = inlined_call_operand.vmem [shape: f32[1,384], index: 10, kind: input, shape index: {}]
  %s11 = inlined_call_operand.vmem [shape: f32[384,256], index: 11, kind: input, shape index: {}]
  %s12 = inlined_call_operand.vmem [shape: f32[1,256], index: 12, kind: input, shape index: {}]
  %s13 = inlined_call_operand.hbm [shape: f32[256,128], index: 13, kind: input, shape index: {}]
  %s14 = inlined_call_operand.vmem [shape: f32[1,128], index: 14, kind: input, shape index: {}]
  %s15 = inlined_call_operand.vmem [shape: f32[8,128], index: 15, kind: output, shape index: {}]
  %s16 = sld [smem:[#allocation0]]
  $region86: #{classifier_forward.1} parent=0
    _
  %s18 = ssub.s32 1, %s16
  %s19 = scalar_select 0, %s18, %s16
  $region1: #{classifier_forward.1} parent=0
    #allocation2 [shape = 'u8[196608]{0}', space=vmem, size = 0x30000, scoped, tag = 'input window, operand 3, single buffered']
    #allocation3 [shape = 's32[1]{0}', space=sflag, size = 0x4, scoped, tag = 'scoped memory for classifier_forward.1']
    #allocation4 [shape = 'u8[262144]{0}', space=vmem, size = 0x40000, scoped, tag = 'input window, operand 7, single buffered']
    #allocation5 [shape = 's32[1]{0}', space=sflag, size = 0x4, scoped, tag = 'scoped memory for classifier_forward.1']
    #allocation6 [shape = 'u8[786432]{0}', space=vmem, size = 0xc0000, scoped, tag = 'input window, operand 9, single buffered']
    #allocation7 [shape = 'u8[131072]{0}', space=vmem, size = 0x20000, scoped, tag = 'input window, operand 13, single buffered']
    #allocation8 [shape = 's32[1]{0}', space=sflag, size = 0x4, scoped, tag = 'scoped memory for classifier_forward.1']
    %20 = vsyncpa [#allocation3], 0
    %21 = vsyncpa [#allocation5], 0
    %22 = vsyncpa [#allocation8], 0
    // Predicated region
    $region2: #{classifier_forward.1} parent=1 // pred_check
      _
    $region3: #{classifier_forward.1} parent=1 // pred_check_branch
      %24 = sbr.rel (0) target = $region5
    $region4: #{classifier_forward.1} parent=1 // pred_region
      _
    $region5: #{classifier_forward.1} parent=1 // pred_fallthru
      _
    // Predicated region
    $region6: #{classifier_forward.1} parent=1 // pred_check
      _
    $region7: #{classifier_forward.1} parent=1 // pred_check_branch
      %26 = sbr.rel (0) target = $region9
    $region8: #{classifier_forward.1} parent=1 // pred_region
      _
    $region9: #{classifier_forward.1} parent=1 // pred_fallthru
      _
    // Predicated region
    $region10: #{classifier_forward.1} parent=1 // pred_check
      _
    $region11: #{classifier_forward.1} parent=1 // pred_check_branch
      %28 = sbr.rel (0) target = $region13
    $region12: #{classifier_forward.1} parent=1 // pred_region
      _
    $region13: #{classifier_forward.1} parent=1 // pred_fallthru
      _
    // Predicated region
    $region14: #{classifier_forward.1} parent=1 // pred_check
      _
    $region15: #{classifier_forward.1} parent=1 // pred_check_branch
      %30 = sbr.rel (0) target = $region17
    $region16: #{classifier_forward.1} parent=1 // pred_region
      %s32 = ssub.s32 6144, 6144
      %33 = vsyncadd [#allocation3], %s32
      %s34 = sshll.u32 [#allocation2], 4
      %s35 = int_to_ptr.vmem [resolvable:$true] %s34
      %40 = dma.hbm_to_vmem [thread:$0]  %s3, 6144, %s35, [#allocation3], 384, 384, 24
    $region17: #{classifier_forward.1} parent=1 // pred_fallthru
      _
    // Predicated region
    $region18: #{classifier_forward.1} parent=1 // pred_check
      _
    $region19: #{classifier_forward.1} parent=1 // pred_check_branch
      %42 = sbr.rel (0) target = $region21
    $region20: #{classifier_forward.1} parent=1 // pred_region
      _
    $region21: #{classifier_forward.1} parent=1 // pred_fallthru
      _
    // Predicated region
    $region22: #{classifier_forward.1} parent=1 // pred_check
      _
    $region23: #{classifier_forward.1} parent=1 // pred_check_branch
      %44 = sbr.rel (0) target = $region25
    $region24: #{classifier_forward.1} parent=1 // pred_region
      _
    $region25: #{classifier_forward.1} parent=1 // pred_fallthru
      _
    // Predicated region
    $region26: #{classifier_forward.1} parent=1 // pred_check
      _
    $region27: #{classifier_forward.1} parent=1 // pred_check_branch
      %46 = sbr.rel (0) target = $region29
    $region28: #{classifier_forward.1} parent=1 // pred_region
      _
    $region29: #{classifier_forward.1} parent=1 // pred_fallthru
      _
    // Predicated region
    $region30: #{classifier_forward.1} parent=1 // pred_check
      _
    $region31: #{classifier_forward.1} parent=1 // pred_check_branch
      %48 = sbr.rel (0) target = $region33
    $region32: #{classifier_forward.1} parent=1 // pred_region
      %s50 = ssub.s32 8192, 8192
      %51 = vsyncadd [#allocation5], %s50
      %s52 = sshll.u32 [#allocation4], 4
      %s53 = int_to_ptr.vmem [resolvable:$true] %s52
      %58 = dma.hbm_to_vmem [thread:$0]  %s7, 8192, %s53, [#allocation5], 512, 512, 32
    $region33: #{classifier_forward.1} parent=1 // pred_fallthru
      _
    // Predicated region
    $region34: #{classifier_forward.1} parent=1 // pred_check
      _
    $region35: #{classifier_forward.1} parent=1 // pred_check_branch
      %60 = sbr.rel (0) target = $region37
    $region36: #{classifier_forward.1} parent=1 // pred_region
      _
    $region37: #{classifier_forward.1} parent=1 // pred_fallthru
      _
    // Predicated region
    $region38: #{classifier_forward.1} parent=1 // pred_check
      _
    $region39: #{classifier_forward.1} parent=1 // pred_check_branch
      %62 = sbr.rel (0) target = $region41
    $region40: #{classifier_forward.1} parent=1 // pred_region
      %s64 = ssub.s32 24576, 24576
      %65 = vsyncadd [#allocation5], %s64
      %s66 = sshll.u32 [#allocation6], 4
      %s67 = int_to_ptr.vmem [resolvable:$true] %s66
      %72 = dma.hbm_to_vmem [thread:$0]  %s9, 24576, %s67, [#allocation5], 384, 384, 24
    $region41: #{classifier_forward.1} parent=1 // pred_fallthru
      _
    // Predicated region
    $region42: #{classifier_forward.1} parent=1 // pred_check
      _
    $region43: #{classifier_forward.1} parent=1 // pred_check_branch
      %74 = sbr.rel (0) target = $region45
    $region44: #{classifier_forward.1} parent=1 // pred_region
      _
    $region45: #{classifier_forward.1} parent=1 // pred_fallthru
      _
    // Predicated region
    $region46: #{classifier_forward.1} parent=1 // pred_check
      _
    $region47: #{classifier_forward.1} parent=1 // pred_check_branch
      %76 = sbr.rel (0) target = $region49
    $region48: #{classifier_forward.1} parent=1 // pred_region
      _
    $region49: #{classifier_forward.1} parent=1 // pred_fallthru
      _
    // Predicated region
    $region50: #{classifier_forward.1} parent=1 // pred_check
      _
    $region51: #{classifier_forward.1} parent=1 // pred_check_branch
      %78 = sbr.rel (0) target = $region53
    $region52: #{classifier_forward.1} parent=1 // pred_region
      _
    $region53: #{classifier_forward.1} parent=1 // pred_fallthru
      _
    // Predicated region
    $region54: #{classifier_forward.1} parent=1 // pred_check
      _
    $region55: #{classifier_forward.1} parent=1 // pred_check_branch
      %80 = sbr.rel (0) target = $region57
    $region56: #{classifier_forward.1} parent=1 // pred_region
      %s82 = ssub.s32 4096, 4096
      %83 = vsyncadd [#allocation8], %s82
      %s84 = sshll.u32 [#allocation7], 4
      %s85 = int_to_ptr.vmem [resolvable:$true] %s84
      %90 = dma.hbm_to_vmem [thread:$0]  %s13, 4096, %s85, [#allocation8], 128, 128, 8
    $region57: #{classifier_forward.1} parent=1 // pred_fallthru
      _
    // Predicated region
    $region58: #{classifier_forward.1} parent=1 // pred_check
      _
    $region59: #{classifier_forward.1} parent=1 // pred_check_branch
      %92 = sbr.rel (0) target = $region61
    $region60: #{classifier_forward.1} parent=1 // pred_region
      _
    $region61: #{classifier_forward.1} parent=1 // pred_fallthru
      _
    // Predicated region
    $region62: #{classifier_forward.1} parent=1 // pred_check
      _
    $region63: #{classifier_forward.1} parent=1 // pred_check_branch
      %94 = sbr.rel (0) target = $region65
    $region64: #{classifier_forward.1} parent=1 // pred_region
      %95 = dma.done [#allocation3], 6144
    $region65: #{classifier_forward.1} parent=1 // pred_fallthru
      _
    // Predicated region
    $region66: #{classifier_forward.1} parent=1 // pred_check
      _
    $region67: #{classifier_forward.1} parent=1 // pred_check_branch
      %97 = sbr.rel (0) target = $region69
    $region68: #{classifier_forward.1} parent=1 // pred_region
      %98 = dma.done [#allocation5], 8192
    $region69: #{classifier_forward.1} parent=1 // pred_fallthru
      _
    // Predicated region
    $region70: #{classifier_forward.1} parent=1 // pred_check
      _
    $region71: #{classifier_forward.1} parent=1 // pred_check_branch
      %100 = sbr.rel (0) target = $region73
    $region72: #{classifier_forward.1} parent=1 // pred_region
      %101 = dma.done [#allocation5], 24576
    $region73: #{classifier_forward.1} parent=1 // pred_fallthru
      _
    // Predicated region
    $region74: #{classifier_forward.1} parent=1 // pred_check
      _
    $region75: #{classifier_forward.1} parent=1 // pred_check_branch
      %103 = sbr.rel (0) target = $region77
    $region76: #{classifier_forward.1} parent=1 // pred_region
      %104 = dma.done [#allocation8], 4096
    $region77: #{classifier_forward.1} parent=1 // pred_fallthru
      _
    %v105 = vld [vmem:[%s2] sm:$0xff]
    %v106 = vld [vmem:[%s2 + $0x8] sm:$0xff]
    %v107 = vld [vmem:[%s2 + $0x10] sm:$0xff]
    %v108 = vld [vmem:[%s2 + $0x18] sm:$0xff]
    %v109 = vld [vmem:[%s2 + $0x20] sm:$0xff]
    %v110 = vld [vmem:[%s2 + $0x28] sm:$0xff]
    %v111 = vld [vmem:[#allocation2] sm:$0xff]
    %v112 = vld [vmem:[#allocation2 + $0x8] sm:$0xff]
    %v113 = vld [vmem:[#allocation2 + $0x10] sm:$0xff]
    %v114 = vld [vmem:[#allocation2 + $0x18] sm:$0xff]
    %v115 = vld [vmem:[#allocation2 + $0x20] sm:$0xff]
    %v116 = vld [vmem:[#allocation2 + $0x28] sm:$0xff]
    %v117 = vld [vmem:[#allocation2 + $0x30] sm:$0xff]
    %v118 = vld [vmem:[#allocation2 + $0x38] sm:$0xff]
    %v119 = vld [vmem:[#allocation2 + $0x40] sm:$0xff]
    %v120 = vld [vmem:[#allocation2 + $0x48] sm:$0xff]
    %v121 = vld [vmem:[#allocation2 + $0x50] sm:$0xff]
    %v122 = vld [vmem:[#allocation2 + $0x58] sm:$0xff]
    %v123 = vld [vmem:[#allocation2 + $0x60] sm:$0xff]
    %v124 = vld [vmem:[#allocation2 + $0x68] sm:$0xff]
    %v125 = vld [vmem:[#allocation2 + $0x70] sm:$0xff]
    %v126 = vld [vmem:[#allocation2 + $0x78] sm:$0xff]
    %v127 = vld [vmem:[#allocation2 + $0x80] sm:$0xff]
    %v128 = vld [vmem:[#allocation2 + $0x88] sm:$0xff]
    %v129 = vld [vmem:[#allocation2 + $0x90] sm:$0xff]
    %v130 = vld [vmem:[#allocation2 + $0x98] sm:$0xff]
    %v131 = vld [vmem:[#allocation2 + $0xa0] sm:$0xff]
    %v132 = vld [vmem:[#allocation2 + $0xa8] sm:$0xff]
    %v133 = vld [vmem:[#allocation2 + $0xb0] sm:$0xff]
    %v134 = vld [vmem:[#allocation2 + $0xb8] sm:$0xff]
    %v135 = vld [vmem:[#allocation2 + $0xc0] sm:$0xff]
    %v136 = vld [vmem:[#allocation2 + $0xc8] sm:$0xff]
    %v137 = vld [vmem:[#allocation2 + $0xd0] sm:$0xff]
    %v138 = vld [vmem:[#allocation2 + $0xd8] sm:$0xff]
    %v139 = vld [vmem:[#allocation2 + $0xe0] sm:$0xff]
    %v140 = vld [vmem:[#allocation2 + $0xe8] sm:$0xff]
    %v141 = vld [vmem:[#allocation2 + $0xf0] sm:$0xff]
    %v142 = vld [vmem:[#allocation2 + $0xf8] sm:$0xff]
    %v143 = vld [vmem:[#allocation2 + $0x100] sm:$0xff]
    %v144 = vld [vmem:[#allocation2 + $0x108] sm:$0xff]
    %v145 = vld [vmem:[#allocation2 + $0x110] sm:$0xff]
    %v146 = vld [vmem:[#allocation2 + $0x118] sm:$0xff]
    %v147 = vld [vmem:[#allocation2 + $0x120] sm:$0xff]
    %v148 = vld [vmem:[#allocation2 + $0x128] sm:$0xff]
    %v149 = vld [vmem:[#allocation2 + $0x130] sm:$0xff]
    %v150 = vld [vmem:[#allocation2 + $0x138] sm:$0xff]
    %v151 = vld [vmem:[#allocation2 + $0x140] sm:$0xff]
    %v152 = vld [vmem:[#allocation2 + $0x148] sm:$0xff]
    %v153 = vld [vmem:[#allocation2 + $0x150] sm:$0xff]
    %v154 = vld [vmem:[#allocation2 + $0x158] sm:$0xff]
    %v155 = vld [vmem:[#allocation2 + $0x160] sm:$0xff]
    %v156 = vld [vmem:[#allocation2 + $0x168] sm:$0xff]
    %v157 = vld [vmem:[#allocation2 + $0x170] sm:$0xff]
    %v158 = vld [vmem:[#allocation2 + $0x178] sm:$0xff]
    %v159 = vld [vmem:[%s4] sm:$0x3]
    %v160 = vld [vmem:[%s5] sm:$0x1]
    %v161 = vld [vmem:[%s6] sm:$0x1]
    %v162 = vld [vmem:[%s1] sm:$0xff]
    %v163 = vld [vmem:[%s0] sm:$0xff]
    %vm164 = vcmask 130048
    %v166 = vsel %vm164, %v163, 0
    %168 = vmatprep.subr.mxu0 %v106
    %169 = vmatpush1.msra.mxu0 %v105
    %170 = vmatprep.subr.mxu0 %v109
    %171 = vmatpush1.msra.mxu0 %v108
    %172 = vmatprep.subr.mxu0 0.0
    %173 = vmatpush1.msra.mxu0 0.0
    %174 = vmatprep.subr.mxu0 0.0
    %175 = vmatpush1.msra.mxu0 0.0
    %176 = vmatprep.subr.mxu0 0.0
    %177 = vmatpush1.msra.mxu0 0.0
    %178 = vmatprep.subr.mxu0 0.0
    %179 = vmatpush1.msra.mxu0 0.0
    %180 = vmatprep.subr.mxu0 0.0
    %181 = vmatpush1.msra.mxu0 0.0
    %182 = vmatprep.subr.mxu0 0.0
    %183 = vmatpush1.msra.mxu0 0.0
    %184 = vmatprep.subr.mxu0 0.0
    %185 = vmatpush1.msra.mxu0 0.0
    %186 = vmatprep.subr.mxu0 0.0
    %187 = vmatpush1.msra.mxu0 0.0
    %188 = vmatprep.subr.mxu0 0.0
    %189 = vmatpush1.msra.mxu0 0.0
    %190 = vmatprep.subr.mxu0 0.0
    %191 = vmatpush1.msra.mxu0 0.0
    %192 = vmatprep.subr.mxu0 0.0
    %193 = vmatpush1.msra.mxu0 0.0
    %194 = vmatprep.subr.mxu0 0.0
    %195 = vmatpush1.msra.mxu0 0.0
    %196 = vmatprep.subr.mxu0 0.0
    %197 = vmatpush1.msra.mxu0 0.0
    %198 = vmatprep.subr.mxu0 0.0
    %199 = vmatpush1.msra.mxu0 0.0
    %200 = vmatprep.subr.mxu0 0.0
    %201 = vmatpush1.msra.mxu0 0.0
    %202 = vmatprep.subr.mxu0 0.0
    %203 = vmatpush1.msra.mxu0 0.0
    %204 = vmatprep.subr.mxu0 0.0
    %205 = vmatpush1.msra.mxu0 0.0
    %206 = vmatprep.subr.mxu0 0.0
    %207 = vmatpush1.msra.mxu0 0.0
    %208 = vmatprep.subr.mxu0 0.0
    %209 = vmatpush1.msra.mxu0 0.0
    %210 = vmatprep.subr.mxu0 0.0
    %211 = vmatpush1.msra.mxu0 0.0
    %212 = vmatprep.subr.mxu0 0.0
    %213 = vmatpush1.msra.mxu0 0.0
    %214 = vmatprep.subr.mxu0 0.0
    %215 = vmatpush1.msra.mxu0 0.0
    %216 = vmatprep.subr.mxu0 0.0
    %217 = vmatpush1.msra.mxu0 0.0
    %218 = vmatprep.subr.mxu0 0.0
    %219 = vmatpush1.msra.mxu0 0.0
    %220 = vmatprep.subr.mxu0 0.0
    %221 = vmatpush1.msra.mxu0 0.0
    %222 = vmatprep.subr.mxu0 0.0
    %223 = vmatpush1.msra.mxu0 0.0
    %224 = vmatprep.subr.mxu0 0.0
    %225 = vmatpush1.msra.mxu0 0.0
    %226 = vmatprep.subr.mxu0 0.0
    %227 = vmatpush1.msra.mxu0 0.0
    %228 = vmatprep.subr.mxu0 0.0
    %229 = vmatpush1.msra.mxu0 0.0
    %230 = vmatprep.subr.mxu0 0.0
    %231 = vmatpush1.msra.mxu0 0.0
    %232 = vmatprep.mubr.f32.mxu0 0.0
    %233 = vmatmul.mubr.f32.gmra.mrb[0].mxu0 %v166
    %v234 = vpop.f32.mrb[0].mxu0
    %v235 = vadd.f32 0.0, %v234
    %v236 = vpop.f32.mrb[0].mxu0
    %v237 = vadd.f32 0.0, %v236
    %238 = vdwg.mxu0
    %239 = vmatprep.subr.mxu0 0.0
    %240 = vmatpush1.msra.mxu0 %v107
    %241 = vmatprep.subr.mxu0 0.0
    %242 = vmatpush1.msra.mxu0 %v110
    %243 = vmatprep.subr.mxu0 0.0
    %244 = vmatpush1.msra.mxu0 0.0
    %245 = vmatprep.subr.mxu0 0.0
    %246 = vmatpush1.msra.mxu0 0.0
    %247 = vmatprep.subr.mxu0 0.0
    %248 = vmatpush1.msra.mxu0 0.0
    %249 = vmatprep.subr.mxu0 0.0
    %250 = vmatpush1.msra.mxu0 0.0
    %251 = vmatprep.subr.mxu0 0.0
    %252 = vmatpush1.msra.mxu0 0.0
    %253 = vmatprep.subr.mxu0 0.0
    %254 = vmatpush1.msra.mxu0 0.0
    %255 = vmatprep.subr.mxu0 0.0
    %256 = vmatpush1.msra.mxu0 0.0
    %257 = vmatprep.subr.mxu0 0.0
    %258 = vmatpush1.msra.mxu0 0.0
    %259 = vmatprep.subr.mxu0 0.0
    %260 = vmatpush1.msra.mxu0 0.0
    %261 = vmatprep.subr.mxu0 0.0
    %262 = vmatpush1.msra.mxu0 0.0
    %263 = vmatprep.subr.mxu0 0.0
    %264 = vmatpush1.msra.mxu0 0.0
    %265 = vmatprep.subr.mxu0 0.0
    %266 = vmatpush1.msra.mxu0 0.0
    %267 = vmatprep.subr.mxu0 0.0
    %268 = vmatpush1.msra.mxu0 0.0
    %269 = vmatprep.subr.mxu0 0.0
    %270 = vmatpush1.msra.mxu0 0.0
    %271 = vmatprep.subr.mxu0 0.0
    %272 = vmatpush1.msra.mxu0 0.0
    %273 = vmatprep.subr.mxu0 0.0
    %274 = vmatpush1.msra.mxu0 0.0
    %275 = vmatprep.subr.mxu0 0.0
    %276 = vmatpush1.msra.mxu0 0.0
    %277 = vmatprep.subr.mxu0 0.0
    %278 = vmatpush1.msra.mxu0 0.0
    %279 = vmatprep.subr.mxu0 0.0
    %280 = vmatpush1.msra.mxu0 0.0
    %281 = vmatprep.subr.mxu0 0.0
    %282 = vmatpush1.msra.mxu0 0.0
    %283 = vmatprep.subr.mxu0 0.0
    %284 = vmatpush1.msra.mxu0 0.0
    %285 = vmatprep.subr.mxu0 0.0
    %286 = vmatpush1.msra.mxu0 0.0
    %287 = vmatprep.subr.mxu0 0.0
    %288 = vmatpush1.msra.mxu0 0.0
    %289 = vmatprep.subr.mxu0 0.0
    %290 = vmatpush1.msra.mxu0 0.0
    %291 = vmatprep.subr.mxu0 0.0
    %292 = vmatpush1.msra.mxu0 0.0
    %293 = vmatprep.subr.mxu0 0.0
    %294 = vmatpush1.msra.mxu0 0.0
    %295 = vmatprep.subr.mxu0 0.0
    %296 = vmatpush1.msra.mxu0 0.0
    %297 = vmatprep.subr.mxu0 0.0
    %298 = vmatpush1.msra.mxu0 0.0
    %299 = vmatprep.subr.mxu0 0.0
    %300 = vmatpush1.msra.mxu0 0.0
    %301 = vmatprep.subr.mxu0 0.0
    %302 = vmatpush1.msra.mxu0 0.0
    %303 = vmatprep.mubr.f32.mxu0 0.0
    %304 = vmatmul.mubr.f32.gmra.mrb[0].mxu0 %v166
    %v305 = vpop.f32.mrb[0].mxu0
    %v306 = vadd.f32 0.0, %v305
    %v307 = vpop.f32.mrb[0].mxu0
    %308 = vdwg.mxu0
    %309 = vmatprep.subr.mxu0 %v112
    %310 = vmatpush1.msra.mxu0 %v111
    %311 = vmatprep.subr.mxu0 %v115
    %312 = vmatpush1.msra.mxu0 %v114
    %313 = vmatprep.subr.mxu0 %v118
    %314 = vmatpush1.msra.mxu0 %v117
    %315 = vmatprep.subr.mxu0 %v121
    %316 = vmatpush1.msra.mxu0 %v120
    %317 = vmatprep.subr.mxu0 %v124
    %318 = vmatpush1.msra.mxu0 %v123
    %319 = vmatprep.subr.mxu0 %v127
    %320 = vmatpush1.msra.mxu0 %v126
    %321 = vmatprep.subr.mxu0 %v130
    %322 = vmatpush1.msra.mxu0 %v129
    %323 = vmatprep.subr.mxu0 %v133
    %324 = vmatpush1.msra.mxu0 %v132
    %325 = vmatprep.subr.mxu0 %v136
    %326 = vmatpush1.msra.mxu0 %v135
    %327 = vmatprep.subr.mxu0 %v139
    %328 = vmatpush1.msra.mxu0 %v138
    %329 = vmatprep.subr.mxu0 %v142
    %330 = vmatpush1.msra.mxu0 %v141
    %331 = vmatprep.subr.mxu0 %v145
    %332 = vmatpush1.msra.mxu0 %v144
    %333 = vmatprep.subr.mxu0 %v148
    %334 = vmatpush1.msra.mxu0 %v147
    %335 = vmatprep.subr.mxu0 %v151
    %336 = vmatpush1.msra.mxu0 %v150
    %337 = vmatprep.subr.mxu0 %v154
    %338 = vmatpush1.msra.mxu0 %v153
    %339 = vmatprep.subr.mxu0 %v157
    %340 = vmatpush1.msra.mxu0 %v156
    %341 = vmatprep.subr.mxu0 0.0
    %342 = vmatpush1.msra.mxu0 0.0
    %343 = vmatprep.subr.mxu0 0.0
    %344 = vmatpush1.msra.mxu0 0.0
    %345 = vmatprep.subr.mxu0 0.0
    %346 = vmatpush1.msra.mxu0 0.0
    %347 = vmatprep.subr.mxu0 0.0
    %348 = vmatpush1.msra.mxu0 0.0
    %349 = vmatprep.subr.mxu0 0.0
    %350 = vmatpush1.msra.mxu0 0.0
    %351 = vmatprep.subr.mxu0 0.0
    %352 = vmatpush1.msra.mxu0 0.0
    %353 = vmatprep.subr.mxu0 0.0
    %354 = vmatpush1.msra.mxu0 0.0
    %355 = vmatprep.subr.mxu0 0.0
    %356 = vmatpush1.msra.mxu0 0.0
    %357 = vmatprep.subr.mxu0 0.0
    %358 = vmatpush1.msra.mxu0 0.0
    %359 = vmatprep.subr.mxu0 0.0
    %360 = vmatpush1.msra.mxu0 0.0
    %361 = vmatprep.subr.mxu0 0.0
    %362 = vmatpush1.msra.mxu0 0.0
    %363 = vmatprep.subr.mxu0 0.0
    %364 = vmatpush1.msra.mxu0 0.0
    %365 = vmatprep.subr.mxu0 0.0
    %366 = vmatpush1.msra.mxu0 0.0
    %367 = vmatprep.subr.mxu0 0.0
    %368 = vmatpush1.msra.mxu0 0.0
    %369 = vmatprep.subr.mxu0 0.0
    %370 = vmatpush1.msra.mxu0 0.0
    %371 = vmatprep.subr.mxu0 0.0
    %372 = vmatpush1.msra.mxu0 0.0
    %373 = vmatprep.mubr.f32.mxu0 0.0
    %374 = vmatmul.mubr.f32.gmra.mrb[0].mxu0 %v162
    %v375 = vpop.f32.mrb[0].mxu0
    %v376 = vadd.f32 0.0, %v375
    %v377 = vpop.f32.mrb[0].mxu0
    %v378 = vadd.f32 0.0, %v377
    %379 = vdwg.mxu0
    %380 = vmatprep.subr.mxu0 0.0
    %381 = vmatpush1.msra.mxu0 %v113
    %382 = vmatprep.subr.mxu0 0.0
    %383 = vmatpush1.msra.mxu0 %v116
    %384 = vmatprep.subr.mxu0 0.0
    %385 = vmatpush1.msra.mxu0 %v119
    %386 = vmatprep.subr.mxu0 0.0
    %387 = vmatpush1.msra.mxu0 %v122
    %388 = vmatprep.subr.mxu0 0.0
    %389 = vmatpush1.msra.mxu0 %v125
    %390 = vmatprep.subr.mxu0 0.0
    %391 = vmatpush1.msra.mxu0 %v128
    %392 = vmatprep.subr.mxu0 0.0
    %393 = vmatpush1.msra.mxu0 %v131
    %394 = vmatprep.subr.mxu0 0.0
    %395 = vmatpush1.msra.mxu0 %v134
    %396 = vmatprep.subr.mxu0 0.0
    %397 = vmatpush1.msra.mxu0 %v137
    %398 = vmatprep.subr.mxu0 0.0
    %399 = vmatpush1.msra.mxu0 %v140
    %400 = vmatprep.subr.mxu0 0.0
    %401 = vmatpush1.msra.mxu0 %v143
    %402 = vmatprep.subr.mxu0 0.0
    %403 = vmatpush1.msra.mxu0 %v146
    %404 = vmatprep.subr.mxu0 0.0
    %405 = vmatpush1.msra.mxu0 %v149
    %406 = vmatprep.subr.mxu0 0.0
    %407 = vmatpush1.msra.mxu0 %v152
    %408 = vmatprep.subr.mxu0 0.0
    %409 = vmatpush1.msra.mxu0 %v155
    %410 = vmatprep.subr.mxu0 0.0
    %411 = vmatpush1.msra.mxu0 %v158
    %412 = vmatprep.subr.mxu0 0.0
    %413 = vmatpush1.msra.mxu0 0.0
    %414 = vmatprep.subr.mxu0 0.0
    %415 = vmatpush1.msra.mxu0 0.0
    %416 = vmatprep.subr.mxu0 0.0
    %417 = vmatpush1.msra.mxu0 0.0
    %418 = vmatprep.subr.mxu0 0.0
    %419 = vmatpush1.msra.mxu0 0.0
    %420 = vmatprep.subr.mxu0 0.0
    %421 = vmatpush1.msra.mxu0 0.0
    %422 = vmatprep.subr.mxu0 0.0
    %423 = vmatpush1.msra.mxu0 0.0
    %424 = vmatprep.subr.mxu0 0.0
    %425 = vmatpush1.msra.mxu0 0.0
    %426 = vmatprep.subr.mxu0 0.0
    %427 = vmatpush1.msra.mxu0 0.0
    %428 = vmatprep.subr.mxu0 0.0
    %429 = vmatpush1.msra.mxu0 0.0
    %430 = vmatprep.subr.mxu0 0.0
    %431 = vmatpush1.msra.mxu0 0.0
    %432 = vmatprep.subr.mxu0 0.0
    %433 = vmatpush1.msra.mxu0 0.0
    %434 = vmatprep.subr.mxu0 0.0
    %435 = vmatpush1.msra.mxu0 0.0
    %436 = vmatprep.subr.mxu0 0.0
    %437 = vmatpush1.msra.mxu0 0.0
    %438 = vmatprep.subr.mxu0 0.0
    %439 = vmatpush1.msra.mxu0 0.0
    %440 = vmatprep.subr.mxu0 0.0
    %441 = vmatpush1.msra.mxu0 0.0
    %442 = vmatprep.subr.mxu0 0.0
    %443 = vmatpush1.msra.mxu0 0.0
    %444 = vmatprep.mubr.f32.mxu0 0.0
    %445 = vmatmul.mubr.f32.gmra.mrb[0].mxu0 %v162
    %v446 = vpop.f32.mrb[0].mxu0
    %v447 = vadd.f32 0.0, %v446
    %v448 = vpop.f32.mrb[0].mxu0
    %449 = vdwg.mxu0
    %v450 = vadd.f32 %v235, %v376
    %v451 = vadd.f32 %v237, %v378
    %v453 = vlaneseq
    %v454 = vshrl.u32 %v453, 7
    %v455 = vsub.s32 0, %v454
    %v456 = vrot.slane %v159, %v455
    %v457 = vlaneseq
    %v458 = vshrl.u32 %v457, 7
    %v459 = vsub.s32 1, %v458
    %v460 = vrot.slane %v159, %v459
    %v463 = vadd.f32 %v450, %v456
    %v464 = vadd.f32 %v451, %v460
    %v465 = vxor.u32 %v463, 2147483648
    %v466 = vxor.u32 %v464, 2147483648
    %v467 = vmul.f32 %v465, 1.442695
    %v468 = vpow.pop %v467
    %v469 = vmul.f32 %v466, 1.442695
    %v470 = vpow.pop %v469
    %v471 = vadd.f32 %v468, 1.0
    %v472 = vadd.f32 %v470, 1.0
    %v473 = vrcp.pop %v471
    %v474 = vmul.f32 1.0, %v473
    %v475 = vrcp.pop %v472
    %v476 = vmul.f32 1.0, %v475
    %v478 = vlaneseq
    %v479 = vshrl.u32 %v478, 7
    %v480 = vsub.s32 0, %v479
    %v481 = vrot.slane %v160, %v480
    %v483 = vadd.f32 %v306, %v481
    %v485 = vlaneseq
    %v486 = vshrl.u32 %v485, 7
    %v487 = vsub.s32 0, %v486
    %v488 = vrot.slane %v161, %v487
    %v490 = vadd.f32 %v447, %v488
    %v491 = vmul.f32 %v474, %v490
    %v492 = vadd.f32 %v483, %v491
    %v493 = vtanh.pop %v492
    %v494 = vsub.f32 1.0, %v476
    %v495 = vmul.f32 %v494, %v493
    %v496 = vmul.f32 %v476, %v162
    %v497 = vadd.f32 %v495, %v496
    %s498 = scalar_lea.vmem %s0, 8
    %v499 = vld [vmem:[%s498] sm:$0xff]
    %v501 = vsel %vm164, %v499, 0
    %503 = vmatprep.subr.mxu0 %v106
    %504 = vmatpush1.msra.mxu0 %v105
    %505 = vmatprep.subr.mxu0 %v109
    %506 = vmatpush1.msra.mxu0 %v108
    %507 = vmatprep.subr.mxu0 0.0
    %508 = vmatpush1.msra.mxu0 0.0
    %509 = vmatprep.subr.mxu0 0.0
    %510 = vmatpush1.msra.mxu0 0.0
    %511 = vmatprep.subr.mxu0 0.0
    %512 = vmatpush1.msra.mxu0 0.0
    %513 = vmatprep.subr.mxu0 0.0
    %514 = vmatpush1.msra.mxu0 0.0
    %515 = vmatprep.subr.mxu0 0.0
    %516 = vmatpush1.msra.mxu0 0.0
    %517 = vmatprep.subr.mxu0 0.0
    %518 = vmatpush1.msra.mxu0 0.0
    %519 = vmatprep.subr.mxu0 0.0
    %520 = vmatpush1.msra.mxu0 0.0
    %521 = vmatprep.subr.mxu0 0.0
    %522 = vmatpush1.msra.mxu0 0.0
    %523 = vmatprep.subr.mxu0 0.0
    %524 = vmatpush1.msra.mxu0 0.0
    %525 = vmatprep.subr.mxu0 0.0
    %526 = vmatpush1.msra.mxu0 0.0
    %527 = vmatprep.subr.mxu0 0.0
    %528 = vmatpush1.msra.mxu0 0.0
    %529 = vmatprep.subr.mxu0 0.0
    %530 = vmatpush1.msra.mxu0 0.0
    %531 = vmatprep.subr.mxu0 0.0
    %532 = vmatpush1.msra.mxu0 0.0
    %533 = vmatprep.subr.mxu0 0.0
    %534 = vmatpush1.msra.mxu0 0.0
    %535 = vmatprep.subr.mxu0 0.0
    %536 = vmatpush1.msra.mxu0 0.0
    %537 = vmatprep.subr.mxu0 0.0
    %538 = vmatpush1.msra.mxu0 0.0
    %539 = vmatprep.subr.mxu0 0.0
    %540 = vmatpush1.msra.mxu0 0.0
    %541 = vmatprep.subr.mxu0 0.0
    %542 = vmatpush1.msra.mxu0 0.0
    %543 = vmatprep.subr.mxu0 0.0
    %544 = vmatpush1.msra.mxu0 0.0
    %545 = vmatprep.subr.mxu0 0.0
    %546 = vmatpush1.msra.mxu0 0.0
    %547 = vmatprep.subr.mxu0 0.0
    %548 = vmatpush1.msra.mxu0 0.0
    %549 = vmatprep.subr.mxu0 0.0
    %550 = vmatpush1.msra.mxu0 0.0
    %551 = vmatprep.subr.mxu0 0.0
    %552 = vmatpush1.msra.mxu0 0.0
    %553 = vmatprep.subr.mxu0 0.0
    %554 = vmatpush1.msra.mxu0 0.0
    %555 = vmatprep.subr.mxu0 0.0
    %556 = vmatpush1.msra.mxu0 0.0
    %557 = vmatprep.subr.mxu0 0.0
    %558 = vmatpush1.msra.mxu0 0.0
    %559 = vmatprep.subr.mxu0 0.0
    %560 = vmatpush1.msra.mxu0 0.0
    %561 = vmatprep.subr.mxu0 0.0
    %562 = vmatpush1.msra.mxu0 0.0
    %563 = vmatprep.subr.mxu0 0.0
    %564 = vmatpush1.msra.mxu0 0.0
    %565 = vmatprep.subr.mxu0 0.0
    %566 = vmatpush1.msra.mxu0 0.0
    %567 = vmatprep.mubr.f32.mxu0 0.0
    %568 = vmatmul.mubr.f32.gmra.mrb[0].mxu0 %v501
    %v569 = vpop.f32.mrb[0].mxu0
    %v570 = vadd.f32 0.0, %v569
    %v571 = vpop.f32.mrb[0].mxu0
    %v572 = vadd.f32 0.0, %v571
    %573 = vdwg.mxu0
    %574 = vmatprep.subr.mxu0 0.0
    %575 = vmatpush1.msra.mxu0 %v107
    %576 = vmatprep.subr.mxu0 0.0
    %577 = vmatpush1.msra.mxu0 %v110
    %578 = vmatprep.subr.mxu0 0.0
    %579 = vmatpush1.msra.mxu0 0.0
    %580 = vmatprep.subr.mxu0 0.0
    %581 = vmatpush1.msra.mxu0 0.0
    %582 = vmatprep.subr.mxu0 0.0
    %583 = vmatpush1.msra.mxu0 0.0
    %584 = vmatprep.subr.mxu0 0.0
    %585 = vmatpush1.msra.mxu0 0.0
    %586 = vmatprep.subr.mxu0 0.0
    %587 = vmatpush1.msra.mxu0 0.0
    %588 = vmatprep.subr.mxu0 0.0
    %589 = vmatpush1.msra.mxu0 0.0
    %590 = vmatprep.subr.mxu0 0.0
    %591 = vmatpush1.msra.mxu0 0.0
    %592 = vmatprep.subr.mxu0 0.0
    %593 = vmatpush1.msra.mxu0 0.0
    %594 = vmatprep.subr.mxu0 0.0
    %595 = vmatpush1.msra.mxu0 0.0
    %596 = vmatprep.subr.mxu0 0.0
    %597 = vmatpush1.msra.mxu0 0.0
    %598 = vmatprep.subr.mxu0 0.0
    %599 = vmatpush1.msra.mxu0 0.0
    %600 = vmatprep.subr.mxu0 0.0
    %601 = vmatpush1.msra.mxu0 0.0
    %602 = vmatprep.subr.mxu0 0.0
    %603 = vmatpush1.msra.mxu0 0.0
    %604 = vmatprep.subr.mxu0 0.0
    %605 = vmatpush1.msra.mxu0 0.0
    %606 = vmatprep.subr.mxu0 0.0
    %607 = vmatpush1.msra.mxu0 0.0
    %608 = vmatprep.subr.mxu0 0.0
    %609 = vmatpush1.msra.mxu0 0.0
    %610 = vmatprep.subr.mxu0 0.0
    %611 = vmatpush1.msra.mxu0 0.0
    %612 = vmatprep.subr.mxu0 0.0
    %613 = vmatpush1.msra.mxu0 0.0
    %614 = vmatprep.subr.mxu0 0.0
    %615 = vmatpush1.msra.mxu0 0.0
    %616 = vmatprep.subr.mxu0 0.0
    %617 = vmatpush1.msra.mxu0 0.0
    %618 = vmatprep.subr.mxu0 0.0
    %619 = vmatpush1.msra.mxu0 0.0
    %620 = vmatprep.subr.mxu0 0.0
    %621 = vmatpush1.msra.mxu0 0.0
    %622 = vmatprep.subr.mxu0 0.0
    %623 = vmatpush1.msra.mxu0 0.0
    %624 = vmatprep.subr.mxu0 0.0
    %625 = vmatpush1.msra.mxu0 0.0
    %626 = vmatprep.subr.mxu0 0.0
    %627 = vmatpush1.msra.mxu0 0.0
    %628 = vmatprep.subr.mxu0 0.0
    %629 = vmatpush1.msra.mxu0 0.0
    %630 = vmatprep.subr.mxu0 0.0
    %631 = vmatpush1.msra.mxu0 0.0
    %632 = vmatprep.subr.mxu0 0.0
    %633 = vmatpush1.msra.mxu0 0.0
    %634 = vmatprep.subr.mxu0 0.0
    %635 = vmatpush1.msra.mxu0 0.0
    %636 = vmatprep.subr.mxu0 0.0
    %637 = vmatpush1.msra.mxu0 0.0
    %638 = vmatprep.mubr.f32.mxu0 0.0
    %639 = vmatmul.mubr.f32.gmra.mrb[0].mxu0 %v501
    %v640 = vpop.f32.mrb[0].mxu0
    %v641 = vadd.f32 0.0, %v640
    %v642 = vpop.f32.mrb[0].mxu0
    %643 = vdwg.mxu0
    %644 = vmatprep.subr.mxu0 %v112
    %645 = vmatpush1.msra.mxu0 %v111
    %646 = vmatprep.subr.mxu0 %v115
    %647 = vmatpush1.msra.mxu0 %v114
    %648 = vmatprep.subr.mxu0 %v118
    %649 = vmatpush1.msra.mxu0 %v117
    %650 = vmatprep.subr.mxu0 %v121
    %651 = vmatpush1.msra.mxu0 %v120
    %652 = vmatprep.subr.mxu0 %v124
    %653 = vmatpush1.msra.mxu0 %v123
    %654 = vmatprep.subr.mxu0 %v127
    %655 = vmatpush1.msra.mxu0 %v126
    %656 = vmatprep.subr.mxu0 %v130
    %657 = vmatpush1.msra.mxu0 %v129
    %658 = vmatprep.subr.mxu0 %v133
    %659 = vmatpush1.msra.mxu0 %v132
    %660 = vmatprep.subr.mxu0 %v136
    %661 = vmatpush1.msra.mxu0 %v135
    %662 = vmatprep.subr.mxu0 %v139
    %663 = vmatpush1.msra.mxu0 %v138
    %664 = vmatprep.subr.mxu0 %v142
    %665 = vmatpush1.msra.mxu0 %v141
    %666 = vmatprep.subr.mxu0 %v145
    %667 = vmatpush1.msra.mxu0 %v144
    %668 = vmatprep.subr.mxu0 %v148
    %669 = vmatpush1.msra.mxu0 %v147
    %670 = vmatprep.subr.mxu0 %v151
    %671 = vmatpush1.msra.mxu0 %v150
    %672 = vmatprep.subr.mxu0 %v154
    %673 = vmatpush1.msra.mxu0 %v153
    %674 = vmatprep.subr.mxu0 %v157
    %675 = vmatpush1.msra.mxu0 %v156
    %676 = vmatprep.subr.mxu0 0.0
    %677 = vmatpush1.msra.mxu0 0.0
    %678 = vmatprep.subr.mxu0 0.0
    %679 = vmatpush1.msra.mxu0 0.0
    %680 = vmatprep.subr.mxu0 0.0
    %681 = vmatpush1.msra.mxu0 0.0
    %682 = vmatprep.subr.mxu0 0.0
    %683 = vmatpush1.msra.mxu0 0.0
    %684 = vmatprep.subr.mxu0 0.0
    %685 = vmatpush1.msra.mxu0 0.0
    %686 = vmatprep.subr.mxu0 0.0
    %687 = vmatpush1.msra.mxu0 0.0
    %688 = vmatprep.subr.mxu0 0.0
    %689 = vmatpush1.msra.mxu0 0.0
    %690 = vmatprep.subr.mxu0 0.0
    %691 = vmatpush1.msra.mxu0 0.0
    %692 = vmatprep.subr.mxu0 0.0
    %693 = vmatpush1.msra.mxu0 0.0
    %694 = vmatprep.subr.mxu0 0.0
    %695 = vmatpush1.msra.mxu0 0.0
    %696 = vmatprep.subr.mxu0 0.0
    %697 = vmatpush1.msra.mxu0 0.0
    %698 = vmatprep.subr.mxu0 0.0
    %699 = vmatpush1.msra.mxu0 0.0
    %700 = vmatprep.subr.mxu0 0.0
    %701 = vmatpush1.msra.mxu0 0.0
    %702 = vmatprep.subr.mxu0 0.0
    %703 = vmatpush1.msra.mxu0 0.0
    %704 = vmatprep.subr.mxu0 0.0
    %705 = vmatpush1.msra.mxu0 0.0
    %706 = vmatprep.subr.mxu0 0.0
    %707 = vmatpush1.msra.mxu0 0.0
    %708 = vmatprep.mubr.f32.mxu0 0.0
    %709 = vmatmul.mubr.f32.gmra.mrb[0].mxu0 %v497
    %v710 = vpop.f32.mrb[0].mxu0
    %v711 = vadd.f32 0.0, %v710
    %v712 = vpop.f32.mrb[0].mxu0
    %v713 = vadd.f32 0.0, %v712
    %714 = vdwg.mxu0
    %715 = vmatprep.subr.mxu0 0.0
    %716 = vmatpush1.msra.mxu0 %v113
    %717 = vmatprep.subr.mxu0 0.0
    %718 = vmatpush1.msra.mxu0 %v116
    %719 = vmatprep.subr.mxu0 0.0
    %720 = vmatpush1.msra.mxu0 %v119
    %721 = vmatprep.subr.mxu0 0.0
    %722 = vmatpush1.msra.mxu0 %v122
    %723 = vmatprep.subr.mxu0 0.0
    %724 = vmatpush1.msra.mxu0 %v125
    %725 = vmatprep.subr.mxu0 0.0
    %726 = vmatpush1.msra.mxu0 %v128
    %727 = vmatprep.subr.mxu0 0.0
    %728 = vmatpush1.msra.mxu0 %v131
    %729 = vmatprep.subr.mxu0 0.0
    %730 = vmatpush1.msra.mxu0 %v134
    %731 = vmatprep.subr.mxu0 0.0
    %732 = vmatpush1.msra.mxu0 %v137
    %733 = vmatprep.subr.mxu0 0.0
    %734 = vmatpush1.msra.mxu0 %v140
    %735 = vmatprep.subr.mxu0 0.0
    %736 = vmatpush1.msra.mxu0 %v143
    %737 = vmatprep.subr.mxu0 0.0
    %738 = vmatpush1.msra.mxu0 %v146
    %739 = vmatprep.subr.mxu0 0.0
    %740 = vmatpush1.msra.mxu0 %v149
    %741 = vmatprep.subr.mxu0 0.0
    %742 = vmatpush1.msra.mxu0 %v152
    %743 = vmatprep.subr.mxu0 0.0
    %744 = vmatpush1.msra.mxu0 %v155
    %745 = vmatprep.subr.mxu0 0.0
    %746 = vmatpush1.msra.mxu0 %v158
    %747 = vmatprep.subr.mxu0 0.0
    %748 = vmatpush1.msra.mxu0 0.0
    %749 = vmatprep.subr.mxu0 0.0
    %750 = vmatpush1.msra.mxu0 0.0
    %751 = vmatprep.subr.mxu0 0.0
    %752 = vmatpush1.msra.mxu0 0.0
    %753 = vmatprep.subr.mxu0 0.0
    %754 = vmatpush1.msra.mxu0 0.0
    %755 = vmatprep.subr.mxu0 0.0
    %756 = vmatpush1.msra.mxu0 0.0
    %757 = vmatprep.subr.mxu0 0.0
    %758 = vmatpush1.msra.mxu0 0.0
    %759 = vmatprep.subr.mxu0 0.0
    %760 = vmatpush1.msra.mxu0 0.0
    %761 = vmatprep.subr.mxu0 0.0
    %762 = vmatpush1.msra.mxu0 0.0
    %763 = vmatprep.subr.mxu0 0.0
    %764 = vmatpush1.msra.mxu0 0.0
    %765 = vmatprep.subr.mxu0 0.0
    %766 = vmatpush1.msra.mxu0 0.0
    %767 = vmatprep.subr.mxu0 0.0
    %768 = vmatpush1.msra.mxu0 0.0
    %769 = vmatprep.subr.mxu0 0.0
    %770 = vmatpush1.msra.mxu0 0.0
    %771 = vmatprep.subr.mxu0 0.0
    %772 = vmatpush1.msra.mxu0 0.0
    %773 = vmatprep.subr.mxu0 0.0
    %774 = vmatpush1.msra.mxu0 0.0
    %775 = vmatprep.subr.mxu0 0.0
    %776 = vmatpush1.msra.mxu0 0.0
    %777 = vmatprep.subr.mxu0 0.0
    %778 = vmatpush1.msra.mxu0 0.0
    %779 = vmatprep.mubr.f32.mxu0 0.0
    %780 = vmatmul.mubr.f32.gmra.mrb[0].mxu0 %v497
    %v781 = vpop.f32.mrb[0].mxu0
    %v782 = vadd.f32 0.0, %v781
    %v783 = vpop.f32.mrb[0].mxu0
    %784 = vdwg.mxu0
    %v785 = vadd.f32 %v570, %v711
    %v786 = vadd.f32 %v572, %v713
    %v787 = vadd.f32 %v785, %v456
    %v788 = vadd.f32 %v786, %v460
    %v789 = vxor.u32 %v787, 2147483648
    %v790 = vxor.u32 %v788, 2147483648
    %v791 = vmul.f32 %v789, 1.442695
    %v792 = vpow.pop %v791
    %v793 = vmul.f32 %v790, 1.442695
    %v794 = vpow.pop %v793
    %v795 = vadd.f32 %v792, 1.0
    %v796 = vadd.f32 %v794, 1.0
    %v797 = vrcp.pop %v795
    %v798 = vmul.f32 1.0, %v797
    %v799 = vrcp.pop %v796
    %v800 = vmul.f32 1.0, %v799
    %v801 = vadd.f32 %v641, %v481
    %v802 = vadd.f32 %v782, %v488
    %v803 = vmul.f32 %v798, %v802
    %v804 = vadd.f32 %v801, %v803
    %v805 = vtanh.pop %v804
    %v806 = vsub.f32 1.0, %v800
    %v807 = vmul.f32 %v806, %v805
    %v808 = vmul.f32 %v800, %v497
    %v809 = vadd.f32 %v807, %v808
    %s810 = scalar_lea.vmem %s0, 16
    %v811 = vld [vmem:[%s810] sm:$0xff]
    %v813 = vsel %vm164, %v811, 0
    %815 = vmatprep.subr.mxu0 %v106
    %816 = vmatpush1.msra.mxu0 %v105
    %817 = vmatprep.subr.mxu0 %v109
    %818 = vmatpush1.msra.mxu0 %v108
    %819 = vmatprep.subr.mxu0 0.0
    %820 = vmatpush1.msra.mxu0 0.0
    %821 = vmatprep.subr.mxu0 0.0
    %822 = vmatpush1.msra.mxu0 0.0
    %823 = vmatprep.subr.mxu0 0.0
    %824 = vmatpush1.msra.mxu0 0.0
    %825 = vmatprep.subr.mxu0 0.0
    %826 = vmatpush1.msra.mxu0 0.0
    %827 = vmatprep.subr.mxu0 0.0
    %828 = vmatpush1.msra.mxu0 0.0
    %829 = vmatprep.subr.mxu0 0.0
    %830 = vmatpush1.msra.mxu0 0.0
    %831 = vmatprep.subr.mxu0 0.0
    %832 = vmatpush1.msra.mxu0 0.0
    %833 = vmatprep.subr.mxu0 0.0
    %834 = vmatpush1.msra.mxu0 0.0
    %835 = vmatprep.subr.mxu0 0.0
    %836 = vmatpush1.msra.mxu0 0.0
    %837 = vmatprep.subr.mxu0 0.0
    %838 = vmatpush1.msra.mxu0 0.0
    %839 = vmatprep.subr.mxu0 0.0
    %840 = vmatpush1.msra.mxu0 0.0
    %841 = vmatprep.subr.mxu0 0.0
    %842 = vmatpush1.msra.mxu0 0.0
    %843 = vmatprep.subr.mxu0 0.0
    %844 = vmatpush1.msra.mxu0 0.0
    %845 = vmatprep.subr.mxu0 0.0
    %846 = vmatpush1.msra.mxu0 0.0
    %847 = vmatprep.subr.mxu0 0.0
    %848 = vmatpush1.msra.mxu0 0.0
    %849 = vmatprep.subr.mxu0 0.0
    %850 = vmatpush1.msra.mxu0 0.0
    %851 = vmatprep.subr.mxu0 0.0
    %852 = vmatpush1.msra.mxu0 0.0
    %853 = vmatprep.subr.mxu0 0.0
    %854 = vmatpush1.msra.mxu0 0.0
    %855 = vmatprep.subr.mxu0 0.0
    %856 = vmatpush1.msra.mxu0 0.0
    %857 = vmatprep.subr.mxu0 0.0
    %858 = vmatpush1.msra.mxu0 0.0
    %859 = vmatprep.subr.mxu0 0.0
    %860 = vmatpush1.msra.mxu0 0.0
    %861 = vmatprep.subr.mxu0 0.0
    %862 = vmatpush1.msra.mxu0 0.0
    %863 = vmatprep.subr.mxu0 0.0
    %864 = vmatpush1.msra.mxu0 0.0
    %865 = vmatprep.subr.mxu0 0.0
    %866 = vmatpush1.msra.mxu0 0.0
    %867 = vmatprep.subr.mxu0 0.0
    %868 = vmatpush1.msra.mxu0 0.0
    %869 = vmatprep.subr.mxu0 0.0
    %870 = vmatpush1.msra.mxu0 0.0
    %871 = vmatprep.subr.mxu0 0.0
    %872 = vmatpush1.msra.mxu0 0.0
    %873 = vmatprep.subr.mxu0 0.0
    %874 = vmatpush1.msra.mxu0 0.0
    %875 = vmatprep.subr.mxu0 0.0
    %876 = vmatpush1.msra.mxu0 0.0
    %877 = vmatprep.subr.mxu0 0.0
    %878 = vmatpush1.msra.mxu0 0.0
    %879 = vmatprep.mubr.f32.mxu0 0.0
    %880 = vmatmul.mubr.f32.gmra.mrb[0].mxu0 %v813
    %v881 = vpop.f32.mrb[0].mxu0
    %v882 = vadd.f32 0.0, %v881
    %v883 = vpop.f32.mrb[0].mxu0
    %v884 = vadd.f32 0.0, %v883
    %885 = vdwg.mxu0
    %886 = vmatprep.subr.mxu0 0.0
    %887 = vmatpush1.msra.mxu0 %v107
    %888 = vmatprep.subr.mxu0 0.0
    %889 = vmatpush1.msra.mxu0 %v110
    %890 = vmatprep.subr.mxu0 0.0
    %891 = vmatpush1.msra.mxu0 0.0
    %892 = vmatprep.subr.mxu0 0.0
    %893 = vmatpush1.msra.mxu0 0.0
    %894 = vmatprep.subr.mxu0 0.0
    %895 = vmatpush1.msra.mxu0 0.0
    %896 = vmatprep.subr.mxu0 0.0
    %897 = vmatpush1.msra.mxu0 0.0
    %898 = vmatprep.subr.mxu0 0.0
    %899 = vmatpush1.msra.mxu0 0.0
    %900 = vmatprep.subr.mxu0 0.0
    %901 = vmatpush1.msra.mxu0 0.0
    %902 = vmatprep.subr.mxu0 0.0
    %903 = vmatpush1.msra.mxu0 0.0
    %904 = vmatprep.subr.mxu0 0.0
    %905 = vmatpush1.msra.mxu0 0.0
    %906 = vmatprep.subr.mxu0 0.0
    %907 = vmatpush1.msra.mxu0 0.0
    %908 = vmatprep.subr.mxu0 0.0
    %909 = vmatpush1.msra.mxu0 0.0
    %910 = vmatprep.subr.mxu0 0.0
    %911 = vmatpush1.msra.mxu0 0.0
    %912 = vmatprep.subr.mxu0 0.0
    %913 = vmatpush1.msra.mxu0 0.0
    %914 = vmatprep.subr.mxu0 0.0
    %915 = vmatpush1.msra.mxu0 0.0
    %916 = vmatprep.subr.mxu0 0.0
    %917 = vmatpush1.msra.mxu0 0.0
    %918 = vmatprep.subr.mxu0 0.0
    %919 = vmatpush1.msra.mxu0 0.0
    %920 = vmatprep.subr.mxu0 0.0
    %921 = vmatpush1.msra.mxu0 0.0
    %922 = vmatprep.subr.mxu0 0.0
    %923 = vmatpush1.msra.mxu0 0.0
    %924 = vmatprep.subr.mxu0 0.0
    %925 = vmatpush1.msra.mxu0 0.0
    %926 = vmatprep.subr.mxu0 0.0
    %927 = vmatpush1.msra.mxu0 0.0
    %928 = vmatprep.subr.mxu0 0.0
    %929 = vmatpush1.msra.mxu0 0.0
    %930 = vmatprep.subr.mxu0 0.0
    %931 = vmatpush1.msra.mxu0 0.0
    %932 = vmatprep.subr.mxu0 0.0
    %933 = vmatpush1.msra.mxu0 0.0
    %934 = vmatprep.subr.mxu0 0.0
    %935 = vmatpush1.msra.mxu0 0.0
    %936 = vmatprep.subr.mxu0 0.0
    %937 = vmatpush1.msra.mxu0 0.0
    %938 = vmatprep.subr.mxu0 0.0
    %939 = vmatpush1.msra.mxu0 0.0
    %940 = vmatprep.subr.mxu0 0.0
    %941 = vmatpush1.msra.mxu0 0.0
    %942 = vmatprep.subr.mxu0 0.0
    %943 = vmatpush1.msra.mxu0 0.0
    %944 = vmatprep.subr.mxu0 0.0
    %945 = vmatpush1.msra.mxu0 0.0
    %946 = vmatprep.subr.mxu0 0.0
    %947 = vmatpush1.msra.mxu0 0.0
    %948 = vmatprep.subr.mxu0 0.0
    %949 = vmatpush1.msra.mxu0 0.0
    %950 = vmatprep.mubr.f32.mxu0 0.0
    %951 = vmatmul.mubr.f32.gmra.mrb[0].mxu0 %v813
    %v952 = vpop.f32.mrb[0].mxu0
    %v953 = vadd.f32 0.0, %v952
    %v954 = vpop.f32.mrb[0].mxu0
    %955 = vdwg.mxu0
    %956 = vmatprep.subr.mxu0 %v112
    %957 = vmatpush1.msra.mxu0 %v111
    %958 = vmatprep.subr.mxu0 %v115
    %959 = vmatpush1.msra.mxu0 %v114
    %960 = vmatprep.subr.mxu0 %v118
    %961 = vmatpush1.msra.mxu0 %v117
    %962 = vmatprep.subr.mxu0 %v121
    %963 = vmatpush1.msra.mxu0 %v120
    %964 = vmatprep.subr.mxu0 %v124
    %965 = vmatpush1.msra.mxu0 %v123
    %966 = vmatprep.subr.mxu0 %v127
    %967 = vmatpush1.msra.mxu0 %v126
    %968 = vmatprep.subr.mxu0 %v130
    %969 = vmatpush1.msra.mxu0 %v129
    %970 = vmatprep.subr.mxu0 %v133
    %971 = vmatpush1.msra.mxu0 %v132
    %972 = vmatprep.subr.mxu0 %v136
    %973 = vmatpush1.msra.mxu0 %v135
    %974 = vmatprep.subr.mxu0 %v139
    %975 = vmatpush1.msra.mxu0 %v138
    %976 = vmatprep.subr.mxu0 %v142
    %977 = vmatpush1.msra.mxu0 %v141
    %978 = vmatprep.subr.mxu0 %v145
    %979 = vmatpush1.msra.mxu0 %v144
    %980 = vmatprep.subr.mxu0 %v148
    %981 = vmatpush1.msra.mxu0 %v147
    %982 = vmatprep.subr.mxu0 %v151
    %983 = vmatpush1.msra.mxu0 %v150
    %984 = vmatprep.subr.mxu0 %v154
    %985 = vmatpush1.msra.mxu0 %v153
    %986 = vmatprep.subr.mxu0 %v157
    %987 = vmatpush1.msra.mxu0 %v156
    %988 = vmatprep.subr.mxu0 0.0
    %989 = vmatpush1.msra.mxu0 0.0
    %990 = vmatprep.subr.mxu0 0.0
    %991 = vmatpush1.msra.mxu0 0.0
    %992 = vmatprep.subr.mxu0 0.0
    %993 = vmatpush1.msra.mxu0 0.0
    %994 = vmatprep.subr.mxu0 0.0
    %995 = vmatpush1.msra.mxu0 0.0
    %996 = vmatprep.subr.mxu0 0.0
    %997 = vmatpush1.msra.mxu0 0.0
    %998 = vmatprep.subr.mxu0 0.0
    %999 = vmatpush1.msra.mxu0 0.0
    %1000 = vmatprep.subr.mxu0 0.0
    %1001 = vmatpush1.msra.mxu0 0.0
    %1002 = vmatprep.subr.mxu0 0.0
    %1003 = vmatpush1.msra.mxu0 0.0
    %1004 = vmatprep.subr.mxu0 0.0
    %1005 = vmatpush1.msra.mxu0 0.0
    %1006 = vmatprep.subr.mxu0 0.0
    %1007 = vmatpush1.msra.mxu0 0.0
    %1008 = vmatprep.subr.mxu0 0.0
    %1009 = vmatpush1.msra.mxu0 0.0
    %1010 = vmatprep.subr.mxu0 0.0
    %1011 = vmatpush1.msra.mxu0 0.0
    %1012 = vmatprep.subr.mxu0 0.0
    %1013 = vmatpush1.msra.mxu0 0.0
    %1014 = vmatprep.subr.mxu0 0.0
    %1015 = vmatpush1.msra.mxu0 0.0
    %1016 = vmatprep.subr.mxu0 0.0
    %1017 = vmatpush1.msra.mxu0 0.0
    %1018 = vmatprep.subr.mxu0 0.0
    %1019 = vmatpush1.msra.mxu0 0.0
    %1020 = vmatprep.mubr.f32.mxu0 0.0
    %1021 = vmatmul.mubr.f32.gmra.mrb[0].mxu0 %v809
    %v1022 = vpop.f32.mrb[0].mxu0
    %v1023 = vadd.f32 0.0, %v1022
    %v1024 = vpop.f32.mrb[0].mxu0
    %v1025 = vadd.f32 0.0, %v1024
    %1026 = vdwg.mxu0
    %1027 = vmatprep.subr.mxu0 0.0
    %1028 = vmatpush1.msra.mxu0 %v113
    %1029 = vmatprep.subr.mxu0 0.0
    %1030 = vmatpush1.msra.mxu0 %v116
    %1031 = vmatprep.subr.mxu0 0.0
    %1032 = vmatpush1.msra.mxu0 %v119
    %1033 = vmatprep.subr.mxu0 0.0
    %1034 = vmatpush1.msra.mxu0 %v122
    %1035 = vmatprep.subr.mxu0 0.0
    %1036 = vmatpush1.msra.mxu0 %v125
    %1037 = vmatprep.subr.mxu0 0.0
    %1038 = vmatpush1.msra.mxu0 %v128
    %1039 = vmatprep.subr.mxu0 0.0
    %1040 = vmatpush1.msra.mxu0 %v131
    %1041 = vmatprep.subr.mxu0 0.0
    %1042 = vmatpush1.msra.mxu0 %v134
    %1043 = vmatprep.subr.mxu0 0.0
    %1044 = vmatpush1.msra.mxu0 %v137
    %1045 = vmatprep.subr.mxu0 0.0
    %1046 = vmatpush1.msra.mxu0 %v140
    %1047 = vmatprep.subr.mxu0 0.0
    %1048 = vmatpush1.msra.mxu0 %v143
    %1049 = vmatprep.subr.mxu0 0.0
    %1050 = vmatpush1.msra.mxu0 %v146
    %1051 = vmatprep.subr.mxu0 0.0
    %1052 = vmatpush1.msra.mxu0 %v149
    %1053 = vmatprep.subr.mxu0 0.0
    %1054 = vmatpush1.msra.mxu0 %v152
    %1055 = vmatprep.subr.mxu0 0.0
    %1056 = vmatpush1.msra.mxu0 %v155
    %1057 = vmatprep.subr.mxu0 0.0
    %1058 = vmatpush1.msra.mxu0 %v158
    %1059 = vmatprep.subr.mxu0 0.0
    %1060 = vmatpush1.msra.mxu0 0.0
    %1061 = vmatprep.subr.mxu0 0.0
    %1062 = vmatpush1.msra.mxu0 0.0
    %1063 = vmatprep.subr.mxu0 0.0
    %1064 = vmatpush1.msra.mxu0 0.0
    %1065 = vmatprep.subr.mxu0 0.0
    %1066 = vmatpush1.msra.mxu0 0.0
    %1067 = vmatprep.subr.mxu0 0.0
    %1068 = vmatpush1.msra.mxu0 0.0
    %1069 = vmatprep.subr.mxu0 0.0
    %1070 = vmatpush1.msra.mxu0 0.0
    %1071 = vmatprep.subr.mxu0 0.0
    %1072 = vmatpush1.msra.mxu0 0.0
    %1073 = vmatprep.subr.mxu0 0.0
    %1074 = vmatpush1.msra.mxu0 0.0
    %1075 = vmatprep.subr.mxu0 0.0
    %1076 = vmatpush1.msra.mxu0 0.0
    %1077 = vmatprep.subr.mxu0 0.0
    %1078 = vmatpush1.msra.mxu0 0.0
    %1079 = vmatprep.subr.mxu0 0.0
    %1080 = vmatpush1.msra.mxu0 0.0
    %1081 = vmatprep.subr.mxu0 0.0
    %1082 = vmatpush1.msra.mxu0 0.0
    %1083 = vmatprep.subr.mxu0 0.0
    %1084 = vmatpush1.msra.mxu0 0.0
    %1085 = vmatprep.subr.mxu0 0.0
    %1086 = vmatpush1.msra.mxu0 0.0
    %1087 = vmatprep.subr.mxu0 0.0
    %1088 = vmatpush1.msra.mxu0 0.0
    %1089 = vmatprep.subr.mxu0 0.0
    %1090 = vmatpush1.msra.mxu0 0.0
    %1091 = vmatprep.mubr.f32.mxu0 0.0
    %1092 = vmatmul.mubr.f32.gmra.mrb[0].mxu0 %v809
    %v1093 = vpop.f32.mrb[0].mxu0
    %v1094 = vadd.f32 0.0, %v1093
    %v1095 = vpop.f32.mrb[0].mxu0
    %1096 = vdwg.mxu0
    %v1097 = vadd.f32 %v882, %v1023
    %v1098 = vadd.f32 %v884, %v1025
    %v1099 = vadd.f32 %v1097, %v456
    %v1100 = vadd.f32 %v1098, %v460
    %v1101 = vxor.u32 %v1099, 2147483648
    %v1102 = vxor.u32 %v1100, 2147483648
    %v1103 = vmul.f32 %v1101, 1.442695
    %v1104 = vpow.pop %v1103
    %v1105 = vmul.f32 %v1102, 1.442695
    %v1106 = vpow.pop %v1105
    %v1107 = vadd.f32 %v1104, 1.0
    %v1108 = vadd.f32 %v1106, 1.0
    %v1109 = vrcp.pop %v1107
    %v1110 = vmul.f32 1.0, %v1109
    %v1111 = vrcp.pop %v1108
    %v1112 = vmul.f32 1.0, %v1111
    %v1113 = vadd.f32 %v953, %v481
    %v1114 = vadd.f32 %v1094, %v488
    %v1115 = vmul.f32 %v1110, %v1114
    %v1116 = vadd.f32 %v1113, %v1115
    %v1117 = vtanh.pop %v1116
    %v1118 = vsub.f32 1.0, %v1112
    %v1119 = vmul.f32 %v1118, %v1117
    %v1120 = vmul.f32 %v1112, %v809
    %v1121 = vadd.f32 %v1119, %v1120
    %s1122 = scalar_lea.vmem %s0, 24
    %v1123 = vld [vmem:[%s1122] sm:$0xff]
    %v1125 = vsel %vm164, %v1123, 0
    %1127 = vmatprep.subr.mxu0 %v106
    %1128 = vmatpush1.msra.mxu0 %v105
    %1129 = vmatprep.subr.mxu0 %v109
    %1130 = vmatpush1.msra.mxu0 %v108
    %1131 = vmatprep.subr.mxu0 0.0
    %1132 = vmatpush1.msra.mxu0 0.0
    %1133 = vmatprep.subr.mxu0 0.0
    %1134 = vmatpush1.msra.mxu0 0.0
    %1135 = vmatprep.subr.mxu0 0.0
    %1136 = vmatpush1.msra.mxu0 0.0
    %1137 = vmatprep.subr.mxu0 0.0
    %1138 = vmatpush1.msra.mxu0 0.0
    %1139 = vmatprep.subr.mxu0 0.0
    %1140 = vmatpush1.msra.mxu0 0.0
    %1141 = vmatprep.subr.mxu0 0.0
    %1142 = vmatpush1.msra.mxu0 0.0
    %1143 = vmatprep.subr.mxu0 0.0
    %1144 = vmatpush1.msra.mxu0 0.0
    %1145 = vmatprep.subr.mxu0 0.0
    %1146 = vmatpush1.msra.mxu0 0.0
    %1147 = vmatprep.subr.mxu0 0.0
    %1148 = vmatpush1.msra.mxu0 0.0
    %1149 = vmatprep.subr.mxu0 0.0
    %1150 = vmatpush1.msra.mxu0 0.0
    %1151 = vmatprep.subr.mxu0 0.0
    %1152 = vmatpush1.msra.mxu0 0.0
    %1153 = vmatprep.subr.mxu0 0.0
    %1154 = vmatpush1.msra.mxu0 0.0
    %1155 = vmatprep.subr.mxu0 0.0
    %1156 = vmatpush1.msra.mxu0 0.0
    %1157 = vmatprep.subr.mxu0 0.0
    %1158 = vmatpush1.msra.mxu0 0.0
    %1159 = vmatprep.subr.mxu0 0.0
    %1160 = vmatpush1.msra.mxu0 0.0
    %1161 = vmatprep.subr.mxu0 0.0
    %1162 = vmatpush1.msra.mxu0 0.0
    %1163 = vmatprep.subr.mxu0 0.0
    %1164 = vmatpush1.msra.mxu0 0.0
    %1165 = vmatprep.subr.mxu0 0.0
    %1166 = vmatpush1.msra.mxu0 0.0
    %1167 = vmatprep.subr.mxu0 0.0
    %1168 = vmatpush1.msra.mxu0 0.0
    %1169 = vmatprep.subr.mxu0 0.0
    %1170 = vmatpush1.msra.mxu0 0.0
    %1171 = vmatprep.subr.mxu0 0.0
    %1172 = vmatpush1.msra.mxu0 0.0
    %1173 = vmatprep.subr.mxu0 0.0
    %1174 = vmatpush1.msra.mxu0 0.0
    %1175 = vmatprep.subr.mxu0 0.0
    %1176 = vmatpush1.msra.mxu0 0.0
    %1177 = vmatprep.subr.mxu0 0.0
    %1178 = vmatpush1.msra.mxu0 0.0
    %1179 = vmatprep.subr.mxu0 0.0
    %1180 = vmatpush1.msra.mxu0 0.0
    %1181 = vmatprep.subr.mxu0 0.0
    %1182 = vmatpush1.msra.mxu0 0.0
    %1183 = vmatprep.subr.mxu0 0.0
    %1184 = vmatpush1.msra.mxu0 0.0
    %1185 = vmatprep.subr.mxu0 0.0
    %1186 = vmatpush1.msra.mxu0 0.0
    %1187 = vmatprep.subr.mxu0 0.0
    %1188 = vmatpush1.msra.mxu0 0.0
    %1189 = vmatprep.subr.mxu0 0.0
    %1190 = vmatpush1.msra.mxu0 0.0
    %1191 = vmatprep.mubr.f32.mxu0 0.0
    %1192 = vmatmul.mubr.f32.gmra.mrb[0].mxu0 %v1125
    %v1193 = vpop.f32.mrb[0].mxu0
    %v1194 = vadd.f32 0.0, %v1193
    %v1195 = vpop.f32.mrb[0].mxu0
    %v1196 = vadd.f32 0.0, %v1195
    %1197 = vdwg.mxu0
    %1198 = vmatprep.subr.mxu0 0.0
    %1199 = vmatpush1.msra.mxu0 %v107
    %1200 = vmatprep.subr.mxu0 0.0
    %1201 = vmatpush1.msra.mxu0 %v110
    %1202 = vmatprep.subr.mxu0 0.0
    %1203 = vmatpush1.msra.mxu0 0.0
    %1204 = vmatprep.subr.mxu0 0.0
    %1205 = vmatpush1.msra.mxu0 0.0
    %1206 = vmatprep.subr.mxu0 0.0
    %1207 = vmatpush1.msra.mxu0 0.0
    %1208 = vmatprep.subr.mxu0 0.0
    %1209 = vmatpush1.msra.mxu0 0.0
    %1210 = vmatprep.subr.mxu0 0.0
    %1211 = vmatpush1.msra.mxu0 0.0
    %1212 = vmatprep.subr.mxu0 0.0
    %1213 = vmatpush1.msra.mxu0 0.0
    %1214 = vmatprep.subr.mxu0 0.0
    %1215 = vmatpush1.msra.mxu0 0.0
    %1216 = vmatprep.subr.mxu0 0.0
    %1217 = vmatpush1.msra.mxu0 0.0
    %1218 = vmatprep.subr.mxu0 0.0
    %1219 = vmatpush1.msra.mxu0 0.0
    %1220 = vmatprep.subr.mxu0 0.0
    %1221 = vmatpush1.msra.mxu0 0.0
    %1222 = vmatprep.subr.mxu0 0.0
    %1223 = vmatpush1.msra.mxu0 0.0
    %1224 = vmatprep.subr.mxu0 0.0
    %1225 = vmatpush1.msra.mxu0 0.0
    %1226 = vmatprep.subr.mxu0 0.0
    %1227 = vmatpush1.msra.mxu0 0.0
    %1228 = vmatprep.subr.mxu0 0.0
    %1229 = vmatpush1.msra.mxu0 0.0
    %1230 = vmatprep.subr.mxu0 0.0
    %1231 = vmatpush1.msra.mxu0 0.0
    %1232 = vmatprep.subr.mxu0 0.0
    %1233 = vmatpush1.msra.mxu0 0.0
    %1234 = vmatprep.subr.mxu0 0.0
    %1235 = vmatpush1.msra.mxu0 0.0
    %1236 = vmatprep.subr.mxu0 0.0
    %1237 = vmatpush1.msra.mxu0 0.0
    %1238 = vmatprep.subr.mxu0 0.0
    %1239 = vmatpush1.msra.mxu0 0.0
    %1240 = vmatprep.subr.mxu0 0.0
    %1241 = vmatpush1.msra.mxu0 0.0
    %1242 = vmatprep.subr.mxu0 0.0
    %1243 = vmatpush1.msra.mxu0 0.0
    %1244 = vmatprep.subr.mxu0 0.0
    %1245 = vmatpush1.msra.mxu0 0.0
    %1246 = vmatprep.subr.mxu0 0.0
    %1247 = vmatpush1.msra.mxu0 0.0
    %1248 = vmatprep.subr.mxu0 0.0
    %1249 = vmatpush1.msra.mxu0 0.0
    %1250 = vmatprep.subr.mxu0 0.0
    %1251 = vmatpush1.msra.mxu0 0.0
    %1252 = vmatprep.subr.mxu0 0.0
    %1253 = vmatpush1.msra.mxu0 0.0
    %1254 = vmatprep.subr.mxu0 0.0
    %1255 = vmatpush1.msra.mxu0 0.0
    %1256 = vmatprep.subr.mxu0 0.0
    %1257 = vmatpush1.msra.mxu0 0.0
    %1258 = vmatprep.subr.mxu0 0.0
    %1259 = vmatpush1.msra.mxu0 0.0
    %1260 = vmatprep.subr.mxu0 0.0
    %1261 = vmatpush1.msra.mxu0 0.0
    %1262 = vmatprep.mubr.f32.mxu0 0.0
    %1263 = vmatmul.mubr.f32.gmra.mrb[0].mxu0 %v1125
    %v1264 = vpop.f32.mrb[0].mxu0
    %v1265 = vadd.f32 0.0, %v1264
    %v1266 = vpop.f32.mrb[0].mxu0
    %1267 = vdwg.mxu0
    %1268 = vmatprep.subr.mxu0 %v112
    %1269 = vmatpush1.msra.mxu0 %v111
    %1270 = vmatprep.subr.mxu0 %v115
    %1271 = vmatpush1.msra.mxu0 %v114
    %1272 = vmatprep.subr.mxu0 %v118
    %1273 = vmatpush1.msra.mxu0 %v117
    %1274 = vmatprep.subr.mxu0 %v121
    %1275 = vmatpush1.msra.mxu0 %v120
    %1276 = vmatprep.subr.mxu0 %v124
    %1277 = vmatpush1.msra.mxu0 %v123
    %1278 = vmatprep.subr.mxu0 %v127
    %1279 = vmatpush1.msra.mxu0 %v126
    %1280 = vmatprep.subr.mxu0 %v130
    %1281 = vmatpush1.msra.mxu0 %v129
    %1282 = vmatprep.subr.mxu0 %v133
    %1283 = vmatpush1.msra.mxu0 %v132
    %1284 = vmatprep.subr.mxu0 %v136
    %1285 = vmatpush1.msra.mxu0 %v135
    %1286 = vmatprep.subr.mxu0 %v139
    %1287 = vmatpush1.msra.mxu0 %v138
    %1288 = vmatprep.subr.mxu0 %v142
    %1289 = vmatpush1.msra.mxu0 %v141
    %1290 = vmatprep.subr.mxu0 %v145
    %1291 = vmatpush1.msra.mxu0 %v144
    %1292 = vmatprep.subr.mxu0 %v148
    %1293 = vmatpush1.msra.mxu0 %v147
    %1294 = vmatprep.subr.mxu0 %v151
    %1295 = vmatpush1.msra.mxu0 %v150
    %1296 = vmatprep.subr.mxu0 %v154
    %1297 = vmatpush1.msra.mxu0 %v153
    %1298 = vmatprep.subr.mxu0 %v157
    %1299 = vmatpush1.msra.mxu0 %v156
    %1300 = vmatprep.subr.mxu0 0.0
    %1301 = vmatpush1.msra.mxu0 0.0
    %1302 = vmatprep.subr.mxu0 0.0
    %1303 = vmatpush1.msra.mxu0 0.0
    %1304 = vmatprep.subr.mxu0 0.0
    %1305 = vmatpush1.msra.mxu0 0.0
    %1306 = vmatprep.subr.mxu0 0.0
    %1307 = vmatpush1.msra.mxu0 0.0
    %1308 = vmatprep.subr.mxu0 0.0
    %1309 = vmatpush1.msra.mxu0 0.0
    %1310 = vmatprep.subr.mxu0 0.0
    %1311 = vmatpush1.msra.mxu0 0.0
    %1312 = vmatprep.subr.mxu0 0.0
    %1313 = vmatpush1.msra.mxu0 0.0
    %1314 = vmatprep.subr.mxu0 0.0
    %1315 = vmatpush1.msra.mxu0 0.0
    %1316 = vmatprep.subr.mxu0 0.0
    %1317 = vmatpush1.msra.mxu0 0.0
    %1318 = vmatprep.subr.mxu0 0.0
    %1319 = vmatpush1.msra.mxu0 0.0
    %1320 = vmatprep.subr.mxu0 0.0
    %1321 = vmatpush1.msra.mxu0 0.0
    %1322 = vmatprep.subr.mxu0 0.0
    %1323 = vmatpush1.msra.mxu0 0.0
    %1324 = vmatprep.subr.mxu0 0.0
    %1325 = vmatpush1.msra.mxu0 0.0
    %1326 = vmatprep.subr.mxu0 0.0
    %1327 = vmatpush1.msra.mxu0 0.0
    %1328 = vmatprep.subr.mxu0 0.0
    %1329 = vmatpush1.msra.mxu0 0.0
    %1330 = vmatprep.subr.mxu0 0.0
    %1331 = vmatpush1.msra.mxu0 0.0
    %1332 = vmatprep.mubr.f32.mxu0 0.0
    %1333 = vmatmul.mubr.f32.gmra.mrb[0].mxu0 %v1121
    %v1334 = vpop.f32.mrb[0].mxu0
    %v1335 = vadd.f32 0.0, %v1334
    %v1336 = vpop.f32.mrb[0].mxu0
    %v1337 = vadd.f32 0.0, %v1336
    %1338 = vdwg.mxu0
    %1339 = vmatprep.subr.mxu0 0.0
    %1340 = vmatpush1.msra.mxu0 %v113
    %1341 = vmatprep.subr.mxu0 0.0
    %1342 = vmatpush1.msra.mxu0 %v116
    %1343 = vmatprep.subr.mxu0 0.0
    %1344 = vmatpush1.msra.mxu0 %v119
    %1345 = vmatprep.subr.mxu0 0.0
    %1346 = vmatpush1.msra.mxu0 %v122
    %1347 = vmatprep.subr.mxu0 0.0
    %1348 = vmatpush1.msra.mxu0 %v125
    %1349 = vmatprep.subr.mxu0 0.0
    %1350 = vmatpush1.msra.mxu0 %v128
    %1351 = vmatprep.subr.mxu0 0.0
    %1352 = vmatpush1.msra.mxu0 %v131
    %1353 = vmatprep.subr.mxu0 0.0
    %1354 = vmatpush1.msra.mxu0 %v134
    %1355 = vmatprep.subr.mxu0 0.0
    %1356 = vmatpush1.msra.mxu0 %v137
    %1357 = vmatprep.subr.mxu0 0.0
    %1358 = vmatpush1.msra.mxu0 %v140
    %1359 = vmatprep.subr.mxu0 0.0
    %1360 = vmatpush1.msra.mxu0 %v143
    %1361 = vmatprep.subr.mxu0 0.0
    %1362 = vmatpush1.msra.mxu0 %v146
    %1363 = vmatprep.subr.mxu0 0.0
    %1364 = vmatpush1.msra.mxu0 %v149
    %1365 = vmatprep.subr.mxu0 0.0
    %1366 = vmatpush1.msra.mxu0 %v152
    %1367 = vmatprep.subr.mxu0 0.0
    %1368 = vmatpush1.msra.mxu0 %v155
    %1369 = vmatprep.subr.mxu0 0.0
    %1370 = vmatpush1.msra.mxu0 %v158
    %1371 = vmatprep.subr.mxu0 0.0
    %1372 = vmatpush1.msra.mxu0 0.0
    %1373 = vmatprep.subr.mxu0 0.0
    %1374 = vmatpush1.msra.mxu0 0.0
    %1375 = vmatprep.subr.mxu0 0.0
    %1376 = vmatpush1.msra.mxu0 0.0
    %1377 = vmatprep.subr.mxu0 0.0
    %1378 = vmatpush1.msra.mxu0 0.0
    %1379 = vmatprep.subr.mxu0 0.0
    %1380 = vmatpush1.msra.mxu0 0.0
    %1381 = vmatprep.subr.mxu0 0.0
    %1382 = vmatpush1.msra.mxu0 0.0
    %1383 = vmatprep.subr.mxu0 0.0
    %1384 = vmatpush1.msra.mxu0 0.0
    %1385 = vmatprep.subr.mxu0 0.0
    %1386 = vmatpush1.msra.mxu0 0.0
    %1387 = vmatprep.subr.mxu0 0.0
    %1388 = vmatpush1.msra.mxu0 0.0
    %1389 = vmatprep.subr.mxu0 0.0
    %1390 = vmatpush1.msra.mxu0 0.0
    %1391 = vmatprep.subr.mxu0 0.0
    %1392 = vmatpush1.msra.mxu0 0.0
    %1393 = vmatprep.subr.mxu0 0.0
    %1394 = vmatpush1.msra.mxu0 0.0
    %1395 = vmatprep.subr.mxu0 0.0
    %1396 = vmatpush1.msra.mxu0 0.0
    %1397 = vmatprep.subr.mxu0 0.0
    %1398 = vmatpush1.msra.mxu0 0.0
    %1399 = vmatprep.subr.mxu0 0.0
    %1400 = vmatpush1.msra.mxu0 0.0
    %1401 = vmatprep.subr.mxu0 0.0
    %1402 = vmatpush1.msra.mxu0 0.0
    %1403 = vmatprep.mubr.f32.mxu0 0.0
    %1404 = vmatmul.mubr.f32.gmra.mrb[0].mxu0 %v1121
    %v1405 = vpop.f32.mrb[0].mxu0
    %v1406 = vadd.f32 0.0, %v1405
    %v1407 = vpop.f32.mrb[0].mxu0
    %1408 = vdwg.mxu0
    %v1409 = vadd.f32 %v1194, %v1335
    %v1410 = vadd.f32 %v1196, %v1337
    %v1411 = vadd.f32 %v1409, %v456
    %v1412 = vadd.f32 %v1410, %v460
    %v1413 = vxor.u32 %v1411, 2147483648
    %v1414 = vxor.u32 %v1412, 2147483648
    %v1415 = vmul.f32 %v1413, 1.442695
    %v1416 = vpow.pop %v1415
    %v1417 = vmul.f32 %v1414, 1.442695
    %v1418 = vpow.pop %v1417
    %v1419 = vadd.f32 %v1416, 1.0
    %v1420 = vadd.f32 %v1418, 1.0
    %v1421 = vrcp.pop %v1419
    %v1422 = vmul.f32 1.0, %v1421
    %v1423 = vrcp.pop %v1420
    %v1424 = vmul.f32 1.0, %v1423
    %v1425 = vadd.f32 %v1265, %v481
    %v1426 = vadd.f32 %v1406, %v488
    %v1427 = vmul.f32 %v1422, %v1426
    %v1428 = vadd.f32 %v1425, %v1427
    %v1429 = vtanh.pop %v1428
    %v1430 = vsub.f32 1.0, %v1424
    %v1431 = vmul.f32 %v1430, %v1429
    %v1432 = vmul.f32 %v1424, %v1121
    %v1433 = vadd.f32 %v1431, %v1432
    %s1434 = scalar_lea.vmem %s0, 32
    %v1435 = vld [vmem:[%s1434] sm:$0xff]
    %v1437 = vsel %vm164, %v1435, 0
    %1439 = vmatprep.subr.mxu0 %v106
    %1440 = vmatpush1.msra.mxu0 %v105
    %1441 = vmatprep.subr.mxu0 %v109
    %1442 = vmatpush1.msra.mxu0 %v108
    %1443 = vmatprep.subr.mxu0 0.0
    %1444 = vmatpush1.msra.mxu0 0.0
    %1445 = vmatprep.subr.mxu0 0.0
    %1446 = vmatpush1.msra.mxu0 0.0
    %1447 = vmatprep.subr.mxu0 0.0
    %1448 = vmatpush1.msra.mxu0 0.0
    %1449 = vmatprep.subr.mxu0 0.0
    %1450 = vmatpush1.msra.mxu0 0.0
    %1451 = vmatprep.subr.mxu0 0.0
    %1452 = vmatpush1.msra.mxu0 0.0
    %1453 = vmatprep.subr.mxu0 0.0
    %1454 = vmatpush1.msra.mxu0 0.0
    %1455 = vmatprep.subr.mxu0 0.0
    %1456 = vmatpush1.msra.mxu0 0.0
    %1457 = vmatprep.subr.mxu0 0.0
    %1458 = vmatpush1.msra.mxu0 0.0
    %1459 = vmatprep.subr.mxu0 0.0
    %1460 = vmatpush1.msra.mxu0 0.0
    %1461 = vmatprep.subr.mxu0 0.0
    %1462 = vmatpush1.msra.mxu0 0.0
    %1463 = vmatprep.subr.mxu0 0.0
    %1464 = vmatpush1.msra.mxu0 0.0
    %1465 = vmatprep.subr.mxu0 0.0
    %1466 = vmatpush1.msra.mxu0 0.0
    %1467 = vmatprep.subr.mxu0 0.0
    %1468 = vmatpush1.msra.mxu0 0.0
    %1469 = vmatprep.subr.mxu0 0.0
    %1470 = vmatpush1.msra.mxu0 0.0
    %1471 = vmatprep.subr.mxu0 0.0
    %1472 = vmatpush1.msra.mxu0 0.0
    %1473 = vmatprep.subr.mxu0 0.0
    %1474 = vmatpush1.msra.mxu0 0.0
    %1475 = vmatprep.subr.mxu0 0.0
    %1476 = vmatpush1.msra.mxu0 0.0
    %1477 = vmatprep.subr.mxu0 0.0
    %1478 = vmatpush1.msra.mxu0 0.0
    %1479 = vmatprep.subr.mxu0 0.0
    %1480 = vmatpush1.msra.mxu0 0.0
    %1481 = vmatprep.subr.mxu0 0.0
    %1482 = vmatpush1.msra.mxu0 0.0
    %1483 = vmatprep.subr.mxu0 0.0
    %1484 = vmatpush1.msra.mxu0 0.0
    %1485 = vmatprep.subr.mxu0 0.0
    %1486 = vmatpush1.msra.mxu0 0.0
    %1487 = vmatprep.subr.mxu0 0.0
    %1488 = vmatpush1.msra.mxu0 0.0
    %1489 = vmatprep.subr.mxu0 0.0
    %1490 = vmatpush1.msra.mxu0 0.0
    %1491 = vmatprep.subr.mxu0 0.0
    %1492 = vmatpush1.msra.mxu0 0.0
    %1493 = vmatprep.subr.mxu0 0.0
    %1494 = vmatpush1.msra.mxu0 0.0
    %1495 = vmatprep.subr.mxu0 0.0
    %1496 = vmatpush1.msra.mxu0 0.0
    %1497 = vmatprep.subr.mxu0 0.0
    %1498 = vmatpush1.msra.mxu0 0.0
    %1499 = vmatprep.subr.mxu0 0.0
    %1500 = vmatpush1.msra.mxu0 0.0
    %1501 = vmatprep.subr.mxu0 0.0
    %1502 = vmatpush1.msra.mxu0 0.0
    %1503 = vmatprep.mubr.f32.mxu0 0.0
    %1504 = vmatmul.mubr.f32.gmra.mrb[0].mxu0 %v1437
    %v1505 = vpop.f32.mrb[0].mxu0
    %v1506 = vadd.f32 0.0, %v1505
    %v1507 = vpop.f32.mrb[0].mxu0
    %v1508 = vadd.f32 0.0, %v1507
    %1509 = vdwg.mxu0
    %1510 = vmatprep.subr.mxu0 0.0
    %1511 = vmatpush1.msra.mxu0 %v107
    %1512 = vmatprep.subr.mxu0 0.0
    %1513 = vmatpush1.msra.mxu0 %v110
    %1514 = vmatprep.subr.mxu0 0.0
    %1515 = vmatpush1.msra.mxu0 0.0
    %1516 = vmatprep.subr.mxu0 0.0
    %1517 = vmatpush1.msra.mxu0 0.0
    %1518 = vmatprep.subr.mxu0 0.0
    %1519 = vmatpush1.msra.mxu0 0.0
    %1520 = vmatprep.subr.mxu0 0.0
    %1521 = vmatpush1.msra.mxu0 0.0
    %1522 = vmatprep.subr.mxu0 0.0
    %1523 = vmatpush1.msra.mxu0 0.0
    %1524 = vmatprep.subr.mxu0 0.0
    %1525 = vmatpush1.msra.mxu0 0.0
    %1526 = vmatprep.subr.mxu0 0.0
    %1527 = vmatpush1.msra.mxu0 0.0
    %1528 = vmatprep.subr.mxu0 0.0
    %1529 = vmatpush1.msra.mxu0 0.0
    %1530 = vmatprep.subr.mxu0 0.0
    %1531 = vmatpush1.msra.mxu0 0.0
    %1532 = vmatprep.subr.mxu0 0.0
    %1533 = vmatpush1.msra.mxu0 0.0
    %1534 = vmatprep.subr.mxu0 0.0
    %1535 = vmatpush1.msra.mxu0 0.0
    %1536 = vmatprep.subr.mxu0 0.0
    %1537 = vmatpush1.msra.mxu0 0.0
    %1538 = vmatprep.subr.mxu0 0.0
    %1539 = vmatpush1.msra.mxu0 0.0
    %1540 = vmatprep.subr.mxu0 0.0
    %1541 = vmatpush1.msra.mxu0 0.0
    %1542 = vmatprep.subr.mxu0 0.0
    %1543 = vmatpush1.msra.mxu0 0.0
    %1544 = vmatprep.subr.mxu0 0.0
    %1545 = vmatpush1.msra.mxu0 0.0
    %1546 = vmatprep.subr.mxu0 0.0
    %1547 = vmatpush1.msra.mxu0 0.0
    %1548 = vmatprep.subr.mxu0 0.0
    %1549 = vmatpush1.msra.mxu0 0.0
    %1550 = vmatprep.subr.mxu0 0.0
    %1551 = vmatpush1.msra.mxu0 0.0
    %1552 = vmatprep.subr.mxu0 0.0
    %1553 = vmatpush1.msra.mxu0 0.0
    %1554 = vmatprep.subr.mxu0 0.0
    %1555 = vmatpush1.msra.mxu0 0.0
    %1556 = vmatprep.subr.mxu0 0.0
    %1557 = vmatpush1.msra.mxu0 0.0
    %1558 = vmatprep.subr.mxu0 0.0
    %1559 = vmatpush1.msra.mxu0 0.0
    %1560 = vmatprep.subr.mxu0 0.0
    %1561 = vmatpush1.msra.mxu0 0.0
    %1562 = vmatprep.subr.mxu0 0.0
    %1563 = vmatpush1.msra.mxu0 0.0
    %1564 = vmatprep.subr.mxu0 0.0
    %1565 = vmatpush1.msra.mxu0 0.0
    %1566 = vmatprep.subr.mxu0 0.0
    %1567 = vmatpush1.msra.mxu0 0.0
    %1568 = vmatprep.subr.mxu0 0.0
    %1569 = vmatpush1.msra.mxu0 0.0
    %1570 = vmatprep.subr.mxu0 0.0
    %1571 = vmatpush1.msra.mxu0 0.0
    %1572 = vmatprep.subr.mxu0 0.0
    %1573 = vmatpush1.msra.mxu0 0.0
    %1574 = vmatprep.mubr.f32.mxu0 0.0
    %1575 = vmatmul.mubr.f32.gmra.mrb[0].mxu0 %v1437
    %v1576 = vpop.f32.mrb[0].mxu0
    %v1577 = vadd.f32 0.0, %v1576
    %v1578 = vpop.f32.mrb[0].mxu0
    %1579 = vdwg.mxu0
    %1580 = vmatprep.subr.mxu0 %v112
    %1581 = vmatpush1.msra.mxu0 %v111
    %1582 = vmatprep.subr.mxu0 %v115
    %1583 = vmatpush1.msra.mxu0 %v114
    %1584 = vmatprep.subr.mxu0 %v118
    %1585 = vmatpush1.msra.mxu0 %v117
    %1586 = vmatprep.subr.mxu0 %v121
    %1587 = vmatpush1.msra.mxu0 %v120
    %1588 = vmatprep.subr.mxu0 %v124
    %1589 = vmatpush1.msra.mxu0 %v123
    %1590 = vmatprep.subr.mxu0 %v127
    %1591 = vmatpush1.msra.mxu0 %v126
    %1592 = vmatprep.subr.mxu0 %v130
    %1593 = vmatpush1.msra.mxu0 %v129
    %1594 = vmatprep.subr.mxu0 %v133
    %1595 = vmatpush1.msra.mxu0 %v132
    %1596 = vmatprep.subr.mxu0 %v136
    %1597 = vmatpush1.msra.mxu0 %v135
    %1598 = vmatprep.subr.mxu0 %v139
    %1599 = vmatpush1.msra.mxu0 %v138
    %1600 = vmatprep.subr.mxu0 %v142
    %1601 = vmatpush1.msra.mxu0 %v141
    %1602 = vmatprep.subr.mxu0 %v145
    %1603 = vmatpush1.msra.mxu0 %v144
    %1604 = vmatprep.subr.mxu0 %v148
    %1605 = vmatpush1.msra.mxu0 %v147
    %1606 = vmatprep.subr.mxu0 %v151
    %1607 = vmatpush1.msra.mxu0 %v150
    %1608 = vmatprep.subr.mxu0 %v154
    %1609 = vmatpush1.msra.mxu0 %v153
    %1610 = vmatprep.subr.mxu0 %v157
    %1611 = vmatpush1.msra.mxu0 %v156
    %1612 = vmatprep.subr.mxu0 0.0
    %1613 = vmatpush1.msra.mxu0 0.0
    %1614 = vmatprep.subr.mxu0 0.0
    %1615 = vmatpush1.msra.mxu0 0.0
    %1616 = vmatprep.subr.mxu0 0.0
    %1617 = vmatpush1.msra.mxu0 0.0
    %1618 = vmatprep.subr.mxu0 0.0
    %1619 = vmatpush1.msra.mxu0 0.0
    %1620 = vmatprep.subr.mxu0 0.0
    %1621 = vmatpush1.msra.mxu0 0.0
    %1622 = vmatprep.subr.mxu0 0.0
    %1623 = vmatpush1.msra.mxu0 0.0
    %1624 = vmatprep.subr.mxu0 0.0
    %1625 = vmatpush1.msra.mxu0 0.0
    %1626 = vmatprep.subr.mxu0 0.0
    %1627 = vmatpush1.msra.mxu0 0.0
    %1628 = vmatprep.subr.mxu0 0.0
    %1629 = vmatpush1.msra.mxu0 0.0
    %1630 = vmatprep.subr.mxu0 0.0
    %1631 = vmatpush1.msra.mxu0 0.0
    %1632 = vmatprep.subr.mxu0 0.0
    %1633 = vmatpush1.msra.mxu0 0.0
    %1634 = vmatprep.subr.mxu0 0.0
    %1635 = vmatpush1.msra.mxu0 0.0
    %1636 = vmatprep.subr.mxu0 0.0
    %1637 = vmatpush1.msra.mxu0 0.0
    %1638 = vmatprep.subr.mxu0 0.0
    %1639 = vmatpush1.msra.mxu0 0.0
    %1640 = vmatprep.subr.mxu0 0.0
    %1641 = vmatpush1.msra.mxu0 0.0
    %1642 = vmatprep.subr.mxu0 0.0
    %1643 = vmatpush1.msra.mxu0 0.0
    %1644 = vmatprep.mubr.f32.mxu0 0.0
    %1645 = vmatmul.mubr.f32.gmra.mrb[0].mxu0 %v1433
    %v1646 = vpop.f32.mrb[0].mxu0
    %v1647 = vadd.f32 0.0, %v1646
    %v1648 = vpop.f32.mrb[0].mxu0
    %v1649 = vadd.f32 0.0, %v1648
    %1650 = vdwg.mxu0
    %1651 = vmatprep.subr.mxu0 0.0
    %1652 = vmatpush1.msra.mxu0 %v113
    %1653 = vmatprep.subr.mxu0 0.0
    %1654 = vmatpush1.msra.mxu0 %v116
    %1655 = vmatprep.subr.mxu0 0.0
    %1656 = vmatpush1.msra.mxu0 %v119
    %1657 = vmatprep.subr.mxu0 0.0
    %1658 = vmatpush1.msra.mxu0 %v122
    %1659 = vmatprep.subr.mxu0 0.0
    %1660 = vmatpush1.msra.mxu0 %v125
    %1661 = vmatprep.subr.mxu0 0.0
    %1662 = vmatpush1.msra.mxu0 %v128
    %1663 = vmatprep.subr.mxu0 0.0
    %1664 = vmatpush1.msra.mxu0 %v131
    %1665 = vmatprep.subr.mxu0 0.0
    %1666 = vmatpush1.msra.mxu0 %v134
    %1667 = vmatprep.subr.mxu0 0.0
    %1668 = vmatpush1.msra.mxu0 %v137
    %1669 = vmatprep.subr.mxu0 0.0
    %1670 = vmatpush1.msra.mxu0 %v140
    %1671 = vmatprep.subr.mxu0 0.0
    %1672 = vmatpush1.msra.mxu0 %v143
    %1673 = vmatprep.subr.mxu0 0.0
    %1674 = vmatpush1.msra.mxu0 %v146
    %1675 = vmatprep.subr.mxu0 0.0
    %1676 = vmatpush1.msra.mxu0 %v149
    %1677 = vmatprep.subr.mxu0 0.0
    %1678 = vmatpush1.msra.mxu0 %v152
    %1679 = vmatprep.subr.mxu0 0.0
    %1680 = vmatpush1.msra.mxu0 %v155
    %1681 = vmatprep.subr.mxu0 0.0
    %1682 = vmatpush1.msra.mxu0 %v158
    %1683 = vmatprep.subr.mxu0 0.0
    %1684 = vmatpush1.msra.mxu0 0.0
    %1685 = vmatprep.subr.mxu0 0.0
    %1686 = vmatpush1.msra.mxu0 0.0
    %1687 = vmatprep.subr.mxu0 0.0
    %1688 = vmatpush1.msra.mxu0 0.0
    %1689 = vmatprep.subr.mxu0 0.0
    %1690 = vmatpush1.msra.mxu0 0.0
    %1691 = vmatprep.subr.mxu0 0.0
    %1692 = vmatpush1.msra.mxu0 0.0
    %1693 = vmatprep.subr.mxu0 0.0
    %1694 = vmatpush1.msra.mxu0 0.0
    %1695 = vmatprep.subr.mxu0 0.0
    %1696 = vmatpush1.msra.mxu0 0.0
    %1697 = vmatprep.subr.mxu0 0.0
    %1698 = vmatpush1.msra.mxu0 0.0
    %1699 = vmatprep.subr.mxu0 0.0
    %1700 = vmatpush1.msra.mxu0 0.0
    %1701 = vmatprep.subr.mxu0 0.0
    %1702 = vmatpush1.msra.mxu0 0.0
    %1703 = vmatprep.subr.mxu0 0.0
    %1704 = vmatpush1.msra.mxu0 0.0
    %1705 = vmatprep.subr.mxu0 0.0
    %1706 = vmatpush1.msra.mxu0 0.0
    %1707 = vmatprep.subr.mxu0 0.0
    %1708 = vmatpush1.msra.mxu0 0.0
    %1709 = vmatprep.subr.mxu0 0.0
    %1710 = vmatpush1.msra.mxu0 0.0
    %1711 = vmatprep.subr.mxu0 0.0
    %1712 = vmatpush1.msra.mxu0 0.0
    %1713 = vmatprep.subr.mxu0 0.0
    %1714 = vmatpush1.msra.mxu0 0.0
    %1715 = vmatprep.mubr.f32.mxu0 0.0
    %1716 = vmatmul.mubr.f32.gmra.mrb[0].mxu0 %v1433
    %v1717 = vpop.f32.mrb[0].mxu0
    %v1718 = vadd.f32 0.0, %v1717
    %v1719 = vpop.f32.mrb[0].mxu0
    %1720 = vdwg.mxu0
    %v1721 = vadd.f32 %v1506, %v1647
    %v1722 = vadd.f32 %v1508, %v1649
    %v1723 = vadd.f32 %v1721, %v456
    %v1724 = vadd.f32 %v1722, %v460
    %v1725 = vxor.u32 %v1723, 2147483648
    %v1726 = vxor.u32 %v1724, 2147483648
    %v1727 = vmul.f32 %v1725, 1.442695
    %v1728 = vpow.pop %v1727
    %v1729 = vmul.f32 %v1726, 1.442695
    %v1730 = vpow.pop %v1729
    %v1731 = vadd.f32 %v1728, 1.0
    %v1732 = vadd.f32 %v1730, 1.0
    %v1733 = vrcp.pop %v1731
    %v1734 = vmul.f32 1.0, %v1733
    %v1735 = vrcp.pop %v1732
    %v1736 = vmul.f32 1.0, %v1735
    %v1737 = vadd.f32 %v1577, %v481
    %v1738 = vadd.f32 %v1718, %v488
    %v1739 = vmul.f32 %v1734, %v1738
    %v1740 = vadd.f32 %v1737, %v1739
    %v1741 = vtanh.pop %v1740
    %v1742 = vsub.f32 1.0, %v1736
    %v1743 = vmul.f32 %v1742, %v1741
    %v1744 = vmul.f32 %v1736, %v1433
    %v1745 = vadd.f32 %v1743, %v1744
    %s1746 = scalar_lea.vmem %s0, 40
    %v1747 = vld [vmem:[%s1746] sm:$0xff]
    %v1749 = vsel %vm164, %v1747, 0
    %1751 = vmatprep.subr.mxu0 %v106
    %1752 = vmatpush1.msra.mxu0 %v105
    %1753 = vmatprep.subr.mxu0 %v109
    %1754 = vmatpush1.msra.mxu0 %v108
    %1755 = vmatprep.subr.mxu0 0.0
    %1756 = vmatpush1.msra.mxu0 0.0
    %1757 = vmatprep.subr.mxu0 0.0
    %1758 = vmatpush1.msra.mxu0 0.0
    %1759 = vmatprep.subr.mxu0 0.0
    %1760 = vmatpush1.msra.mxu0 0.0
    %1761 = vmatprep.subr.mxu0 0.0
    %1762 = vmatpush1.msra.mxu0 0.0
    %1763 = vmatprep.subr.mxu0 0.0
    %1764 = vmatpush1.msra.mxu0 0.0
    %1765 = vmatprep.subr.mxu0 0.0
    %1766 = vmatpush1.msra.mxu0 0.0
    %1767 = vmatprep.subr.mxu0 0.0
    %1768 = vmatpush1.msra.mxu0 0.0
    %1769 = vmatprep.subr.mxu0 0.0
    %1770 = vmatpush1.msra.mxu0 0.0
    %1771 = vmatprep.subr.mxu0 0.0
    %1772 = vmatpush1.msra.mxu0 0.0
    %1773 = vmatprep.subr.mxu0 0.0
    %1774 = vmatpush1.msra.mxu0 0.0
    %1775 = vmatprep.subr.mxu0 0.0
    %1776 = vmatpush1.msra.mxu0 0.0
    %1777 = vmatprep.subr.mxu0 0.0
    %1778 = vmatpush1.msra.mxu0 0.0
    %1779 = vmatprep.subr.mxu0 0.0
    %1780 = vmatpush1.msra.mxu0 0.0
    %1781 = vmatprep.subr.mxu0 0.0
    %1782 = vmatpush1.msra.mxu0 0.0
    %1783 = vmatprep.subr.mxu0 0.0
    %1784 = vmatpush1.msra.mxu0 0.0
    %1785 = vmatprep.subr.mxu0 0.0
    %1786 = vmatpush1.msra.mxu0 0.0
    %1787 = vmatprep.subr.mxu0 0.0
    %1788 = vmatpush1.msra.mxu0 0.0
    %1789 = vmatprep.subr.mxu0 0.0
    %1790 = vmatpush1.msra.mxu0 0.0
    %1791 = vmatprep.subr.mxu0 0.0
    %1792 = vmatpush1.msra.mxu0 0.0
    %1793 = vmatprep.subr.mxu0 0.0
    %1794 = vmatpush1.msra.mxu0 0.0
    %1795 = vmatprep.subr.mxu0 0.0
    %1796 = vmatpush1.msra.mxu0 0.0
    %1797 = vmatprep.subr.mxu0 0.0
    %1798 = vmatpush1.msra.mxu0 0.0
    %1799 = vmatprep.subr.mxu0 0.0
    %1800 = vmatpush1.msra.mxu0 0.0
    %1801 = vmatprep.subr.mxu0 0.0
    %1802 = vmatpush1.msra.mxu0 0.0
    %1803 = vmatprep.subr.mxu0 0.0
    %1804 = vmatpush1.msra.mxu0 0.0
    %1805 = vmatprep.subr.mxu0 0.0
    %1806 = vmatpush1.msra.mxu0 0.0
    %1807 = vmatprep.subr.mxu0 0.0
    %1808 = vmatpush1.msra.mxu0 0.0
    %1809 = vmatprep.subr.mxu0 0.0
    %1810 = vmatpush1.msra.mxu0 0.0
    %1811 = vmatprep.subr.mxu0 0.0
    %1812 = vmatpush1.msra.mxu0 0.0
    %1813 = vmatprep.subr.mxu0 0.0
    %1814 = vmatpush1.msra.mxu0 0.0
    %1815 = vmatprep.mubr.f32.mxu0 0.0
    %1816 = vmatmul.mubr.f32.gmra.mrb[0].mxu0 %v1749
    %v1817 = vpop.f32.mrb[0].mxu0
    %v1818 = vadd.f32 0.0, %v1817
    %v1819 = vpop.f32.mrb[0].mxu0
    %v1820 = vadd.f32 0.0, %v1819
    %1821 = vdwg.mxu0
    %1822 = vmatprep.subr.mxu0 0.0
    %1823 = vmatpush1.msra.mxu0 %v107
    %1824 = vmatprep.subr.mxu0 0.0
    %1825 = vmatpush1.msra.mxu0 %v110
    %1826 = vmatprep.subr.mxu0 0.0
    %1827 = vmatpush1.msra.mxu0 0.0
    %1828 = vmatprep.subr.mxu0 0.0
    %1829 = vmatpush1.msra.mxu0 0.0
    %1830 = vmatprep.subr.mxu0 0.0
    %1831 = vmatpush1.msra.mxu0 0.0
    %1832 = vmatprep.subr.mxu0 0.0
    %1833 = vmatpush1.msra.mxu0 0.0
    %1834 = vmatprep.subr.mxu0 0.0
    %1835 = vmatpush1.msra.mxu0 0.0
    %1836 = vmatprep.subr.mxu0 0.0
    %1837 = vmatpush1.msra.mxu0 0.0
    %1838 = vmatprep.subr.mxu0 0.0
    %1839 = vmatpush1.msra.mxu0 0.0
    %1840 = vmatprep.subr.mxu0 0.0
    %1841 = vmatpush1.msra.mxu0 0.0
    %1842 = vmatprep.subr.mxu0 0.0
    %1843 = vmatpush1.msra.mxu0 0.0
    %1844 = vmatprep.subr.mxu0 0.0
    %1845 = vmatpush1.msra.mxu0 0.0
    %1846 = vmatprep.subr.mxu0 0.0
    %1847 = vmatpush1.msra.mxu0 0.0
    %1848 = vmatprep.subr.mxu0 0.0
    %1849 = vmatpush1.msra.mxu0 0.0
    %1850 = vmatprep.subr.mxu0 0.0
    %1851 = vmatpush1.msra.mxu0 0.0
    %1852 = vmatprep.subr.mxu0 0.0
    %1853 = vmatpush1.msra.mxu0 0.0
    %1854 = vmatprep.subr.mxu0 0.0
    %1855 = vmatpush1.msra.mxu0 0.0
    %1856 = vmatprep.subr.mxu0 0.0
    %1857 = vmatpush1.msra.mxu0 0.0
    %1858 = vmatprep.subr.mxu0 0.0
    %1859 = vmatpush1.msra.mxu0 0.0
    %1860 = vmatprep.subr.mxu0 0.0
    %1861 = vmatpush1.msra.mxu0 0.0
    %1862 = vmatprep.subr.mxu0 0.0
    %1863 = vmatpush1.msra.mxu0 0.0
    %1864 = vmatprep.subr.mxu0 0.0
    %1865 = vmatpush1.msra.mxu0 0.0
    %1866 = vmatprep.subr.mxu0 0.0
    %1867 = vmatpush1.msra.mxu0 0.0
    %1868 = vmatprep.subr.mxu0 0.0
    %1869 = vmatpush1.msra.mxu0 0.0
    %1870 = vmatprep.subr.mxu0 0.0
    %1871 = vmatpush1.msra.mxu0 0.0
    %1872 = vmatprep.subr.mxu0 0.0
    %1873 = vmatpush1.msra.mxu0 0.0
    %1874 = vmatprep.subr.mxu0 0.0
    %1875 = vmatpush1.msra.mxu0 0.0
    %1876 = vmatprep.subr.mxu0 0.0
    %1877 = vmatpush1.msra.mxu0 0.0
    %1878 = vmatprep.subr.mxu0 0.0
    %1879 = vmatpush1.msra.mxu0 0.0
    %1880 = vmatprep.subr.mxu0 0.0
    %1881 = vmatpush1.msra.mxu0 0.0
    %1882 = vmatprep.subr.mxu0 0.0
    %1883 = vmatpush1.msra.mxu0 0.0
    %1884 = vmatprep.subr.mxu0 0.0
    %1885 = vmatpush1.msra.mxu0 0.0
    %1886 = vmatprep.mubr.f32.mxu0 0.0
    %1887 = vmatmul.mubr.f32.gmra.mrb[0].mxu0 %v1749
    %v1888 = vpop.f32.mrb[0].mxu0
    %v1889 = vadd.f32 0.0, %v1888
    %v1890 = vpop.f32.mrb[0].mxu0
    %1891 = vdwg.mxu0
    %1892 = vmatprep.subr.mxu0 %v112
    %1893 = vmatpush1.msra.mxu0 %v111
    %1894 = vmatprep.subr.mxu0 %v115
    %1895 = vmatpush1.msra.mxu0 %v114
    %1896 = vmatprep.subr.mxu0 %v118
    %1897 = vmatpush1.msra.mxu0 %v117
    %1898 = vmatprep.subr.mxu0 %v121
    %1899 = vmatpush1.msra.mxu0 %v120
    %1900 = vmatprep.subr.mxu0 %v124
    %1901 = vmatpush1.msra.mxu0 %v123
    %1902 = vmatprep.subr.mxu0 %v127
    %1903 = vmatpush1.msra.mxu0 %v126
    %1904 = vmatprep.subr.mxu0 %v130
    %1905 = vmatpush1.msra.mxu0 %v129
    %1906 = vmatprep.subr.mxu0 %v133
    %1907 = vmatpush1.msra.mxu0 %v132
    %1908 = vmatprep.subr.mxu0 %v136
    %1909 = vmatpush1.msra.mxu0 %v135
    %1910 = vmatprep.subr.mxu0 %v139
    %1911 = vmatpush1.msra.mxu0 %v138
    %1912 = vmatprep.subr.mxu0 %v142
    %1913 = vmatpush1.msra.mxu0 %v141
    %1914 = vmatprep.subr.mxu0 %v145
    %1915 = vmatpush1.msra.mxu0 %v144
    %1916 = vmatprep.subr.mxu0 %v148
    %1917 = vmatpush1.msra.mxu0 %v147
    %1918 = vmatprep.subr.mxu0 %v151
    %1919 = vmatpush1.msra.mxu0 %v150
    %1920 = vmatprep.subr.mxu0 %v154
    %1921 = vmatpush1.msra.mxu0 %v153
    %1922 = vmatprep.subr.mxu0 %v157
    %1923 = vmatpush1.msra.mxu0 %v156
    %1924 = vmatprep.subr.mxu0 0.0
    %1925 = vmatpush1.msra.mxu0 0.0
    %1926 = vmatprep.subr.mxu0 0.0
    %1927 = vmatpush1.msra.mxu0 0.0
    %1928 = vmatprep.subr.mxu0 0.0
    %1929 = vmatpush1.msra.mxu0 0.0
    %1930 = vmatprep.subr.mxu0 0.0
    %1931 = vmatpush1.msra.mxu0 0.0
    %1932 = vmatprep.subr.mxu0 0.0
    %1933 = vmatpush1.msra.mxu0 0.0
    %1934 = vmatprep.subr.mxu0 0.0
    %1935 = vmatpush1.msra.mxu0 0.0
    %1936 = vmatprep.subr.mxu0 0.0
    %1937 = vmatpush1.msra.mxu0 0.0
    %1938 = vmatprep.subr.mxu0 0.0
    %1939 = vmatpush1.msra.mxu0 0.0
    %1940 = vmatprep.subr.mxu0 0.0
    %1941 = vmatpush1.msra.mxu0 0.0
    %1942 = vmatprep.subr.mxu0 0.0
    %1943 = vmatpush1.msra.mxu0 0.0
    %1944 = vmatprep.subr.mxu0 0.0
    %1945 = vmatpush1.msra.mxu0 0.0
    %1946 = vmatprep.subr.mxu0 0.0
    %1947 = vmatpush1.msra.mxu0 0.0
    %1948 = vmatprep.subr.mxu0 0.0
    %1949 = vmatpush1.msra.mxu0 0.0
    %1950 = vmatprep.subr.mxu0 0.0
    %1951 = vmatpush1.msra.mxu0 0.0
    %1952 = vmatprep.subr.mxu0 0.0
    %1953 = vmatpush1.msra.mxu0 0.0
    %1954 = vmatprep.subr.mxu0 0.0
    %1955 = vmatpush1.msra.mxu0 0.0
    %1956 = vmatprep.mubr.f32.mxu0 0.0
    %1957 = vmatmul.mubr.f32.gmra.mrb[0].mxu0 %v1745
    %v1958 = vpop.f32.mrb[0].mxu0
    %v1959 = vadd.f32 0.0, %v1958
    %v1960 = vpop.f32.mrb[0].mxu0
    %v1961 = vadd.f32 0.0, %v1960
    %1962 = vdwg.mxu0
    %1963 = vmatprep.subr.mxu0 0.0
    %1964 = vmatpush1.msra.mxu0 %v113
    %1965 = vmatprep.subr.mxu0 0.0
    %1966 = vmatpush1.msra.mxu0 %v116
    %1967 = vmatprep.subr.mxu0 0.0
    %1968 = vmatpush1.msra.mxu0 %v119
    %1969 = vmatprep.subr.mxu0 0.0
    %1970 = vmatpush1.msra.mxu0 %v122
    %1971 = vmatprep.subr.mxu0 0.0
    %1972 = vmatpush1.msra.mxu0 %v125
    %1973 = vmatprep.subr.mxu0 0.0
    %1974 = vmatpush1.msra.mxu0 %v128
    %1975 = vmatprep.subr.mxu0 0.0
    %1976 = vmatpush1.msra.mxu0 %v131
    %1977 = vmatprep.subr.mxu0 0.0
    %1978 = vmatpush1.msra.mxu0 %v134
    %1979 = vmatprep.subr.mxu0 0.0
    %1980 = vmatpush1.msra.mxu0 %v137
    %1981 = vmatprep.subr.mxu0 0.0
    %1982 = vmatpush1.msra.mxu0 %v140
    %1983 = vmatprep.subr.mxu0 0.0
    %1984 = vmatpush1.msra.mxu0 %v143
    %1985 = vmatprep.subr.mxu0 0.0
    %1986 = vmatpush1.msra.mxu0 %v146
    %1987 = vmatprep.subr.mxu0 0.0
    %1988 = vmatpush1.msra.mxu0 %v149
    %1989 = vmatprep.subr.mxu0 0.0
    %1990 = vmatpush1.msra.mxu0 %v152
    %1991 = vmatprep.subr.mxu0 0.0
    %1992 = vmatpush1.msra.mxu0 %v155
    %1993 = vmatprep.subr.mxu0 0.0
    %1994 = vmatpush1.msra.mxu0 %v158
    %1995 = vmatprep.subr.mxu0 0.0
    %1996 = vmatpush1.msra.mxu0 0.0
    %1997 = vmatprep.subr.mxu0 0.0
    %1998 = vmatpush1.msra.mxu0 0.0
    %1999 = vmatprep.subr.mxu0 0.0
    %2000 = vmatpush1.msra.mxu0 0.0
    %2001 = vmatprep.subr.mxu0 0.0
    %2002 = vmatpush1.msra.mxu0 0.0
    %2003 = vmatprep.subr.mxu0 0.0
    %2004 = vmatpush1.msra.mxu0 0.0
    %2005 = vmatprep.subr.mxu0 0.0
    %2006 = vmatpush1.msra.mxu0 0.0
    %2007 = vmatprep.subr.mxu0 0.0
    %2008 = vmatpush1.msra.mxu0 0.0
    %2009 = vmatprep.subr.mxu0 0.0
    %2010 = vmatpush1.msra.mxu0 0.0
    %2011 = vmatprep.subr.mxu0 0.0
    %2012 = vmatpush1.msra.mxu0 0.0
    %2013 = vmatprep.subr.mxu0 0.0
    %2014 = vmatpush1.msra.mxu0 0.0
    %2015 = vmatprep.subr.mxu0 0.0
    %2016 = vmatpush1.msra.mxu0 0.0
    %2017 = vmatprep.subr.mxu0 0.0
    %2018 = vmatpush1.msra.mxu0 0.0
    %2019 = vmatprep.subr.mxu0 0.0
    %2020 = vmatpush1.msra.mxu0 0.0
    %2021 = vmatprep.subr.mxu0 0.0
    %2022 = vmatpush1.msra.mxu0 0.0
    %2023 = vmatprep.subr.mxu0 0.0
    %2024 = vmatpush1.msra.mxu0 0.0
    %2025 = vmatprep.subr.mxu0 0.0
    %2026 = vmatpush1.msra.mxu0 0.0
    %2027 = vmatprep.mubr.f32.mxu0 0.0
    %2028 = vmatmul.mubr.f32.gmra.mrb[0].mxu0 %v1745
    %v2029 = vpop.f32.mrb[0].mxu0
    %v2030 = vadd.f32 0.0, %v2029
    %v2031 = vpop.f32.mrb[0].mxu0
    %2032 = vdwg.mxu0
    %v2033 = vadd.f32 %v1818, %v1959
    %v2034 = vadd.f32 %v1820, %v1961
    %v2035 = vadd.f32 %v2033, %v456
    %v2036 = vadd.f32 %v2034, %v460
    %v2037 = vxor.u32 %v2035, 2147483648
    %v2038 = vxor.u32 %v2036, 2147483648
    %v2039 = vmul.f32 %v2037, 1.442695
    %v2040 = vpow.pop %v2039
    %v2041 = vmul.f32 %v2038, 1.442695
    %v2042 = vpow.pop %v2041
    %v2043 = vadd.f32 %v2040, 1.0
    %v2044 = vadd.f32 %v2042, 1.0
    %v2045 = vrcp.pop %v2043
    %v2046 = vmul.f32 1.0, %v2045
    %v2047 = vrcp.pop %v2044
    %v2048 = vmul.f32 1.0, %v2047
    %v2049 = vadd.f32 %v1889, %v481
    %v2050 = vadd.f32 %v2030, %v488
    %v2051 = vmul.f32 %v2046, %v2050
    %v2052 = vadd.f32 %v2049, %v2051
    %v2053 = vtanh.pop %v2052
    %v2054 = vsub.f32 1.0, %v2048
    %v2055 = vmul.f32 %v2054, %v2053
    %v2056 = vmul.f32 %v2048, %v1745
    %v2057 = vadd.f32 %v2055, %v2056
    %s2058 = scalar_lea.vmem %s0, 48
    %v2059 = vld [vmem:[%s2058] sm:$0xff]
    %v2061 = vsel %vm164, %v2059, 0
    %2063 = vmatprep.subr.mxu0 %v106
    %2064 = vmatpush1.msra.mxu0 %v105
    %2065 = vmatprep.subr.mxu0 %v109
    %2066 = vmatpush1.msra.mxu0 %v108
    %2067 = vmatprep.subr.mxu0 0.0
    %2068 = vmatpush1.msra.mxu0 0.0
    %2069 = vmatprep.subr.mxu0 0.0
    %2070 = vmatpush1.msra.mxu0 0.0
    %2071 = vmatprep.subr.mxu0 0.0
    %2072 = vmatpush1.msra.mxu0 0.0
    %2073 = vmatprep.subr.mxu0 0.0
    %2074 = vmatpush1.msra.mxu0 0.0
    %2075 = vmatprep.subr.mxu0 0.0
    %2076 = vmatpush1.msra.mxu0 0.0
    %2077 = vmatprep.subr.mxu0 0.0
    %2078 = vmatpush1.msra.mxu0 0.0
    %2079 = vmatprep.subr.mxu0 0.0
    %2080 = vmatpush1.msra.mxu0 0.0
    %2081 = vmatprep.subr.mxu0 0.0
    %2082 = vmatpush1.msra.mxu0 0.0
    %2083 = vmatprep.subr.mxu0 0.0
    %2084 = vmatpush1.msra.mxu0 0.0
    %2085 = vmatprep.subr.mxu0 0.0
    %2086 = vmatpush1.msra.mxu0 0.0
    %2087 = vmatprep.subr.mxu0 0.0
    %2088 = vmatpush1.msra.mxu0 0.0
    %2089 = vmatprep.subr.mxu0 0.0
    %2090 = vmatpush1.msra.mxu0 0.0
    %2091 = vmatprep.subr.mxu0 0.0
    %2092 = vmatpush1.msra.mxu0 0.0
    %2093 = vmatprep.subr.mxu0 0.0
    %2094 = vmatpush1.msra.mxu0 0.0
    %2095 = vmatprep.subr.mxu0 0.0
    %2096 = vmatpush1.msra.mxu0 0.0
    %2097 = vmatprep.subr.mxu0 0.0
    %2098 = vmatpush1.msra.mxu0 0.0
    %2099 = vmatprep.subr.mxu0 0.0
    %2100 = vmatpush1.msra.mxu0 0.0
    %2101 = vmatprep.subr.mxu0 0.0
    %2102 = vmatpush1.msra.mxu0 0.0
    %2103 = vmatprep.subr.mxu0 0.0
    %2104 = vmatpush1.msra.mxu0 0.0
    %2105 = vmatprep.subr.mxu0 0.0
    %2106 = vmatpush1.msra.mxu0 0.0
    %2107 = vmatprep.subr.mxu0 0.0
    %2108 = vmatpush1.msra.mxu0 0.0
    %2109 = vmatprep.subr.mxu0 0.0
    %2110 = vmatpush1.msra.mxu0 0.0
    %2111 = vmatprep.subr.mxu0 0.0
    %2112 = vmatpush1.msra.mxu0 0.0
    %2113 = vmatprep.subr.mxu0 0.0
    %2114 = vmatpush1.msra.mxu0 0.0
    %2115 = vmatprep.subr.mxu0 0.0
    %2116 = vmatpush1.msra.mxu0 0.0
    %2117 = vmatprep.subr.mxu0 0.0
    %2118 = vmatpush1.msra.mxu0 0.0
    %2119 = vmatprep.subr.mxu0 0.0
    %2120 = vmatpush1.msra.mxu0 0.0
    %2121 = vmatprep.subr.mxu0 0.0
    %2122 = vmatpush1.msra.mxu0 0.0
    %2123 = vmatprep.subr.mxu0 0.0
    %2124 = vmatpush1.msra.mxu0 0.0
    %2125 = vmatprep.subr.mxu0 0.0
    %2126 = vmatpush1.msra.mxu0 0.0
    %2127 = vmatprep.mubr.f32.mxu0 0.0
    %2128 = vmatmul.mubr.f32.gmra.mrb[0].mxu0 %v2061
    %v2129 = vpop.f32.mrb[0].mxu0
    %v2130 = vadd.f32 0.0, %v2129
    %v2131 = vpop.f32.mrb[0].mxu0
    %v2132 = vadd.f32 0.0, %v2131
    %2133 = vdwg.mxu0
    %2134 = vmatprep.subr.mxu0 0.0
    %2135 = vmatpush1.msra.mxu0 %v107
    %2136 = vmatprep.subr.mxu0 0.0
    %2137 = vmatpush1.msra.mxu0 %v110
    %2138 = vmatprep.subr.mxu0 0.0
    %2139 = vmatpush1.msra.mxu0 0.0
    %2140 = vmatprep.subr.mxu0 0.0
    %2141 = vmatpush1.msra.mxu0 0.0
    %2142 = vmatprep.subr.mxu0 0.0
    %2143 = vmatpush1.msra.mxu0 0.0
    %2144 = vmatprep.subr.mxu0 0.0
    %2145 = vmatpush1.msra.mxu0 0.0
    %2146 = vmatprep.subr.mxu0 0.0
    %2147 = vmatpush1.msra.mxu0 0.0
    %2148 = vmatprep.subr.mxu0 0.0
    %2149 = vmatpush1.msra.mxu0 0.0
    %2150 = vmatprep.subr.mxu0 0.0
    %2151 = vmatpush1.msra.mxu0 0.0
    %2152 = vmatprep.subr.mxu0 0.0
    %2153 = vmatpush1.msra.mxu0 0.0
    %2154 = vmatprep.subr.mxu0 0.0
    %2155 = vmatpush1.msra.mxu0 0.0
    %2156 = vmatprep.subr.mxu0 0.0
    %2157 = vmatpush1.msra.mxu0 0.0
    %2158 = vmatprep.subr.mxu0 0.0
    %2159 = vmatpush1.msra.mxu0 0.0
    %2160 = vmatprep.subr.mxu0 0.0
    %2161 = vmatpush1.msra.mxu0 0.0
    %2162 = vmatprep.subr.mxu0 0.0
    %2163 = vmatpush1.msra.mxu0 0.0
    %2164 = vmatprep.subr.mxu0 0.0
    %2165 = vmatpush1.msra.mxu0 0.0
    %2166 = vmatprep.subr.mxu0 0.0
    %2167 = vmatpush1.msra.mxu0 0.0
    %2168 = vmatprep.subr.mxu0 0.0
    %2169 = vmatpush1.msra.mxu0 0.0
    %2170 = vmatprep.subr.mxu0 0.0
    %2171 = vmatpush1.msra.mxu0 0.0
    %2172 = vmatprep.subr.mxu0 0.0
    %2173 = vmatpush1.msra.mxu0 0.0
    %2174 = vmatprep.subr.mxu0 0.0
    %2175 = vmatpush1.msra.mxu0 0.0
    %2176 = vmatprep.subr.mxu0 0.0
    %2177 = vmatpush1.msra.mxu0 0.0
    %2178 = vmatprep.subr.mxu0 0.0
    %2179 = vmatpush1.msra.mxu0 0.0
    %2180 = vmatprep.subr.mxu0 0.0
    %2181 = vmatpush1.msra.mxu0 0.0
    %2182 = vmatprep.subr.mxu0 0.0
    %2183 = vmatpush1.msra.mxu0 0.0
    %2184 = vmatprep.subr.mxu0 0.0
    %2185 = vmatpush1.msra.mxu0 0.0
    %2186 = vmatprep.subr.mxu0 0.0
    %2187 = vmatpush1.msra.mxu0 0.0
    %2188 = vmatprep.subr.mxu0 0.0
    %2189 = vmatpush1.msra.mxu0 0.0
    %2190 = vmatprep.subr.mxu0 0.0
    %2191 = vmatpush1.msra.mxu0 0.0
    %2192 = vmatprep.subr.mxu0 0.0
    %2193 = vmatpush1.msra.mxu0 0.0
    %2194 = vmatprep.subr.mxu0 0.0
    %2195 = vmatpush1.msra.mxu0 0.0
    %2196 = vmatprep.subr.mxu0 0.0
    %2197 = vmatpush1.msra.mxu0 0.0
    %2198 = vmatprep.mubr.f32.mxu0 0.0
    %2199 = vmatmul.mubr.f32.gmra.mrb[0].mxu0 %v2061
    %v2200 = vpop.f32.mrb[0].mxu0
    %v2201 = vadd.f32 0.0, %v2200
    %v2202 = vpop.f32.mrb[0].mxu0
    %2203 = vdwg.mxu0
    %2204 = vmatprep.subr.mxu0 %v112
    %2205 = vmatpush1.msra.mxu0 %v111
    %2206 = vmatprep.subr.mxu0 %v115
    %2207 = vmatpush1.msra.mxu0 %v114
    %2208 = vmatprep.subr.mxu0 %v118
    %2209 = vmatpush1.msra.mxu0 %v117
    %2210 = vmatprep.subr.mxu0 %v121
    %2211 = vmatpush1.msra.mxu0 %v120
    %2212 = vmatprep.subr.mxu0 %v124
    %2213 = vmatpush1.msra.mxu0 %v123
    %2214 = vmatprep.subr.mxu0 %v127
    %2215 = vmatpush1.msra.mxu0 %v126
    %2216 = vmatprep.subr.mxu0 %v130
    %2217 = vmatpush1.msra.mxu0 %v129
    %2218 = vmatprep.subr.mxu0 %v133
    %2219 = vmatpush1.msra.mxu0 %v132
    %2220 = vmatprep.subr.mxu0 %v136
    %2221 = vmatpush1.msra.mxu0 %v135
    %2222 = vmatprep.subr.mxu0 %v139
    %2223 = vmatpush1.msra.mxu0 %v138
    %2224 = vmatprep.subr.mxu0 %v142
    %2225 = vmatpush1.msra.mxu0 %v141
    %2226 = vmatprep.subr.mxu0 %v145
    %2227 = vmatpush1.msra.mxu0 %v144
    %2228 = vmatprep.subr.mxu0 %v148
    %2229 = vmatpush1.msra.mxu0 %v147
    %2230 = vmatprep.subr.mxu0 %v151
    %2231 = vmatpush1.msra.mxu0 %v150
    %2232 = vmatprep.subr.mxu0 %v154
    %2233 = vmatpush1.msra.mxu0 %v153
    %2234 = vmatprep.subr.mxu0 %v157
    %2235 = vmatpush1.msra.mxu0 %v156
    %2236 = vmatprep.subr.mxu0 0.0
    %2237 = vmatpush1.msra.mxu0 0.0
    %2238 = vmatprep.subr.mxu0 0.0
    %2239 = vmatpush1.msra.mxu0 0.0
    %2240 = vmatprep.subr.mxu0 0.0
    %2241 = vmatpush1.msra.mxu0 0.0
    %2242 = vmatprep.subr.mxu0 0.0
    %2243 = vmatpush1.msra.mxu0 0.0
    %2244 = vmatprep.subr.mxu0 0.0
    %2245 = vmatpush1.msra.mxu0 0.0
    %2246 = vmatprep.subr.mxu0 0.0
    %2247 = vmatpush1.msra.mxu0 0.0
    %2248 = vmatprep.subr.mxu0 0.0
    %2249 = vmatpush1.msra.mxu0 0.0
    %2250 = vmatprep.subr.mxu0 0.0
    %2251 = vmatpush1.msra.mxu0 0.0
    %2252 = vmatprep.subr.mxu0 0.0
    %2253 = vmatpush1.msra.mxu0 0.0
    %2254 = vmatprep.subr.mxu0 0.0
    %2255 = vmatpush1.msra.mxu0 0.0
    %2256 = vmatprep.subr.mxu0 0.0
    %2257 = vmatpush1.msra.mxu0 0.0
    %2258 = vmatprep.subr.mxu0 0.0
    %2259 = vmatpush1.msra.mxu0 0.0
    %2260 = vmatprep.subr.mxu0 0.0
    %2261 = vmatpush1.msra.mxu0 0.0
    %2262 = vmatprep.subr.mxu0 0.0
    %2263 = vmatpush1.msra.mxu0 0.0
    %2264 = vmatprep.subr.mxu0 0.0
    %2265 = vmatpush1.msra.mxu0 0.0
    %2266 = vmatprep.subr.mxu0 0.0
    %2267 = vmatpush1.msra.mxu0 0.0
    %2268 = vmatprep.mubr.f32.mxu0 0.0
    %2269 = vmatmul.mubr.f32.gmra.mrb[0].mxu0 %v2057
    %v2270 = vpop.f32.mrb[0].mxu0
    %v2271 = vadd.f32 0.0, %v2270
    %v2272 = vpop.f32.mrb[0].mxu0
    %v2273 = vadd.f32 0.0, %v2272
    %2274 = vdwg.mxu0
    %2275 = vmatprep.subr.mxu0 0.0
    %2276 = vmatpush1.msra.mxu0 %v113
    %2277 = vmatprep.subr.mxu0 0.0
    %2278 = vmatpush1.msra.mxu0 %v116
    %2279 = vmatprep.subr.mxu0 0.0
    %2280 = vmatpush1.msra.mxu0 %v119
    %2281 = vmatprep.subr.mxu0 0.0
    %2282 = vmatpush1.msra.mxu0 %v122
    %2283 = vmatprep.subr.mxu0 0.0
    %2284 = vmatpush1.msra.mxu0 %v125
    %2285 = vmatprep.subr.mxu0 0.0
    %2286 = vmatpush1.msra.mxu0 %v128
    %2287 = vmatprep.subr.mxu0 0.0
    %2288 = vmatpush1.msra.mxu0 %v131
    %2289 = vmatprep.subr.mxu0 0.0
    %2290 = vmatpush1.msra.mxu0 %v134
    %2291 = vmatprep.subr.mxu0 0.0
    %2292 = vmatpush1.msra.mxu0 %v137
    %2293 = vmatprep.subr.mxu0 0.0
    %2294 = vmatpush1.msra.mxu0 %v140
    %2295 = vmatprep.subr.mxu0 0.0
    %2296 = vmatpush1.msra.mxu0 %v143
    %2297 = vmatprep.subr.mxu0 0.0
    %2298 = vmatpush1.msra.mxu0 %v146
    %2299 = vmatprep.subr.mxu0 0.0
    %2300 = vmatpush1.msra.mxu0 %v149
    %2301 = vmatprep.subr.mxu0 0.0
    %2302 = vmatpush1.msra.mxu0 %v152
    %2303 = vmatprep.subr.mxu0 0.0
    %2304 = vmatpush1.msra.mxu0 %v155
    %2305 = vmatprep.subr.mxu0 0.0
    %2306 = vmatpush1.msra.mxu0 %v158
    %2307 = vmatprep.subr.mxu0 0.0
    %2308 = vmatpush1.msra.mxu0 0.0
    %2309 = vmatprep.subr.mxu0 0.0
    %2310 = vmatpush1.msra.mxu0 0.0
    %2311 = vmatprep.subr.mxu0 0.0
    %2312 = vmatpush1.msra.mxu0 0.0
    %2313 = vmatprep.subr.mxu0 0.0
    %2314 = vmatpush1.msra.mxu0 0.0
    %2315 = vmatprep.subr.mxu0 0.0
    %2316 = vmatpush1.msra.mxu0 0.0
    %2317 = vmatprep.subr.mxu0 0.0
    %2318 = vmatpush1.msra.mxu0 0.0
    %2319 = vmatprep.subr.mxu0 0.0
    %2320 = vmatpush1.msra.mxu0 0.0
    %2321 = vmatprep.subr.mxu0 0.0
    %2322 = vmatpush1.msra.mxu0 0.0
    %2323 = vmatprep.subr.mxu0 0.0
    %2324 = vmatpush1.msra.mxu0 0.0
    %2325 = vmatprep.subr.mxu0 0.0
    %2326 = vmatpush1.msra.mxu0 0.0
    %2327 = vmatprep.subr.mxu0 0.0
    %2328 = vmatpush1.msra.mxu0 0.0
    %2329 = vmatprep.subr.mxu0 0.0
    %2330 = vmatpush1.msra.mxu0 0.0
    %2331 = vmatprep.subr.mxu0 0.0
    %2332 = vmatpush1.msra.mxu0 0.0
    %2333 = vmatprep.subr.mxu0 0.0
    %2334 = vmatpush1.msra.mxu0 0.0
    %2335 = vmatprep.subr.mxu0 0.0
    %2336 = vmatpush1.msra.mxu0 0.0
    %2337 = vmatprep.subr.mxu0 0.0
    %2338 = vmatpush1.msra.mxu0 0.0
    %2339 = vmatprep.mubr.f32.mxu0 0.0
    %2340 = vmatmul.mubr.f32.gmra.mrb[0].mxu0 %v2057
    %v2341 = vpop.f32.mrb[0].mxu0
    %v2342 = vadd.f32 0.0, %v2341
    %v2343 = vpop.f32.mrb[0].mxu0
    %2344 = vdwg.mxu0
    %v2345 = vadd.f32 %v2130, %v2271
    %v2346 = vadd.f32 %v2132, %v2273
    %v2347 = vadd.f32 %v2345, %v456
    %v2348 = vadd.f32 %v2346, %v460
    %v2349 = vxor.u32 %v2347, 2147483648
    %v2350 = vxor.u32 %v2348, 2147483648
    %v2351 = vmul.f32 %v2349, 1.442695
    %v2352 = vpow.pop %v2351
    %v2353 = vmul.f32 %v2350, 1.442695
    %v2354 = vpow.pop %v2353
    %v2355 = vadd.f32 %v2352, 1.0
    %v2356 = vadd.f32 %v2354, 1.0
    %v2357 = vrcp.pop %v2355
    %v2358 = vmul.f32 1.0, %v2357
    %v2359 = vrcp.pop %v2356
    %v2360 = vmul.f32 1.0, %v2359
    %v2361 = vadd.f32 %v2201, %v481
    %v2362 = vadd.f32 %v2342, %v488
    %v2363 = vmul.f32 %v2358, %v2362
    %v2364 = vadd.f32 %v2361, %v2363
    %v2365 = vtanh.pop %v2364
    %v2366 = vsub.f32 1.0, %v2360
    %v2367 = vmul.f32 %v2366, %v2365
    %v2368 = vmul.f32 %v2360, %v2057
    %v2369 = vadd.f32 %v2367, %v2368
    %s2370 = scalar_lea.vmem %s0, 56
    %v2371 = vld [vmem:[%s2370] sm:$0xff]
    %v2373 = vsel %vm164, %v2371, 0
    %2375 = vmatprep.subr.mxu0 %v106
    %2376 = vmatpush1.msra.mxu0 %v105
    %2377 = vmatprep.subr.mxu0 %v109
    %2378 = vmatpush1.msra.mxu0 %v108
    %2379 = vmatprep.subr.mxu0 0.0
    %2380 = vmatpush1.msra.mxu0 0.0
    %2381 = vmatprep.subr.mxu0 0.0
    %2382 = vmatpush1.msra.mxu0 0.0
    %2383 = vmatprep.subr.mxu0 0.0
    %2384 = vmatpush1.msra.mxu0 0.0
    %2385 = vmatprep.subr.mxu0 0.0
    %2386 = vmatpush1.msra.mxu0 0.0
    %2387 = vmatprep.subr.mxu0 0.0
    %2388 = vmatpush1.msra.mxu0 0.0
    %2389 = vmatprep.subr.mxu0 0.0
    %2390 = vmatpush1.msra.mxu0 0.0
    %2391 = vmatprep.subr.mxu0 0.0
    %2392 = vmatpush1.msra.mxu0 0.0
    %2393 = vmatprep.subr.mxu0 0.0
    %2394 = vmatpush1.msra.mxu0 0.0
    %2395 = vmatprep.subr.mxu0 0.0
    %2396 = vmatpush1.msra.mxu0 0.0
    %2397 = vmatprep.subr.mxu0 0.0
    %2398 = vmatpush1.msra.mxu0 0.0
    %2399 = vmatprep.subr.mxu0 0.0
    %2400 = vmatpush1.msra.mxu0 0.0
    %2401 = vmatprep.subr.mxu0 0.0
    %2402 = vmatpush1.msra.mxu0 0.0
    %2403 = vmatprep.subr.mxu0 0.0
    %2404 = vmatpush1.msra.mxu0 0.0
    %2405 = vmatprep.subr.mxu0 0.0
    %2406 = vmatpush1.msra.mxu0 0.0
    %2407 = vmatprep.subr.mxu0 0.0
    %2408 = vmatpush1.msra.mxu0 0.0
    %2409 = vmatprep.subr.mxu0 0.0
    %2410 = vmatpush1.msra.mxu0 0.0
    %2411 = vmatprep.subr.mxu0 0.0
    %2412 = vmatpush1.msra.mxu0 0.0
    %2413 = vmatprep.subr.mxu0 0.0
    %2414 = vmatpush1.msra.mxu0 0.0
    %2415 = vmatprep.subr.mxu0 0.0
    %2416 = vmatpush1.msra.mxu0 0.0
    %2417 = vmatprep.subr.mxu0 0.0
    %2418 = vmatpush1.msra.mxu0 0.0
    %2419 = vmatprep.subr.mxu0 0.0
    %2420 = vmatpush1.msra.mxu0 0.0
    %2421 = vmatprep.subr.mxu0 0.0
    %2422 = vmatpush1.msra.mxu0 0.0
    %2423 = vmatprep.subr.mxu0 0.0
    %2424 = vmatpush1.msra.mxu0 0.0
    %2425 = vmatprep.subr.mxu0 0.0
    %2426 = vmatpush1.msra.mxu0 0.0
    %2427 = vmatprep.subr.mxu0 0.0
    %2428 = vmatpush1.msra.mxu0 0.0
    %2429 = vmatprep.subr.mxu0 0.0
    %2430 = vmatpush1.msra.mxu0 0.0
    %2431 = vmatprep.subr.mxu0 0.0
    %2432 = vmatpush1.msra.mxu0 0.0
    %2433 = vmatprep.subr.mxu0 0.0
    %2434 = vmatpush1.msra.mxu0 0.0
    %2435 = vmatprep.subr.mxu0 0.0
    %2436 = vmatpush1.msra.mxu0 0.0
    %2437 = vmatprep.subr.mxu0 0.0
    %2438 = vmatpush1.msra.mxu0 0.0
    %2439 = vmatprep.mubr.f32.mxu0 0.0
    %2440 = vmatmul.mubr.f32.gmra.mrb[0].mxu0 %v2373
    %v2441 = vpop.f32.mrb[0].mxu0
    %v2442 = vadd.f32 0.0, %v2441
    %v2443 = vpop.f32.mrb[0].mxu0
    %v2444 = vadd.f32 0.0, %v2443
    %2445 = vdwg.mxu0
    %2446 = vmatprep.subr.mxu0 0.0
    %2447 = vmatpush1.msra.mxu0 %v107
    %2448 = vmatprep.subr.mxu0 0.0
    %2449 = vmatpush1.msra.mxu0 %v110
    %2450 = vmatprep.subr.mxu0 0.0
    %2451 = vmatpush1.msra.mxu0 0.0
    %2452 = vmatprep.subr.mxu0 0.0
    %2453 = vmatpush1.msra.mxu0 0.0
    %2454 = vmatprep.subr.mxu0 0.0
    %2455 = vmatpush1.msra.mxu0 0.0
    %2456 = vmatprep.subr.mxu0 0.0
    %2457 = vmatpush1.msra.mxu0 0.0
    %2458 = vmatprep.subr.mxu0 0.0
    %2459 = vmatpush1.msra.mxu0 0.0
    %2460 = vmatprep.subr.mxu0 0.0
    %2461 = vmatpush1.msra.mxu0 0.0
    %2462 = vmatprep.subr.mxu0 0.0
    %2463 = vmatpush1.msra.mxu0 0.0
    %2464 = vmatprep.subr.mxu0 0.0
    %2465 = vmatpush1.msra.mxu0 0.0
    %2466 = vmatprep.subr.mxu0 0.0
    %2467 = vmatpush1.msra.mxu0 0.0
    %2468 = vmatprep.subr.mxu0 0.0
    %2469 = vmatpush1.msra.mxu0 0.0
    %2470 = vmatprep.subr.mxu0 0.0
    %2471 = vmatpush1.msra.mxu0 0.0
    %2472 = vmatprep.subr.mxu0 0.0
    %2473 = vmatpush1.msra.mxu0 0.0
    %2474 = vmatprep.subr.mxu0 0.0
    %2475 = vmatpush1.msra.mxu0 0.0
    %2476 = vmatprep.subr.mxu0 0.0
    %2477 = vmatpush1.msra.mxu0 0.0
    %2478 = vmatprep.subr.mxu0 0.0
    %2479 = vmatpush1.msra.mxu0 0.0
    %2480 = vmatprep.subr.mxu0 0.0
    %2481 = vmatpush1.msra.mxu0 0.0
    %2482 = vmatprep.subr.mxu0 0.0
    %2483 = vmatpush1.msra.mxu0 0.0
    %2484 = vmatprep.subr.mxu0 0.0
    %2485 = vmatpush1.msra.mxu0 0.0
    %2486 = vmatprep.subr.mxu0 0.0
    %2487 = vmatpush1.msra.mxu0 0.0
    %2488 = vmatprep.subr.mxu0 0.0
    %2489 = vmatpush1.msra.mxu0 0.0
    %2490 = vmatprep.subr.mxu0 0.0
    %2491 = vmatpush1.msra.mxu0 0.0
    %2492 = vmatprep.subr.mxu0 0.0
    %2493 = vmatpush1.msra.mxu0 0.0
    %2494 = vmatprep.subr.mxu0 0.0
    %2495 = vmatpush1.msra.mxu0 0.0
    %2496 = vmatprep.subr.mxu0 0.0
    %2497 = vmatpush1.msra.mxu0 0.0
    %2498 = vmatprep.subr.mxu0 0.0
    %2499 = vmatpush1.msra.mxu0 0.0
    %2500 = vmatprep.subr.mxu0 0.0
    %2501 = vmatpush1.msra.mxu0 0.0
    %2502 = vmatprep.subr.mxu0 0.0
    %2503 = vmatpush1.msra.mxu0 0.0
    %2504 = vmatprep.subr.mxu0 0.0
    %2505 = vmatpush1.msra.mxu0 0.0
    %2506 = vmatprep.subr.mxu0 0.0
    %2507 = vmatpush1.msra.mxu0 0.0
    %2508 = vmatprep.subr.mxu0 0.0
    %2509 = vmatpush1.msra.mxu0 0.0
    %2510 = vmatprep.mubr.f32.mxu0 0.0
    %2511 = vmatmul.mubr.f32.gmra.mrb[0].mxu0 %v2373
    %v2512 = vpop.f32.mrb[0].mxu0
    %v2513 = vadd.f32 0.0, %v2512
    %v2514 = vpop.f32.mrb[0].mxu0
    %2515 = vdwg.mxu0
    %2516 = vmatprep.subr.mxu0 %v112
    %2517 = vmatpush1.msra.mxu0 %v111
    %2518 = vmatprep.subr.mxu0 %v115
    %2519 = vmatpush1.msra.mxu0 %v114
    %2520 = vmatprep.subr.mxu0 %v118
    %2521 = vmatpush1.msra.mxu0 %v117
    %2522 = vmatprep.subr.mxu0 %v121
    %2523 = vmatpush1.msra.mxu0 %v120
    %2524 = vmatprep.subr.mxu0 %v124
    %2525 = vmatpush1.msra.mxu0 %v123
    %2526 = vmatprep.subr.mxu0 %v127
    %2527 = vmatpush1.msra.mxu0 %v126
    %2528 = vmatprep.subr.mxu0 %v130
    %2529 = vmatpush1.msra.mxu0 %v129
    %2530 = vmatprep.subr.mxu0 %v133
    %2531 = vmatpush1.msra.mxu0 %v132
    %2532 = vmatprep.subr.mxu0 %v136
    %2533 = vmatpush1.msra.mxu0 %v135
    %2534 = vmatprep.subr.mxu0 %v139
    %2535 = vmatpush1.msra.mxu0 %v138
    %2536 = vmatprep.subr.mxu0 %v142
    %2537 = vmatpush1.msra.mxu0 %v141
    %2538 = vmatprep.subr.mxu0 %v145
    %2539 = vmatpush1.msra.mxu0 %v144
    %2540 = vmatprep.subr.mxu0 %v148
    %2541 = vmatpush1.msra.mxu0 %v147
    %2542 = vmatprep.subr.mxu0 %v151
    %2543 = vmatpush1.msra.mxu0 %v150
    %2544 = vmatprep.subr.mxu0 %v154
    %2545 = vmatpush1.msra.mxu0 %v153
    %2546 = vmatprep.subr.mxu0 %v157
    %2547 = vmatpush1.msra.mxu0 %v156
    %2548 = vmatprep.subr.mxu0 0.0
    %2549 = vmatpush1.msra.mxu0 0.0
    %2550 = vmatprep.subr.mxu0 0.0
    %2551 = vmatpush1.msra.mxu0 0.0
    %2552 = vmatprep.subr.mxu0 0.0
    %2553 = vmatpush1.msra.mxu0 0.0
    %2554 = vmatprep.subr.mxu0 0.0
    %2555 = vmatpush1.msra.mxu0 0.0
    %2556 = vmatprep.subr.mxu0 0.0
    %2557 = vmatpush1.msra.mxu0 0.0
    %2558 = vmatprep.subr.mxu0 0.0
    %2559 = vmatpush1.msra.mxu0 0.0
    %2560 = vmatprep.subr.mxu0 0.0
    %2561 = vmatpush1.msra.mxu0 0.0
    %2562 = vmatprep.subr.mxu0 0.0
    %2563 = vmatpush1.msra.mxu0 0.0
    %2564 = vmatprep.subr.mxu0 0.0
    %2565 = vmatpush1.msra.mxu0 0.0
    %2566 = vmatprep.subr.mxu0 0.0
    %2567 = vmatpush1.msra.mxu0 0.0
    %2568 = vmatprep.subr.mxu0 0.0
    %2569 = vmatpush1.msra.mxu0 0.0
    %2570 = vmatprep.subr.mxu0 0.0
    %2571 = vmatpush1.msra.mxu0 0.0
    %2572 = vmatprep.subr.mxu0 0.0
    %2573 = vmatpush1.msra.mxu0 0.0
    %2574 = vmatprep.subr.mxu0 0.0
    %2575 = vmatpush1.msra.mxu0 0.0
    %2576 = vmatprep.subr.mxu0 0.0
    %2577 = vmatpush1.msra.mxu0 0.0
    %2578 = vmatprep.subr.mxu0 0.0
    %2579 = vmatpush1.msra.mxu0 0.0
    %2580 = vmatprep.mubr.f32.mxu0 0.0
    %2581 = vmatmul.mubr.f32.gmra.mrb[0].mxu0 %v2369
    %v2582 = vpop.f32.mrb[0].mxu0
    %v2583 = vadd.f32 0.0, %v2582
    %v2584 = vpop.f32.mrb[0].mxu0
    %v2585 = vadd.f32 0.0, %v2584
    %2586 = vdwg.mxu0
    %2587 = vmatprep.subr.mxu0 0.0
    %2588 = vmatpush1.msra.mxu0 %v113
    %2589 = vmatprep.subr.mxu0 0.0
    %2590 = vmatpush1.msra.mxu0 %v116
    %2591 = vmatprep.subr.mxu0 0.0
    %2592 = vmatpush1.msra.mxu0 %v119
    %2593 = vmatprep.subr.mxu0 0.0
    %2594 = vmatpush1.msra.mxu0 %v122
    %2595 = vmatprep.subr.mxu0 0.0
    %2596 = vmatpush1.msra.mxu0 %v125
    %2597 = vmatprep.subr.mxu0 0.0
    %2598 = vmatpush1.msra.mxu0 %v128
    %2599 = vmatprep.subr.mxu0 0.0
    %2600 = vmatpush1.msra.mxu0 %v131
    %2601 = vmatprep.subr.mxu0 0.0
    %2602 = vmatpush1.msra.mxu0 %v134
    %2603 = vmatprep.subr.mxu0 0.0
    %2604 = vmatpush1.msra.mxu0 %v137
    %2605 = vmatprep.subr.mxu0 0.0
    %2606 = vmatpush1.msra.mxu0 %v140
    %2607 = vmatprep.subr.mxu0 0.0
    %2608 = vmatpush1.msra.mxu0 %v143
    %2609 = vmatprep.subr.mxu0 0.0
    %2610 = vmatpush1.msra.mxu0 %v146
    %2611 = vmatprep.subr.mxu0 0.0
    %2612 = vmatpush1.msra.mxu0 %v149
    %2613 = vmatprep.subr.mxu0 0.0
    %2614 = vmatpush1.msra.mxu0 %v152
    %2615 = vmatprep.subr.mxu0 0.0
    %2616 = vmatpush1.msra.mxu0 %v155
    %2617 = vmatprep.subr.mxu0 0.0
    %2618 = vmatpush1.msra.mxu0 %v158
    %2619 = vmatprep.subr.mxu0 0.0
    %2620 = vmatpush1.msra.mxu0 0.0
    %2621 = vmatprep.subr.mxu0 0.0
    %2622 = vmatpush1.msra.mxu0 0.0
    %2623 = vmatprep.subr.mxu0 0.0
    %2624 = vmatpush1.msra.mxu0 0.0
    %2625 = vmatprep.subr.mxu0 0.0
    %2626 = vmatpush1.msra.mxu0 0.0
    %2627 = vmatprep.subr.mxu0 0.0
    %2628 = vmatpush1.msra.mxu0 0.0
    %2629 = vmatprep.subr.mxu0 0.0
    %2630 = vmatpush1.msra.mxu0 0.0
    %2631 = vmatprep.subr.mxu0 0.0
    %2632 = vmatpush1.msra.mxu0 0.0
    %2633 = vmatprep.subr.mxu0 0.0
    %2634 = vmatpush1.msra.mxu0 0.0
    %2635 = vmatprep.subr.mxu0 0.0
    %2636 = vmatpush1.msra.mxu0 0.0
    %2637 = vmatprep.subr.mxu0 0.0
    %2638 = vmatpush1.msra.mxu0 0.0
    %2639 = vmatprep.subr.mxu0 0.0
    %2640 = vmatpush1.msra.mxu0 0.0
    %2641 = vmatprep.subr.mxu0 0.0
    %2642 = vmatpush1.msra.mxu0 0.0
    %2643 = vmatprep.subr.mxu0 0.0
    %2644 = vmatpush1.msra.mxu0 0.0
    %2645 = vmatprep.subr.mxu0 0.0
    %2646 = vmatpush1.msra.mxu0 0.0
    %2647 = vmatprep.subr.mxu0 0.0
    %2648 = vmatpush1.msra.mxu0 0.0
    %2649 = vmatprep.subr.mxu0 0.0
    %2650 = vmatpush1.msra.mxu0 0.0
    %2651 = vmatprep.mubr.f32.mxu0 0.0
    %2652 = vmatmul.mubr.f32.gmra.mrb[0].mxu0 %v2369
    %v2653 = vpop.f32.mrb[0].mxu0
    %v2654 = vadd.f32 0.0, %v2653
    %v2655 = vpop.f32.mrb[0].mxu0
    %2656 = vdwg.mxu0
    %v2657 = vadd.f32 %v2442, %v2583
    %v2658 = vadd.f32 %v2444, %v2585
    %v2659 = vadd.f32 %v2657, %v456
    %v2660 = vadd.f32 %v2658, %v460
    %v2661 = vxor.u32 %v2659, 2147483648
    %v2662 = vxor.u32 %v2660, 2147483648
    %v2663 = vmul.f32 %v2661, 1.442695
    %v2664 = vpow.pop %v2663
    %v2665 = vmul.f32 %v2662, 1.442695
    %v2666 = vpow.pop %v2665
    %v2667 = vadd.f32 %v2664, 1.0
    %v2668 = vadd.f32 %v2666, 1.0
    %v2669 = vrcp.pop %v2667
    %v2670 = vmul.f32 1.0, %v2669
    %v2671 = vrcp.pop %v2668
    %v2672 = vmul.f32 1.0, %v2671
    %v2673 = vadd.f32 %v2513, %v481
    %v2674 = vadd.f32 %v2654, %v488
    %v2675 = vmul.f32 %v2670, %v2674
    %v2676 = vadd.f32 %v2673, %v2675
    %v2677 = vtanh.pop %v2676
    %v2678 = vsub.f32 1.0, %v2672
    %v2679 = vmul.f32 %v2678, %v2677
    %v2680 = vmul.f32 %v2672, %v2369
    %v2681 = vadd.f32 %v2679, %v2680
    %v2682 = vld [vmem:[#allocation4] sm:$0xff]
    %v2683 = vld [vmem:[#allocation4 + $0x8] sm:$0xff]
    %v2684 = vld [vmem:[#allocation4 + $0x10] sm:$0xff]
    %v2685 = vld [vmem:[#allocation4 + $0x18] sm:$0xff]
    %v2686 = vld [vmem:[#allocation4 + $0x20] sm:$0xff]
    %v2687 = vld [vmem:[#allocation4 + $0x28] sm:$0xff]
    %v2688 = vld [vmem:[#allocation4 + $0x30] sm:$0xff]
    %v2689 = vld [vmem:[#allocation4 + $0x38] sm:$0xff]
    %v2690 = vld [vmem:[#allocation4 + $0x40] sm:$0xff]
    %v2691 = vld [vmem:[#allocation4 + $0x48] sm:$0xff]
    %v2692 = vld [vmem:[#allocation4 + $0x50] sm:$0xff]
    %v2693 = vld [vmem:[#allocation4 + $0x58] sm:$0xff]
    %v2694 = vld [vmem:[#allocation4 + $0x60] sm:$0xff]
    %v2695 = vld [vmem:[#allocation4 + $0x68] sm:$0xff]
    %v2696 = vld [vmem:[#allocation4 + $0x70] sm:$0xff]
    %v2697 = vld [vmem:[#allocation4 + $0x78] sm:$0xff]
    %v2698 = vld [vmem:[#allocation4 + $0x80] sm:$0xff]
    %v2699 = vld [vmem:[#allocation4 + $0x88] sm:$0xff]
    %v2700 = vld [vmem:[#allocation4 + $0x90] sm:$0xff]
    %v2701 = vld [vmem:[#allocation4 + $0x98] sm:$0xff]
    %v2702 = vld [vmem:[#allocation4 + $0xa0] sm:$0xff]
    %v2703 = vld [vmem:[#allocation4 + $0xa8] sm:$0xff]
    %v2704 = vld [vmem:[#allocation4 + $0xb0] sm:$0xff]
    %v2705 = vld [vmem:[#allocation4 + $0xb8] sm:$0xff]
    %v2706 = vld [vmem:[#allocation4 + $0xc0] sm:$0xff]
    %v2707 = vld [vmem:[#allocation4 + $0xc8] sm:$0xff]
    %v2708 = vld [vmem:[#allocation4 + $0xd0] sm:$0xff]
    %v2709 = vld [vmem:[#allocation4 + $0xd8] sm:$0xff]
    %v2710 = vld [vmem:[#allocation4 + $0xe0] sm:$0xff]
    %v2711 = vld [vmem:[#allocation4 + $0xe8] sm:$0xff]
    %v2712 = vld [vmem:[#allocation4 + $0xf0] sm:$0xff]
    %v2713 = vld [vmem:[#allocation4 + $0xf8] sm:$0xff]
    %v2714 = vld [vmem:[#allocation4 + $0x100] sm:$0xff]
    %v2715 = vld [vmem:[#allocation4 + $0x108] sm:$0xff]
    %v2716 = vld [vmem:[#allocation4 + $0x110] sm:$0xff]
    %v2717 = vld [vmem:[#allocation4 + $0x118] sm:$0xff]
    %v2718 = vld [vmem:[#allocation4 + $0x120] sm:$0xff]
    %v2719 = vld [vmem:[#allocation4 + $0x128] sm:$0xff]
    %v2720 = vld [vmem:[#allocation4 + $0x130] sm:$0xff]
    %v2721 = vld [vmem:[#allocation4 + $0x138] sm:$0xff]
    %v2722 = vld [vmem:[#allocation4 + $0x140] sm:$0xff]
    %v2723 = vld [vmem:[#allocation4 + $0x148] sm:$0xff]
    %v2724 = vld [vmem:[#allocation4 + $0x150] sm:$0xff]
    %v2725 = vld [vmem:[#allocation4 + $0x158] sm:$0xff]
    %v2726 = vld [vmem:[#allocation4 + $0x160] sm:$0xff]
    %v2727 = vld [vmem:[#allocation4 + $0x168] sm:$0xff]
    %v2728 = vld [vmem:[#allocation4 + $0x170] sm:$0xff]
    %v2729 = vld [vmem:[#allocation4 + $0x178] sm:$0xff]
    %v2730 = vld [vmem:[#allocation4 + $0x180] sm:$0xff]
    %v2731 = vld [vmem:[#allocation4 + $0x188] sm:$0xff]
    %v2732 = vld [vmem:[#allocation4 + $0x190] sm:$0xff]
    %v2733 = vld [vmem:[#allocation4 + $0x198] sm:$0xff]
    %v2734 = vld [vmem:[#allocation4 + $0x1a0] sm:$0xff]
    %v2735 = vld [vmem:[#allocation4 + $0x1a8] sm:$0xff]
    %v2736 = vld [vmem:[#allocation4 + $0x1b0] sm:$0xff]
    %v2737 = vld [vmem:[#allocation4 + $0x1b8] sm:$0xff]
    %v2738 = vld [vmem:[#allocation4 + $0x1c0] sm:$0xff]
    %v2739 = vld [vmem:[#allocation4 + $0x1c8] sm:$0xff]
    %v2740 = vld [vmem:[#allocation4 + $0x1d0] sm:$0xff]
    %v2741 = vld [vmem:[#allocation4 + $0x1d8] sm:$0xff]
    %v2742 = vld [vmem:[#allocation4 + $0x1e0] sm:$0xff]
    %v2743 = vld [vmem:[#allocation4 + $0x1e8] sm:$0xff]
    %v2744 = vld [vmem:[#allocation4 + $0x1f0] sm:$0xff]
    %v2745 = vld [vmem:[#allocation4 + $0x1f8] sm:$0xff]
    %v2746 = vld [vmem:[%s8] sm:$0xf]
    %v2748 = vlaneseq
    %v2749 = vshrl.u32 %v2748, 7
    %v2750 = vsub.s32 0, %v2749
    %v2751 = vrot.slane %v2746, %v2750
    %v2752 = vlaneseq
    %v2753 = vshrl.u32 %v2752, 7
    %v2754 = vsub.s32 1, %v2753
    %v2755 = vrot.slane %v2746, %v2754
    %v2756 = vlaneseq
    %v2757 = vshrl.u32 %v2756, 7
    %v2758 = vsub.s32 2, %v2757
    %v2759 = vrot.slane %v2746, %v2758
    %v2760 = vlaneseq
    %v2761 = vshrl.u32 %v2760, 7
    %v2762 = vsub.s32 3, %v2761
    %v2763 = vrot.slane %v2746, %v2762
    %2768 = vmatprep.subr.mxu0 %v2683
    %2769 = vmatpush1.msra.mxu0 %v2682
    %2770 = vmatprep.subr.mxu0 %v2687
    %2771 = vmatpush1.msra.mxu0 %v2686
    %2772 = vmatprep.subr.mxu0 %v2691
    %2773 = vmatpush1.msra.mxu0 %v2690
    %2774 = vmatprep.subr.mxu0 %v2695
    %2775 = vmatpush1.msra.mxu0 %v2694
    %2776 = vmatprep.subr.mxu0 %v2699
    %2777 = vmatpush1.msra.mxu0 %v2698
    %2778 = vmatprep.subr.mxu0 %v2703
    %2779 = vmatpush1.msra.mxu0 %v2702
    %2780 = vmatprep.subr.mxu0 %v2707
    %2781 = vmatpush1.msra.mxu0 %v2706
    %2782 = vmatprep.subr.mxu0 %v2711
    %2783 = vmatpush1.msra.mxu0 %v2710
    %2784 = vmatprep.subr.mxu0 %v2715
    %2785 = vmatpush1.msra.mxu0 %v2714
    %2786 = vmatprep.subr.mxu0 %v2719
    %2787 = vmatpush1.msra.mxu0 %v2718
    %2788 = vmatprep.subr.mxu0 %v2723
    %2789 = vmatpush1.msra.mxu0 %v2722
    %2790 = vmatprep.subr.mxu0 %v2727
    %2791 = vmatpush1.msra.mxu0 %v2726
    %2792 = vmatprep.subr.mxu0 %v2731
    %2793 = vmatpush1.msra.mxu0 %v2730
    %2794 = vmatprep.subr.mxu0 %v2735
    %2795 = vmatpush1.msra.mxu0 %v2734
    %2796 = vmatprep.subr.mxu0 %v2739
    %2797 = vmatpush1.msra.mxu0 %v2738
    %2798 = vmatprep.subr.mxu0 %v2743
    %2799 = vmatpush1.msra.mxu0 %v2742
    %2800 = vmatprep.subr.mxu0 0.0
    %2801 = vmatpush1.msra.mxu0 0.0
    %2802 = vmatprep.subr.mxu0 0.0
    %2803 = vmatpush1.msra.mxu0 0.0
    %2804 = vmatprep.subr.mxu0 0.0
    %2805 = vmatpush1.msra.mxu0 0.0
    %2806 = vmatprep.subr.mxu0 0.0
    %2807 = vmatpush1.msra.mxu0 0.0
    %2808 = vmatprep.subr.mxu0 0.0
    %2809 = vmatpush1.msra.mxu0 0.0
    %2810 = vmatprep.subr.mxu0 0.0
    %2811 = vmatpush1.msra.mxu0 0.0
    %2812 = vmatprep.subr.mxu0 0.0
    %2813 = vmatpush1.msra.mxu0 0.0
    %2814 = vmatprep.subr.mxu0 0.0
    %2815 = vmatpush1.msra.mxu0 0.0
    %2816 = vmatprep.subr.mxu0 0.0
    %2817 = vmatpush1.msra.mxu0 0.0
    %2818 = vmatprep.subr.mxu0 0.0
    %2819 = vmatpush1.msra.mxu0 0.0
    %2820 = vmatprep.subr.mxu0 0.0
    %2821 = vmatpush1.msra.mxu0 0.0
    %2822 = vmatprep.subr.mxu0 0.0
    %2823 = vmatpush1.msra.mxu0 0.0
    %2824 = vmatprep.subr.mxu0 0.0
    %2825 = vmatpush1.msra.mxu0 0.0
    %2826 = vmatprep.subr.mxu0 0.0
    %2827 = vmatpush1.msra.mxu0 0.0
    %2828 = vmatprep.subr.mxu0 0.0
    %2829 = vmatpush1.msra.mxu0 0.0
    %2830 = vmatprep.subr.mxu0 0.0
    %2831 = vmatpush1.msra.mxu0 0.0
    %2832 = vmatprep.mubr.f32.mxu0 0.0
    %2833 = vmatmul.mubr.f32.gmra.mrb[0].mxu0 %v2681
    %v2834 = vpop.f32.mrb[0].mxu0
    %v2835 = vadd.f32 %v2751, %v2834
    %v2836 = vpop.f32.mrb[0].mxu0
    %v2837 = vadd.f32 %v2755, %v2836
    %2838 = vdwg.mxu0
    %2839 = vmatprep.subr.mxu0 %v2685
    %2840 = vmatpush1.msra.mxu0 %v2684
    %2841 = vmatprep.subr.mxu0 %v2689
    %2842 = vmatpush1.msra.mxu0 %v2688
    %2843 = vmatprep.subr.mxu0 %v2693
    %2844 = vmatpush1.msra.mxu0 %v2692
    %2845 = vmatprep.subr.mxu0 %v2697
    %2846 = vmatpush1.msra.mxu0 %v2696
    %2847 = vmatprep.subr.mxu0 %v2701
    %2848 = vmatpush1.msra.mxu0 %v2700
    %2849 = vmatprep.subr.mxu0 %v2705
    %2850 = vmatpush1.msra.mxu0 %v2704
    %2851 = vmatprep.subr.mxu0 %v2709
    %2852 = vmatpush1.msra.mxu0 %v2708
    %2853 = vmatprep.subr.mxu0 %v2713
    %2854 = vmatpush1.msra.mxu0 %v2712
    %2855 = vmatprep.subr.mxu0 %v2717
    %2856 = vmatpush1.msra.mxu0 %v2716
    %2857 = vmatprep.subr.mxu0 %v2721
    %2858 = vmatpush1.msra.mxu0 %v2720
    %2859 = vmatprep.subr.mxu0 %v2725
    %2860 = vmatpush1.msra.mxu0 %v2724
    %2861 = vmatprep.subr.mxu0 %v2729
    %2862 = vmatpush1.msra.mxu0 %v2728
    %2863 = vmatprep.subr.mxu0 %v2733
    %2864 = vmatpush1.msra.mxu0 %v2732
    %2865 = vmatprep.subr.mxu0 %v2737
    %2866 = vmatpush1.msra.mxu0 %v2736
    %2867 = vmatprep.subr.mxu0 %v2741
    %2868 = vmatpush1.msra.mxu0 %v2740
    %2869 = vmatprep.subr.mxu0 %v2745
    %2870 = vmatpush1.msra.mxu0 %v2744
    %2871 = vmatprep.subr.mxu0 0.0
    %2872 = vmatpush1.msra.mxu0 0.0
    %2873 = vmatprep.subr.mxu0 0.0
    %2874 = vmatpush1.msra.mxu0 0.0
    %2875 = vmatprep.subr.mxu0 0.0
    %2876 = vmatpush1.msra.mxu0 0.0
    %2877 = vmatprep.subr.mxu0 0.0
    %2878 = vmatpush1.msra.mxu0 0.0
    %2879 = vmatprep.subr.mxu0 0.0
    %2880 = vmatpush1.msra.mxu0 0.0
    %2881 = vmatprep.subr.mxu0 0.0
    %2882 = vmatpush1.msra.mxu0 0.0
    %2883 = vmatprep.subr.mxu0 0.0
    %2884 = vmatpush1.msra.mxu0 0.0
    %2885 = vmatprep.subr.mxu0 0.0
    %2886 = vmatpush1.msra.mxu0 0.0
    %2887 = vmatprep.subr.mxu0 0.0
    %2888 = vmatpush1.msra.mxu0 0.0
    %2889 = vmatprep.subr.mxu0 0.0
    %2890 = vmatpush1.msra.mxu0 0.0
    %2891 = vmatprep.subr.mxu0 0.0
    %2892 = vmatpush1.msra.mxu0 0.0
    %2893 = vmatprep.subr.mxu0 0.0
    %2894 = vmatpush1.msra.mxu0 0.0
    %2895 = vmatprep.subr.mxu0 0.0
    %2896 = vmatpush1.msra.mxu0 0.0
    %2897 = vmatprep.subr.mxu0 0.0
    %2898 = vmatpush1.msra.mxu0 0.0
    %2899 = vmatprep.subr.mxu0 0.0
    %2900 = vmatpush1.msra.mxu0 0.0
    %2901 = vmatprep.subr.mxu0 0.0
    %2902 = vmatpush1.msra.mxu0 0.0
    %2903 = vmatprep.mubr.f32.mxu0 0.0
    %2904 = vmatmul.mubr.f32.gmra.mrb[0].mxu0 %v2681
    %v2905 = vpop.f32.mrb[0].mxu0
    %v2906 = vadd.f32 %v2759, %v2905
    %v2907 = vpop.f32.mrb[0].mxu0
    %v2908 = vadd.f32 %v2763, %v2907
    %2909 = vdwg.mxu0
    %v2910 = vmax.f32 %v2835, 0.0
    %v2911 = vmax.f32 %v2837, 0.0
    %v2912 = vmax.f32 %v2906, 0.0
    %v2913 = vmax.f32 %v2908, 0.0
    %v2914 = vld [vmem:[#allocation6] sm:$0xff]
    %v2915 = vld [vmem:[#allocation6 + $0x8] sm:$0xff]
    %v2916 = vld [vmem:[#allocation6 + $0x10] sm:$0xff]
    %v2917 = vld [vmem:[#allocation6 + $0x18] sm:$0xff]
    %v2918 = vld [vmem:[#allocation6 + $0x20] sm:$0xff]
    %v2919 = vld [vmem:[#allocation6 + $0x28] sm:$0xff]
    %v2920 = vld [vmem:[#allocation6 + $0x30] sm:$0xff]
    %v2921 = vld [vmem:[#allocation6 + $0x38] sm:$0xff]
    %v2922 = vld [vmem:[#allocation6 + $0x40] sm:$0xff]
    %v2923 = vld [vmem:[#allocation6 + $0x48] sm:$0xff]
    %v2924 = vld [vmem:[#allocation6 + $0x50] sm:$0xff]
    %v2925 = vld [vmem:[#allocation6 + $0x58] sm:$0xff]
    %v2926 = vld [vmem:[#allocation6 + $0x60] sm:$0xff]
    %v2927 = vld [vmem:[#allocation6 + $0x68] sm:$0xff]
    %v2928 = vld [vmem:[#allocation6 + $0x70] sm:$0xff]
    %v2929 = vld [vmem:[#allocation6 + $0x78] sm:$0xff]
    %v2930 = vld [vmem:[#allocation6 + $0x80] sm:$0xff]
    %v2931 = vld [vmem:[#allocation6 + $0x88] sm:$0xff]
    %v2932 = vld [vmem:[#allocation6 + $0x90] sm:$0xff]
    %v2933 = vld [vmem:[#allocation6 + $0x98] sm:$0xff]
    %v2934 = vld [vmem:[#allocation6 + $0xa0] sm:$0xff]
    %v2935 = vld [vmem:[#allocation6 + $0xa8] sm:$0xff]
    %v2936 = vld [vmem:[#allocation6 + $0xb0] sm:$0xff]
    %v2937 = vld [vmem:[#allocation6 + $0xb8] sm:$0xff]
    %v2938 = vld [vmem:[#allocation6 + $0xc0] sm:$0xff]
    %v2939 = vld [vmem:[#allocation6 + $0xc8] sm:$0xff]
    %v2940 = vld [vmem:[#allocation6 + $0xd0] sm:$0xff]
    %v2941 = vld [vmem:[#allocation6 + $0xd8] sm:$0xff]
    %v2942 = vld [vmem:[#allocation6 + $0xe0] sm:$0xff]
    %v2943 = vld [vmem:[#allocation6 + $0xe8] sm:$0xff]
    %v2944 = vld [vmem:[#allocation6 + $0xf0] sm:$0xff]
    %v2945 = vld [vmem:[#allocation6 + $0xf8] sm:$0xff]
    %v2946 = vld [vmem:[#allocation6 + $0x100] sm:$0xff]
    %v2947 = vld [vmem:[#allocation6 + $0x108] sm:$0xff]
    %v2948 = vld [vmem:[#allocation6 + $0x110] sm:$0xff]
    %v2949 = vld [vmem:[#allocation6 + $0x118] sm:$0xff]
    %v2950 = vld [vmem:[#allocation6 + $0x120] sm:$0xff]
    %v2951 = vld [vmem:[#allocation6 + $0x128] sm:$0xff]
    %v2952 = vld [vmem:[#allocation6 + $0x130] sm:$0xff]
    %v2953 = vld [vmem:[#allocation6 + $0x138] sm:$0xff]
    %v2954 = vld [vmem:[#allocation6 + $0x140] sm:$0xff]
    %v2955 = vld [vmem:[#allocation6 + $0x148] sm:$0xff]
    %v2956 = vld [vmem:[#allocation6 + $0x150] sm:$0xff]
    %v2957 = vld [vmem:[#allocation6 + $0x158] sm:$0xff]
    %v2958 = vld [vmem:[#allocation6 + $0x160] sm:$0xff]
    %v2959 = vld [vmem:[#allocation6 + $0x168] sm:$0xff]
    %v2960 = vld [vmem:[#allocation6 + $0x170] sm:$0xff]
    %v2961 = vld [vmem:[#allocation6 + $0x178] sm:$0xff]
    %v2962 = vld [vmem:[#allocation6 + $0x180] sm:$0xff]
    %v2963 = vld [vmem:[#allocation6 + $0x188] sm:$0xff]
    %v2964 = vld [vmem:[#allocation6 + $0x190] sm:$0xff]
    %v2965 = vld [vmem:[#allocation6 + $0x198] sm:$0xff]
    %v2966 = vld [vmem:[#allocation6 + $0x1a0] sm:$0xff]
    %v2967 = vld [vmem:[#allocation6 + $0x1a8] sm:$0xff]
    %v2968 = vld [vmem:[#allocation6 + $0x1b0] sm:$0xff]
    %v2969 = vld [vmem:[#allocation6 + $0x1b8] sm:$0xff]
    %v2970 = vld [vmem:[#allocation6 + $0x1c0] sm:$0xff]
    %v2971 = vld [vmem:[#allocation6 + $0x1c8] sm:$0xff]
    %v2972 = vld [vmem:[#allocation6 + $0x1d0] sm:$0xff]
    %v2973 = vld [vmem:[#allocation6 + $0x1d8] sm:$0xff]
    %v2974 = vld [vmem:[#allocation6 + $0x1e0] sm:$0xff]
    %v2975 = vld [vmem:[#allocation6 + $0x1e8] sm:$0xff]
    %v2976 = vld [vmem:[#allocation6 + $0x1f0] sm:$0xff]
    %v2977 = vld [vmem:[#allocation6 + $0x1f8] sm:$0xff]
    %v2978 = vld [vmem:[#allocation6 + $0x200] sm:$0xff]
    %v2979 = vld [vmem:[#allocation6 + $0x208] sm:$0xff]
    %v2980 = vld [vmem:[#allocation6 + $0x210] sm:$0xff]
    %v2981 = vld [vmem:[#allocation6 + $0x218] sm:$0xff]
    %v2982 = vld [vmem:[#allocation6 + $0x220] sm:$0xff]
    %v2983 = vld [vmem:[#allocation6 + $0x228] sm:$0xff]
    %v2984 = vld [vmem:[#allocation6 + $0x230] sm:$0xff]
    %v2985 = vld [vmem:[#allocation6 + $0x238] sm:$0xff]
    %v2986 = vld [vmem:[#allocation6 + $0x240] sm:$0xff]
    %v2987 = vld [vmem:[#allocation6 + $0x248] sm:$0xff]
    %v2988 = vld [vmem:[#allocation6 + $0x250] sm:$0xff]
    %v2989 = vld [vmem:[#allocation6 + $0x258] sm:$0xff]
    %v2990 = vld [vmem:[#allocation6 + $0x260] sm:$0xff]
    %v2991 = vld [vmem:[#allocation6 + $0x268] sm:$0xff]
    %v2992 = vld [vmem:[#allocation6 + $0x270] sm:$0xff]
    %v2993 = vld [vmem:[#allocation6 + $0x278] sm:$0xff]
    %v2994 = vld [vmem:[#allocation6 + $0x280] sm:$0xff]
    %v2995 = vld [vmem:[#allocation6 + $0x288] sm:$0xff]
    %v2996 = vld [vmem:[#allocation6 + $0x290] sm:$0xff]
    %v2997 = vld [vmem:[#allocation6 + $0x298] sm:$0xff]
    %v2998 = vld [vmem:[#allocation6 + $0x2a0] sm:$0xff]
    %v2999 = vld [vmem:[#allocation6 + $0x2a8] sm:$0xff]
    %v3000 = vld [vmem:[#allocation6 + $0x2b0] sm:$0xff]
    %v3001 = vld [vmem:[#allocation6 + $0x2b8] sm:$0xff]
    %v3002 = vld [vmem:[#allocation6 + $0x2c0] sm:$0xff]
    %v3003 = vld [vmem:[#allocation6 + $0x2c8] sm:$0xff]
    %v3004 = vld [vmem:[#allocation6 + $0x2d0] sm:$0xff]
    %v3005 = vld [vmem:[#allocation6 + $0x2d8] sm:$0xff]
    %v3006 = vld [vmem:[#allocation6 + $0x2e0] sm:$0xff]
    %v3007 = vld [vmem:[#allocation6 + $0x2e8] sm:$0xff]
    %v3008 = vld [vmem:[#allocation6 + $0x2f0] sm:$0xff]
    %v3009 = vld [vmem:[#allocation6 + $0x2f8] sm:$0xff]
    %v3010 = vld [vmem:[#allocation6 + $0x300] sm:$0xff]
    %v3011 = vld [vmem:[#allocation6 + $0x308] sm:$0xff]
    %v3012 = vld [vmem:[#allocation6 + $0x310] sm:$0xff]
    %v3013 = vld [vmem:[#allocation6 + $0x318] sm:$0xff]
    %v3014 = vld [vmem:[#allocation6 + $0x320] sm:$0xff]
    %v3015 = vld [vmem:[#allocation6 + $0x328] sm:$0xff]
    %v3016 = vld [vmem:[#allocation6 + $0x330] sm:$0xff]
    %v3017 = vld [vmem:[#allocation6 + $0x338] sm:$0xff]
    %v3018 = vld [vmem:[#allocation6 + $0x340] sm:$0xff]
    %v3019 = vld [vmem:[#allocation6 + $0x348] sm:$0xff]
    %v3020 = vld [vmem:[#allocation6 + $0x350] sm:$0xff]
    %v3021 = vld [vmem:[#allocation6 + $0x358] sm:$0xff]
    %v3022 = vld [vmem:[#allocation6 + $0x360] sm:$0xff]
    %v3023 = vld [vmem:[#allocation6 + $0x368] sm:$0xff]
    %v3024 = vld [vmem:[#allocation6 + $0x370] sm:$0xff]
    %v3025 = vld [vmem:[#allocation6 + $0x378] sm:$0xff]
    %v3026 = vld [vmem:[#allocation6 + $0x380] sm:$0xff]
    %v3027 = vld [vmem:[#allocation6 + $0x388] sm:$0xff]
    %v3028 = vld [vmem:[#allocation6 + $0x390] sm:$0xff]
    %v3029 = vld [vmem:[#allocation6 + $0x398] sm:$0xff]
    %v3030 = vld [vmem:[#allocation6 + $0x3a0] sm:$0xff]
    %v3031 = vld [vmem:[#allocation6 + $0x3a8] sm:$0xff]
    %v3032 = vld [vmem:[#allocation6 + $0x3b0] sm:$0xff]
    %v3033 = vld [vmem:[#allocation6 + $0x3b8] sm:$0xff]
    %v3034 = vld [vmem:[#allocation6 + $0x3c0] sm:$0xff]
    %v3035 = vld [vmem:[#allocation6 + $0x3c8] sm:$0xff]
    %v3036 = vld [vmem:[#allocation6 + $0x3d0] sm:$0xff]
    %v3037 = vld [vmem:[#allocation6 + $0x3d8] sm:$0xff]
    %v3038 = vld [vmem:[#allocation6 + $0x3e0] sm:$0xff]
    %v3039 = vld [vmem:[#allocation6 + $0x3e8] sm:$0xff]
    %v3040 = vld [vmem:[#allocation6 + $0x3f0] sm:$0xff]
    %v3041 = vld [vmem:[#allocation6 + $0x3f8] sm:$0xff]
    %v3042 = vld [vmem:[#allocation6 + $0x400] sm:$0xff]
    %v3043 = vld [vmem:[#allocation6 + $0x408] sm:$0xff]
    %v3044 = vld [vmem:[#allocation6 + $0x410] sm:$0xff]
    %v3045 = vld [vmem:[#allocation6 + $0x418] sm:$0xff]
    %v3046 = vld [vmem:[#allocation6 + $0x420] sm:$0xff]
    %v3047 = vld [vmem:[#allocation6 + $0x428] sm:$0xff]
    %v3048 = vld [vmem:[#allocation6 + $0x430] sm:$0xff]
    %v3049 = vld [vmem:[#allocation6 + $0x438] sm:$0xff]
    %v3050 = vld [vmem:[#allocation6 + $0x440] sm:$0xff]
    %v3051 = vld [vmem:[#allocation6 + $0x448] sm:$0xff]
    %v3052 = vld [vmem:[#allocation6 + $0x450] sm:$0xff]
    %v3053 = vld [vmem:[#allocation6 + $0x458] sm:$0xff]
    %v3054 = vld [vmem:[#allocation6 + $0x460] sm:$0xff]
    %v3055 = vld [vmem:[#allocation6 + $0x468] sm:$0xff]
    %v3056 = vld [vmem:[#allocation6 + $0x470] sm:$0xff]
    %v3057 = vld [vmem:[#allocation6 + $0x478] sm:$0xff]
    %v3058 = vld [vmem:[#allocation6 + $0x480] sm:$0xff]
    %v3059 = vld [vmem:[#allocation6 + $0x488] sm:$0xff]
    %v3060 = vld [vmem:[#allocation6 + $0x490] sm:$0xff]
    %v3061 = vld [vmem:[#allocation6 + $0x498] sm:$0xff]
    %v3062 = vld [vmem:[#allocation6 + $0x4a0] sm:$0xff]
    %v3063 = vld [vmem:[#allocation6 + $0x4a8] sm:$0xff]
    %v3064 = vld [vmem:[#allocation6 + $0x4b0] sm:$0xff]
    %v3065 = vld [vmem:[#allocation6 + $0x4b8] sm:$0xff]
    %v3066 = vld [vmem:[#allocation6 + $0x4c0] sm:$0xff]
    %v3067 = vld [vmem:[#allocation6 + $0x4c8] sm:$0xff]
    %v3068 = vld [vmem:[#allocation6 + $0x4d0] sm:$0xff]
    %v3069 = vld [vmem:[#allocation6 + $0x4d8] sm:$0xff]
    %v3070 = vld [vmem:[#allocation6 + $0x4e0] sm:$0xff]
    %v3071 = vld [vmem:[#allocation6 + $0x4e8] sm:$0xff]
    %v3072 = vld [vmem:[#allocation6 + $0x4f0] sm:$0xff]
    %v3073 = vld [vmem:[#allocation6 + $0x4f8] sm:$0xff]
    %v3074 = vld [vmem:[#allocation6 + $0x500] sm:$0xff]
    %v3075 = vld [vmem:[#allocation6 + $0x508] sm:$0xff]
    %v3076 = vld [vmem:[#allocation6 + $0x510] sm:$0xff]
    %v3077 = vld [vmem:[#allocation6 + $0x518] sm:$0xff]
    %v3078 = vld [vmem:[#allocation6 + $0x520] sm:$0xff]
    %v3079 = vld [vmem:[#allocation6 + $0x528] sm:$0xff]
    %v3080 = vld [vmem:[#allocation6 + $0x530] sm:$0xff]
    %v3081 = vld [vmem:[#allocation6 + $0x538] sm:$0xff]
    %v3082 = vld [vmem:[#allocation6 + $0x540] sm:$0xff]
    %v3083 = vld [vmem:[#allocation6 + $0x548] sm:$0xff]
    %v3084 = vld [vmem:[#allocation6 + $0x550] sm:$0xff]
    %v3085 = vld [vmem:[#allocation6 + $0x558] sm:$0xff]
    %v3086 = vld [vmem:[#allocation6 + $0x560] sm:$0xff]
    %v3087 = vld [vmem:[#allocation6 + $0x568] sm:$0xff]
    %v3088 = vld [vmem:[#allocation6 + $0x570] sm:$0xff]
    %v3089 = vld [vmem:[#allocation6 + $0x578] sm:$0xff]
    %v3090 = vld [vmem:[#allocation6 + $0x580] sm:$0xff]
    %v3091 = vld [vmem:[#allocation6 + $0x588] sm:$0xff]
    %v3092 = vld [vmem:[#allocation6 + $0x590] sm:$0xff]
    %v3093 = vld [vmem:[#allocation6 + $0x598] sm:$0xff]
    %v3094 = vld [vmem:[#allocation6 + $0x5a0] sm:$0xff]
    %v3095 = vld [vmem:[#allocation6 + $0x5a8] sm:$0xff]
    %v3096 = vld [vmem:[#allocation6 + $0x5b0] sm:$0xff]
    %v3097 = vld [vmem:[#allocation6 + $0x5b8] sm:$0xff]
    %v3098 = vld [vmem:[#allocation6 + $0x5c0] sm:$0xff]
    %v3099 = vld [vmem:[#allocation6 + $0x5c8] sm:$0xff]
    %v3100 = vld [vmem:[#allocation6 + $0x5d0] sm:$0xff]
    %v3101 = vld [vmem:[#allocation6 + $0x5d8] sm:$0xff]
    %v3102 = vld [vmem:[#allocation6 + $0x5e0] sm:$0xff]
    %v3103 = vld [vmem:[#allocation6 + $0x5e8] sm:$0xff]
    %v3104 = vld [vmem:[#allocation6 + $0x5f0] sm:$0xff]
    %v3105 = vld [vmem:[#allocation6 + $0x5f8] sm:$0xff]
    %v3106 = vld [vmem:[%s10] sm:$0x7]
    %v3108 = vlaneseq
    %v3109 = vshrl.u32 %v3108, 7
    %v3110 = vsub.s32 0, %v3109
    %v3111 = vrot.slane %v3106, %v3110
    %v3112 = vlaneseq
    %v3113 = vshrl.u32 %v3112, 7
    %v3114 = vsub.s32 1, %v3113
    %v3115 = vrot.slane %v3106, %v3114
    %v3116 = vlaneseq
    %v3117 = vshrl.u32 %v3116, 7
    %v3118 = vsub.s32 2, %v3117
    %v3119 = vrot.slane %v3106, %v3118
    %3123 = vmatprep.subr.mxu0 %v2915
    %3124 = vmatpush1.msra.mxu0 %v2914
    %3125 = vmatprep.subr.mxu0 %v2918
    %3126 = vmatpush1.msra.mxu0 %v2917
    %3127 = vmatprep.subr.mxu0 %v2921
    %3128 = vmatpush1.msra.mxu0 %v2920
    %3129 = vmatprep.subr.mxu0 %v2924
    %3130 = vmatpush1.msra.mxu0 %v2923
    %3131 = vmatprep.subr.mxu0 %v2927
    %3132 = vmatpush1.msra.mxu0 %v2926
    %3133 = vmatprep.subr.mxu0 %v2930
    %3134 = vmatpush1.msra.mxu0 %v2929
    %3135 = vmatprep.subr.mxu0 %v2933
    %3136 = vmatpush1.msra.mxu0 %v2932
    %3137 = vmatprep.subr.mxu0 %v2936
    %3138 = vmatpush1.msra.mxu0 %v2935
    %3139 = vmatprep.subr.mxu0 %v2939
    %3140 = vmatpush1.msra.mxu0 %v2938
    %3141 = vmatprep.subr.mxu0 %v2942
    %3142 = vmatpush1.msra.mxu0 %v2941
    %3143 = vmatprep.subr.mxu0 %v2945
    %3144 = vmatpush1.msra.mxu0 %v2944
    %3145 = vmatprep.subr.mxu0 %v2948
    %3146 = vmatpush1.msra.mxu0 %v2947
    %3147 = vmatprep.subr.mxu0 %v2951
    %3148 = vmatpush1.msra.mxu0 %v2950
    %3149 = vmatprep.subr.mxu0 %v2954
    %3150 = vmatpush1.msra.mxu0 %v2953
    %3151 = vmatprep.subr.mxu0 %v2957
    %3152 = vmatpush1.msra.mxu0 %v2956
    %3153 = vmatprep.subr.mxu0 %v2960
    %3154 = vmatpush1.msra.mxu0 %v2959
    %3155 = vmatprep.subr.mxu0 %v2963
    %3156 = vmatpush1.msra.mxu0 %v2962
    %3157 = vmatprep.subr.mxu0 %v2966
    %3158 = vmatpush1.msra.mxu0 %v2965
    %3159 = vmatprep.subr.mxu0 %v2969
    %3160 = vmatpush1.msra.mxu0 %v2968
    %3161 = vmatprep.subr.mxu0 %v2972
    %3162 = vmatpush1.msra.mxu0 %v2971
    %3163 = vmatprep.subr.mxu0 %v2975
    %3164 = vmatpush1.msra.mxu0 %v2974
    %3165 = vmatprep.subr.mxu0 %v2978
    %3166 = vmatpush1.msra.mxu0 %v2977
    %3167 = vmatprep.subr.mxu0 %v2981
    %3168 = vmatpush1.msra.mxu0 %v2980
    %3169 = vmatprep.subr.mxu0 %v2984
    %3170 = vmatpush1.msra.mxu0 %v2983
    %3171 = vmatprep.subr.mxu0 %v2987
    %3172 = vmatpush1.msra.mxu0 %v2986
    %3173 = vmatprep.subr.mxu0 %v2990
    %3174 = vmatpush1.msra.mxu0 %v2989
    %3175 = vmatprep.subr.mxu0 %v2993
    %3176 = vmatpush1.msra.mxu0 %v2992
    %3177 = vmatprep.subr.mxu0 %v2996
    %3178 = vmatpush1.msra.mxu0 %v2995
    %3179 = vmatprep.subr.mxu0 %v2999
    %3180 = vmatpush1.msra.mxu0 %v2998
    %3181 = vmatprep.subr.mxu0 %v3002
    %3182 = vmatpush1.msra.mxu0 %v3001
    %3183 = vmatprep.subr.mxu0 %v3005
    %3184 = vmatpush1.msra.mxu0 %v3004
    %3185 = vmatprep.subr.mxu0 %v3008
    %3186 = vmatpush1.msra.mxu0 %v3007
    %3187 = vmatprep.mubr.f32.mxu0 %v2911
    %3188 = vmatmul.mubr.f32.gmra.mrb[0].mxu0 %v2910
    %v3189 = vpop.f32.mrb[0].mxu0
    %v3190 = vadd.f32 %v3111, %v3189
    %v3191 = vpop.f32.mrb[0].mxu0
    %v3192 = vadd.f32 %v3115, %v3191
    %3193 = vdwg.mxu0
    %3194 = vmatprep.subr.mxu0 %v3011
    %3195 = vmatpush1.msra.mxu0 %v3010
    %3196 = vmatprep.subr.mxu0 %v3014
    %3197 = vmatpush1.msra.mxu0 %v3013
    %3198 = vmatprep.subr.mxu0 %v3017
    %3199 = vmatpush1.msra.mxu0 %v3016
    %3200 = vmatprep.subr.mxu0 %v3020
    %3201 = vmatpush1.msra.mxu0 %v3019
    %3202 = vmatprep.subr.mxu0 %v3023
    %3203 = vmatpush1.msra.mxu0 %v3022
    %3204 = vmatprep.subr.mxu0 %v3026
    %3205 = vmatpush1.msra.mxu0 %v3025
    %3206 = vmatprep.subr.mxu0 %v3029
    %3207 = vmatpush1.msra.mxu0 %v3028
    %3208 = vmatprep.subr.mxu0 %v3032
    %3209 = vmatpush1.msra.mxu0 %v3031
    %3210 = vmatprep.subr.mxu0 %v3035
    %3211 = vmatpush1.msra.mxu0 %v3034
    %3212 = vmatprep.subr.mxu0 %v3038
    %3213 = vmatpush1.msra.mxu0 %v3037
    %3214 = vmatprep.subr.mxu0 %v3041
    %3215 = vmatpush1.msra.mxu0 %v3040
    %3216 = vmatprep.subr.mxu0 %v3044
    %3217 = vmatpush1.msra.mxu0 %v3043
    %3218 = vmatprep.subr.mxu0 %v3047
    %3219 = vmatpush1.msra.mxu0 %v3046
    %3220 = vmatprep.subr.mxu0 %v3050
    %3221 = vmatpush1.msra.mxu0 %v3049
    %3222 = vmatprep.subr.mxu0 %v3053
    %3223 = vmatpush1.msra.mxu0 %v3052
    %3224 = vmatprep.subr.mxu0 %v3056
    %3225 = vmatpush1.msra.mxu0 %v3055
    %3226 = vmatprep.subr.mxu0 %v3059
    %3227 = vmatpush1.msra.mxu0 %v3058
    %3228 = vmatprep.subr.mxu0 %v3062
    %3229 = vmatpush1.msra.mxu0 %v3061
    %3230 = vmatprep.subr.mxu0 %v3065
    %3231 = vmatpush1.msra.mxu0 %v3064
    %3232 = vmatprep.subr.mxu0 %v3068
    %3233 = vmatpush1.msra.mxu0 %v3067
    %3234 = vmatprep.subr.mxu0 %v3071
    %3235 = vmatpush1.msra.mxu0 %v3070
    %3236 = vmatprep.subr.mxu0 %v3074
    %3237 = vmatpush1.msra.mxu0 %v3073
    %3238 = vmatprep.subr.mxu0 %v3077
    %3239 = vmatpush1.msra.mxu0 %v3076
    %3240 = vmatprep.subr.mxu0 %v3080
    %3241 = vmatpush1.msra.mxu0 %v3079
    %3242 = vmatprep.subr.mxu0 %v3083
    %3243 = vmatpush1.msra.mxu0 %v3082
    %3244 = vmatprep.subr.mxu0 %v3086
    %3245 = vmatpush1.msra.mxu0 %v3085
    %3246 = vmatprep.subr.mxu0 %v3089
    %3247 = vmatpush1.msra.mxu0 %v3088
    %3248 = vmatprep.subr.mxu0 %v3092
    %3249 = vmatpush1.msra.mxu0 %v3091
    %3250 = vmatprep.subr.mxu0 %v3095
    %3251 = vmatpush1.msra.mxu0 %v3094
    %3252 = vmatprep.subr.mxu0 %v3098
    %3253 = vmatpush1.msra.mxu0 %v3097
    %3254 = vmatprep.subr.mxu0 %v3101
    %3255 = vmatpush1.msra.mxu0 %v3100
    %3256 = vmatprep.subr.mxu0 %v3104
    %3257 = vmatpush1.msra.mxu0 %v3103
    %3258 = vmatprep.mubr.f32.mxu0 %v2913
    %3259 = vmatmul.mubr.f32.gmra.mrb[0].mxu0 %v2912
    %v3260 = vpop.f32.mrb[0].mxu0
    %v3261 = vadd.f32 %v3190, %v3260
    %v3262 = vpop.f32.mrb[0].mxu0
    %v3263 = vadd.f32 %v3192, %v3262
    %3264 = vdwg.mxu0
    %3265 = vmatprep.subr.mxu0 0.0
    %3266 = vmatpush1.msra.mxu0 %v2916
    %3267 = vmatprep.subr.mxu0 0.0
    %3268 = vmatpush1.msra.mxu0 %v2919
    %3269 = vmatprep.subr.mxu0 0.0
    %3270 = vmatpush1.msra.mxu0 %v2922
    %3271 = vmatprep.subr.mxu0 0.0
    %3272 = vmatpush1.msra.mxu0 %v2925
    %3273 = vmatprep.subr.mxu0 0.0
    %3274 = vmatpush1.msra.mxu0 %v2928
    %3275 = vmatprep.subr.mxu0 0.0
    %3276 = vmatpush1.msra.mxu0 %v2931
    %3277 = vmatprep.subr.mxu0 0.0
    %3278 = vmatpush1.msra.mxu0 %v2934
    %3279 = vmatprep.subr.mxu0 0.0
    %3280 = vmatpush1.msra.mxu0 %v2937
    %3281 = vmatprep.subr.mxu0 0.0
    %3282 = vmatpush1.msra.mxu0 %v2940
    %3283 = vmatprep.subr.mxu0 0.0
    %3284 = vmatpush1.msra.mxu0 %v2943
    %3285 = vmatprep.subr.mxu0 0.0
    %3286 = vmatpush1.msra.mxu0 %v2946
    %3287 = vmatprep.subr.mxu0 0.0
    %3288 = vmatpush1.msra.mxu0 %v2949
    %3289 = vmatprep.subr.mxu0 0.0
    %3290 = vmatpush1.msra.mxu0 %v2952
    %3291 = vmatprep.subr.mxu0 0.0
    %3292 = vmatpush1.msra.mxu0 %v2955
    %3293 = vmatprep.subr.mxu0 0.0
    %3294 = vmatpush1.msra.mxu0 %v2958
    %3295 = vmatprep.subr.mxu0 0.0
    %3296 = vmatpush1.msra.mxu0 %v2961
    %3297 = vmatprep.subr.mxu0 0.0
    %3298 = vmatpush1.msra.mxu0 %v2964
    %3299 = vmatprep.subr.mxu0 0.0
    %3300 = vmatpush1.msra.mxu0 %v2967
    %3301 = vmatprep.subr.mxu0 0.0
    %3302 = vmatpush1.msra.mxu0 %v2970
    %3303 = vmatprep.subr.mxu0 0.0
    %3304 = vmatpush1.msra.mxu0 %v2973
    %3305 = vmatprep.subr.mxu0 0.0
    %3306 = vmatpush1.msra.mxu0 %v2976
    %3307 = vmatprep.subr.mxu0 0.0
    %3308 = vmatpush1.msra.mxu0 %v2979
    %3309 = vmatprep.subr.mxu0 0.0
    %3310 = vmatpush1.msra.mxu0 %v2982
    %3311 = vmatprep.subr.mxu0 0.0
    %3312 = vmatpush1.msra.mxu0 %v2985
    %3313 = vmatprep.subr.mxu0 0.0
    %3314 = vmatpush1.msra.mxu0 %v2988
    %3315 = vmatprep.subr.mxu0 0.0
    %3316 = vmatpush1.msra.mxu0 %v2991
    %3317 = vmatprep.subr.mxu0 0.0
    %3318 = vmatpush1.msra.mxu0 %v2994
    %3319 = vmatprep.subr.mxu0 0.0
    %3320 = vmatpush1.msra.mxu0 %v2997
    %3321 = vmatprep.subr.mxu0 0.0
    %3322 = vmatpush1.msra.mxu0 %v3000
    %3323 = vmatprep.subr.mxu0 0.0
    %3324 = vmatpush1.msra.mxu0 %v3003
    %3325 = vmatprep.subr.mxu0 0.0
    %3326 = vmatpush1.msra.mxu0 %v3006
    %3327 = vmatprep.subr.mxu0 0.0
    %3328 = vmatpush1.msra.mxu0 %v3009
    %3329 = vmatprep.mubr.f32.mxu0 %v2911
    %3330 = vmatmul.mubr.f32.gmra.mrb[0].mxu0 %v2910
    %v3331 = vpop.f32.mrb[0].mxu0
    %v3332 = vadd.f32 %v3119, %v3331
    %v3333 = vpop.f32.mrb[0].mxu0
    %3334 = vdwg.mxu0
    %3335 = vmatprep.subr.mxu0 0.0
    %3336 = vmatpush1.msra.mxu0 %v3012
    %3337 = vmatprep.subr.mxu0 0.0
    %3338 = vmatpush1.msra.mxu0 %v3015
    %3339 = vmatprep.subr.mxu0 0.0
    %3340 = vmatpush1.msra.mxu0 %v3018
    %3341 = vmatprep.subr.mxu0 0.0
    %3342 = vmatpush1.msra.mxu0 %v3021
    %3343 = vmatprep.subr.mxu0 0.0
    %3344 = vmatpush1.msra.mxu0 %v3024
    %3345 = vmatprep.subr.mxu0 0.0
    %3346 = vmatpush1.msra.mxu0 %v3027
    %3347 = vmatprep.subr.mxu0 0.0
    %3348 = vmatpush1.msra.mxu0 %v3030
    %3349 = vmatprep.subr.mxu0 0.0
    %3350 = vmatpush1.msra.mxu0 %v3033
    %3351 = vmatprep.subr.mxu0 0.0
    %3352 = vmatpush1.msra.mxu0 %v3036
    %3353 = vmatprep.subr.mxu0 0.0
    %3354 = vmatpush1.msra.mxu0 %v3039
    %3355 = vmatprep.subr.mxu0 0.0
    %3356 = vmatpush1.msra.mxu0 %v3042
    %3357 = vmatprep.subr.mxu0 0.0
    %3358 = vmatpush1.msra.mxu0 %v3045
    %3359 = vmatprep.subr.mxu0 0.0
    %3360 = vmatpush1.msra.mxu0 %v3048
    %3361 = vmatprep.subr.mxu0 0.0
    %3362 = vmatpush1.msra.mxu0 %v3051
    %3363 = vmatprep.subr.mxu0 0.0
    %3364 = vmatpush1.msra.mxu0 %v3054
    %3365 = vmatprep.subr.mxu0 0.0
    %3366 = vmatpush1.msra.mxu0 %v3057
    %3367 = vmatprep.subr.mxu0 0.0
    %3368 = vmatpush1.msra.mxu0 %v3060
    %3369 = vmatprep.subr.mxu0 0.0
    %3370 = vmatpush1.msra.mxu0 %v3063
    %3371 = vmatprep.subr.mxu0 0.0
    %3372 = vmatpush1.msra.mxu0 %v3066
    %3373 = vmatprep.subr.mxu0 0.0
    %3374 = vmatpush1.msra.mxu0 %v3069
    %3375 = vmatprep.subr.mxu0 0.0
    %3376 = vmatpush1.msra.mxu0 %v3072
    %3377 = vmatprep.subr.mxu0 0.0
    %3378 = vmatpush1.msra.mxu0 %v3075
    %3379 = vmatprep.subr.mxu0 0.0
    %3380 = vmatpush1.msra.mxu0 %v3078
    %3381 = vmatprep.subr.mxu0 0.0
    %3382 = vmatpush1.msra.mxu0 %v3081
    %3383 = vmatprep.subr.mxu0 0.0
    %3384 = vmatpush1.msra.mxu0 %v3084
    %3385 = vmatprep.subr.mxu0 0.0
    %3386 = vmatpush1.msra.mxu0 %v3087
    %3387 = vmatprep.subr.mxu0 0.0
    %3388 = vmatpush1.msra.mxu0 %v3090
    %3389 = vmatprep.subr.mxu0 0.0
    %3390 = vmatpush1.msra.mxu0 %v3093
    %3391 = vmatprep.subr.mxu0 0.0
    %3392 = vmatpush1.msra.mxu0 %v3096
    %3393 = vmatprep.subr.mxu0 0.0
    %3394 = vmatpush1.msra.mxu0 %v3099
    %3395 = vmatprep.subr.mxu0 0.0
    %3396 = vmatpush1.msra.mxu0 %v3102
    %3397 = vmatprep.subr.mxu0 0.0
    %3398 = vmatpush1.msra.mxu0 %v3105
    %3399 = vmatprep.mubr.f32.mxu0 %v2913
    %3400 = vmatmul.mubr.f32.gmra.mrb[0].mxu0 %v2912
    %v3401 = vpop.f32.mrb[0].mxu0
    %v3402 = vadd.f32 %v3332, %v3401
    %v3403 = vpop.f32.mrb[0].mxu0
    %3404 = vdwg.mxu0
    %v3405 = vmax.f32 %v3261, 0.0
    %v3406 = vmax.f32 %v3263, 0.0
    %v3407 = vmax.f32 %v3402, 0.0
    %v3408 = vld [vmem:[%s11] sm:$0xff]
    %v3409 = vld [vmem:[%s11 + $0x8] sm:$0xff]
    %v3410 = vld [vmem:[%s11 + $0x10] sm:$0xff]
    %v3411 = vld [vmem:[%s11 + $0x18] sm:$0xff]
    %v3412 = vld [vmem:[%s11 + $0x20] sm:$0xff]
    %v3413 = vld [vmem:[%s11 + $0x28] sm:$0xff]
    %v3414 = vld [vmem:[%s11 + $0x30] sm:$0xff]
    %v3415 = vld [vmem:[%s11 + $0x38] sm:$0xff]
    %v3416 = vld [vmem:[%s11 + $0x40] sm:$0xff]
    %v3417 = vld [vmem:[%s11 + $0x48] sm:$0xff]
    %v3418 = vld [vmem:[%s11 + $0x50] sm:$0xff]
    %v3419 = vld [vmem:[%s11 + $0x58] sm:$0xff]
    %v3420 = vld [vmem:[%s11 + $0x60] sm:$0xff]
    %v3421 = vld [vmem:[%s11 + $0x68] sm:$0xff]
    %v3422 = vld [vmem:[%s11 + $0x70] sm:$0xff]
    %v3423 = vld [vmem:[%s11 + $0x78] sm:$0xff]
    %v3424 = vld [vmem:[%s11 + $0x80] sm:$0xff]
    %v3425 = vld [vmem:[%s11 + $0x88] sm:$0xff]
    %v3426 = vld [vmem:[%s11 + $0x90] sm:$0xff]
    %v3427 = vld [vmem:[%s11 + $0x98] sm:$0xff]
    %v3428 = vld [vmem:[%s11 + $0xa0] sm:$0xff]
    %v3429 = vld [vmem:[%s11 + $0xa8] sm:$0xff]
    %v3430 = vld [vmem:[%s11 + $0xb0] sm:$0xff]
    %v3431 = vld [vmem:[%s11 + $0xb8] sm:$0xff]
    %v3432 = vld [vmem:[%s11 + $0xc0] sm:$0xff]
    %v3433 = vld [vmem:[%s11 + $0xc8] sm:$0xff]
    %v3434 = vld [vmem:[%s11 + $0xd0] sm:$0xff]
    %v3435 = vld [vmem:[%s11 + $0xd8] sm:$0xff]
    %v3436 = vld [vmem:[%s11 + $0xe0] sm:$0xff]
    %v3437 = vld [vmem:[%s11 + $0xe8] sm:$0xff]
    %v3438 = vld [vmem:[%s11 + $0xf0] sm:$0xff]
    %v3439 = vld [vmem:[%s11 + $0xf8] sm:$0xff]
    %v3440 = vld [vmem:[%s11 + $0x100] sm:$0xff]
    %v3441 = vld [vmem:[%s11 + $0x108] sm:$0xff]
    %v3442 = vld [vmem:[%s11 + $0x110] sm:$0xff]
    %v3443 = vld [vmem:[%s11 + $0x118] sm:$0xff]
    %v3444 = vld [vmem:[%s11 + $0x120] sm:$0xff]
    %v3445 = vld [vmem:[%s11 + $0x128] sm:$0xff]
    %v3446 = vld [vmem:[%s11 + $0x130] sm:$0xff]
    %v3447 = vld [vmem:[%s11 + $0x138] sm:$0xff]
    %v3448 = vld [vmem:[%s11 + $0x140] sm:$0xff]
    %v3449 = vld [vmem:[%s11 + $0x148] sm:$0xff]
    %v3450 = vld [vmem:[%s11 + $0x150] sm:$0xff]
    %v3451 = vld [vmem:[%s11 + $0x158] sm:$0xff]
    %v3452 = vld [vmem:[%s11 + $0x160] sm:$0xff]
    %v3453 = vld [vmem:[%s11 + $0x168] sm:$0xff]
    %v3454 = vld [vmem:[%s11 + $0x170] sm:$0xff]
    %v3455 = vld [vmem:[%s11 + $0x178] sm:$0xff]
    %v3456 = vld [vmem:[%s11 + $0x180] sm:$0xff]
    %v3457 = vld [vmem:[%s11 + $0x188] sm:$0xff]
    %v3458 = vld [vmem:[%s11 + $0x190] sm:$0xff]
    %v3459 = vld [vmem:[%s11 + $0x198] sm:$0xff]
    %v3460 = vld [vmem:[%s11 + $0x1a0] sm:$0xff]
    %v3461 = vld [vmem:[%s11 + $0x1a8] sm:$0xff]
    %v3462 = vld [vmem:[%s11 + $0x1b0] sm:$0xff]
    %v3463 = vld [vmem:[%s11 + $0x1b8] sm:$0xff]
    %v3464 = vld [vmem:[%s11 + $0x1c0] sm:$0xff]
    %v3465 = vld [vmem:[%s11 + $0x1c8] sm:$0xff]
    %v3466 = vld [vmem:[%s11 + $0x1d0] sm:$0xff]
    %v3467 = vld [vmem:[%s11 + $0x1d8] sm:$0xff]
    %v3468 = vld [vmem:[%s11 + $0x1e0] sm:$0xff]
    %v3469 = vld [vmem:[%s11 + $0x1e8] sm:$0xff]
    %v3470 = vld [vmem:[%s11 + $0x1f0] sm:$0xff]
    %v3471 = vld [vmem:[%s11 + $0x1f8] sm:$0xff]
    %v3472 = vld [vmem:[%s11 + $0x200] sm:$0xff]
    %v3473 = vld [vmem:[%s11 + $0x208] sm:$0xff]
    %v3474 = vld [vmem:[%s11 + $0x210] sm:$0xff]
    %v3475 = vld [vmem:[%s11 + $0x218] sm:$0xff]
    %v3476 = vld [vmem:[%s11 + $0x220] sm:$0xff]
    %v3477 = vld [vmem:[%s11 + $0x228] sm:$0xff]
    %v3478 = vld [vmem:[%s11 + $0x230] sm:$0xff]
    %v3479 = vld [vmem:[%s11 + $0x238] sm:$0xff]
    %v3480 = vld [vmem:[%s11 + $0x240] sm:$0xff]
    %v3481 = vld [vmem:[%s11 + $0x248] sm:$0xff]
    %v3482 = vld [vmem:[%s11 + $0x250] sm:$0xff]
    %v3483 = vld [vmem:[%s11 + $0x258] sm:$0xff]
    %v3484 = vld [vmem:[%s11 + $0x260] sm:$0xff]
    %v3485 = vld [vmem:[%s11 + $0x268] sm:$0xff]
    %v3486 = vld [vmem:[%s11 + $0x270] sm:$0xff]
    %v3487 = vld [vmem:[%s11 + $0x278] sm:$0xff]
    %v3488 = vld [vmem:[%s11 + $0x280] sm:$0xff]
    %v3489 = vld [vmem:[%s11 + $0x288] sm:$0xff]
    %v3490 = vld [vmem:[%s11 + $0x290] sm:$0xff]
    %v3491 = vld [vmem:[%s11 + $0x298] sm:$0xff]
    %v3492 = vld [vmem:[%s11 + $0x2a0] sm:$0xff]
    %v3493 = vld [vmem:[%s11 + $0x2a8] sm:$0xff]
    %v3494 = vld [vmem:[%s11 + $0x2b0] sm:$0xff]
    %v3495 = vld [vmem:[%s11 + $0x2b8] sm:$0xff]
    %v3496 = vld [vmem:[%s11 + $0x2c0] sm:$0xff]
    %v3497 = vld [vmem:[%s11 + $0x2c8] sm:$0xff]
    %v3498 = vld [vmem:[%s11 + $0x2d0] sm:$0xff]
    %v3499 = vld [vmem:[%s11 + $0x2d8] sm:$0xff]
    %v3500 = vld [vmem:[%s11 + $0x2e0] sm:$0xff]
    %v3501 = vld [vmem:[%s11 + $0x2e8] sm:$0xff]
    %v3502 = vld [vmem:[%s11 + $0x2f0] sm:$0xff]
    %v3503 = vld [vmem:[%s11 + $0x2f8] sm:$0xff]
    %v3504 = vld [vmem:[%s12] sm:$0x3]
    %v3506 = vlaneseq
    %v3507 = vshrl.u32 %v3506, 7
    %v3508 = vsub.s32 0, %v3507
    %v3509 = vrot.slane %v3504, %v3508
    %v3510 = vlaneseq
    %v3511 = vshrl.u32 %v3510, 7
    %v3512 = vsub.s32 1, %v3511
    %v3513 = vrot.slane %v3504, %v3512
    %3516 = vmatprep.subr.mxu0 %v3409
    %3517 = vmatpush1.msra.mxu0 %v3408
    %3518 = vmatprep.subr.mxu0 %v3411
    %3519 = vmatpush1.msra.mxu0 %v3410
    %3520 = vmatprep.subr.mxu0 %v3413
    %3521 = vmatpush1.msra.mxu0 %v3412
    %3522 = vmatprep.subr.mxu0 %v3415
    %3523 = vmatpush1.msra.mxu0 %v3414
    %3524 = vmatprep.subr.mxu0 %v3417
    %3525 = vmatpush1.msra.mxu0 %v3416
    %3526 = vmatprep.subr.mxu0 %v3419
    %3527 = vmatpush1.msra.mxu0 %v3418
    %3528 = vmatprep.subr.mxu0 %v3421
    %3529 = vmatpush1.msra.mxu0 %v3420
    %3530 = vmatprep.subr.mxu0 %v3423
    %3531 = vmatpush1.msra.mxu0 %v3422
    %3532 = vmatprep.subr.mxu0 %v3425
    %3533 = vmatpush1.msra.mxu0 %v3424
    %3534 = vmatprep.subr.mxu0 %v3427
    %3535 = vmatpush1.msra.mxu0 %v3426
    %3536 = vmatprep.subr.mxu0 %v3429
    %3537 = vmatpush1.msra.mxu0 %v3428
    %3538 = vmatprep.subr.mxu0 %v3431
    %3539 = vmatpush1.msra.mxu0 %v3430
    %3540 = vmatprep.subr.mxu0 %v3433
    %3541 = vmatpush1.msra.mxu0 %v3432
    %3542 = vmatprep.subr.mxu0 %v3435
    %3543 = vmatpush1.msra.mxu0 %v3434
    %3544 = vmatprep.subr.mxu0 %v3437
    %3545 = vmatpush1.msra.mxu0 %v3436
    %3546 = vmatprep.subr.mxu0 %v3439
    %3547 = vmatpush1.msra.mxu0 %v3438
    %3548 = vmatprep.subr.mxu0 %v3441
    %3549 = vmatpush1.msra.mxu0 %v3440
    %3550 = vmatprep.subr.mxu0 %v3443
    %3551 = vmatpush1.msra.mxu0 %v3442
    %3552 = vmatprep.subr.mxu0 %v3445
    %3553 = vmatpush1.msra.mxu0 %v3444
    %3554 = vmatprep.subr.mxu0 %v3447
    %3555 = vmatpush1.msra.mxu0 %v3446
    %3556 = vmatprep.subr.mxu0 %v3449
    %3557 = vmatpush1.msra.mxu0 %v3448
    %3558 = vmatprep.subr.mxu0 %v3451
    %3559 = vmatpush1.msra.mxu0 %v3450
    %3560 = vmatprep.subr.mxu0 %v3453
    %3561 = vmatpush1.msra.mxu0 %v3452
    %3562 = vmatprep.subr.mxu0 %v3455
    %3563 = vmatpush1.msra.mxu0 %v3454
    %3564 = vmatprep.subr.mxu0 %v3457
    %3565 = vmatpush1.msra.mxu0 %v3456
    %3566 = vmatprep.subr.mxu0 %v3459
    %3567 = vmatpush1.msra.mxu0 %v3458
    %3568 = vmatprep.subr.mxu0 %v3461
    %3569 = vmatpush1.msra.mxu0 %v3460
    %3570 = vmatprep.subr.mxu0 %v3463
    %3571 = vmatpush1.msra.mxu0 %v3462
    %3572 = vmatprep.subr.mxu0 %v3465
    %3573 = vmatpush1.msra.mxu0 %v3464
    %3574 = vmatprep.subr.mxu0 %v3467
    %3575 = vmatpush1.msra.mxu0 %v3466
    %3576 = vmatprep.subr.mxu0 %v3469
    %3577 = vmatpush1.msra.mxu0 %v3468
    %3578 = vmatprep.subr.mxu0 %v3471
    %3579 = vmatpush1.msra.mxu0 %v3470
    %3580 = vmatprep.mubr.f32.mxu0 %v3406
    %3581 = vmatmul.mubr.f32.gmra.mrb[0].mxu0 %v3405
    %v3582 = vpop.f32.mrb[0].mxu0
    %v3583 = vadd.f32 %v3509, %v3582
    %v3584 = vpop.f32.mrb[0].mxu0
    %v3585 = vadd.f32 %v3513, %v3584
    %3586 = vdwg.mxu0
    %3587 = vmatprep.subr.mxu0 %v3473
    %3588 = vmatpush1.msra.mxu0 %v3472
    %3589 = vmatprep.subr.mxu0 %v3475
    %3590 = vmatpush1.msra.mxu0 %v3474
    %3591 = vmatprep.subr.mxu0 %v3477
    %3592 = vmatpush1.msra.mxu0 %v3476
    %3593 = vmatprep.subr.mxu0 %v3479
    %3594 = vmatpush1.msra.mxu0 %v3478
    %3595 = vmatprep.subr.mxu0 %v3481
    %3596 = vmatpush1.msra.mxu0 %v3480
    %3597 = vmatprep.subr.mxu0 %v3483
    %3598 = vmatpush1.msra.mxu0 %v3482
    %3599 = vmatprep.subr.mxu0 %v3485
    %3600 = vmatpush1.msra.mxu0 %v3484
    %3601 = vmatprep.subr.mxu0 %v3487
    %3602 = vmatpush1.msra.mxu0 %v3486
    %3603 = vmatprep.subr.mxu0 %v3489
    %3604 = vmatpush1.msra.mxu0 %v3488
    %3605 = vmatprep.subr.mxu0 %v3491
    %3606 = vmatpush1.msra.mxu0 %v3490
    %3607 = vmatprep.subr.mxu0 %v3493
    %3608 = vmatpush1.msra.mxu0 %v3492
    %3609 = vmatprep.subr.mxu0 %v3495
    %3610 = vmatpush1.msra.mxu0 %v3494
    %3611 = vmatprep.subr.mxu0 %v3497
    %3612 = vmatpush1.msra.mxu0 %v3496
    %3613 = vmatprep.subr.mxu0 %v3499
    %3614 = vmatpush1.msra.mxu0 %v3498
    %3615 = vmatprep.subr.mxu0 %v3501
    %3616 = vmatpush1.msra.mxu0 %v3500
    %3617 = vmatprep.subr.mxu0 %v3503
    %3618 = vmatpush1.msra.mxu0 %v3502
    %3619 = vmatprep.subr.mxu0 0.0
    %3620 = vmatpush1.msra.mxu0 0.0
    %3621 = vmatprep.subr.mxu0 0.0
    %3622 = vmatpush1.msra.mxu0 0.0
    %3623 = vmatprep.subr.mxu0 0.0
    %3624 = vmatpush1.msra.mxu0 0.0
    %3625 = vmatprep.subr.mxu0 0.0
    %3626 = vmatpush1.msra.mxu0 0.0
    %3627 = vmatprep.subr.mxu0 0.0
    %3628 = vmatpush1.msra.mxu0 0.0
    %3629 = vmatprep.subr.mxu0 0.0
    %3630 = vmatpush1.msra.mxu0 0.0
    %3631 = vmatprep.subr.mxu0 0.0
    %3632 = vmatpush1.msra.mxu0 0.0
    %3633 = vmatprep.subr.mxu0 0.0
    %3634 = vmatpush1.msra.mxu0 0.0
    %3635 = vmatprep.subr.mxu0 0.0
    %3636 = vmatpush1.msra.mxu0 0.0
    %3637 = vmatprep.subr.mxu0 0.0
    %3638 = vmatpush1.msra.mxu0 0.0
    %3639 = vmatprep.subr.mxu0 0.0
    %3640 = vmatpush1.msra.mxu0 0.0
    %3641 = vmatprep.subr.mxu0 0.0
    %3642 = vmatpush1.msra.mxu0 0.0
    %3643 = vmatprep.subr.mxu0 0.0
    %3644 = vmatpush1.msra.mxu0 0.0
    %3645 = vmatprep.subr.mxu0 0.0
    %3646 = vmatpush1.msra.mxu0 0.0
    %3647 = vmatprep.subr.mxu0 0.0
    %3648 = vmatpush1.msra.mxu0 0.0
    %3649 = vmatprep.subr.mxu0 0.0
    %3650 = vmatpush1.msra.mxu0 0.0
    %3651 = vmatprep.mubr.f32.mxu0 0.0
    %3652 = vmatmul.mubr.f32.gmra.mrb[0].mxu0 %v3407
    %v3653 = vpop.f32.mrb[0].mxu0
    %v3654 = vadd.f32 %v3583, %v3653
    %v3655 = vpop.f32.mrb[0].mxu0
    %v3656 = vadd.f32 %v3585, %v3655
    %3657 = vdwg.mxu0
    %v3658 = vmax.f32 %v3654, 0.0
    %v3659 = vmax.f32 %v3656, 0.0
    %v3660 = vld [vmem:[#allocation7] sm:$0xff]
    %v3661 = vld [vmem:[#allocation7 + $0x8] sm:$0xff]
    %v3662 = vld [vmem:[#allocation7 + $0x10] sm:$0xff]
    %v3663 = vld [vmem:[#allocation7 + $0x18] sm:$0xff]
    %v3664 = vld [vmem:[#allocation7 + $0x20] sm:$0xff]
    %v3665 = vld [vmem:[#allocation7 + $0x28] sm:$0xff]
    %v3666 = vld [vmem:[#allocation7 + $0x30] sm:$0xff]
    %v3667 = vld [vmem:[#allocation7 + $0x38] sm:$0xff]
    %v3668 = vld [vmem:[#allocation7 + $0x40] sm:$0xff]
    %v3669 = vld [vmem:[#allocation7 + $0x48] sm:$0xff]
    %v3670 = vld [vmem:[#allocation7 + $0x50] sm:$0xff]
    %v3671 = vld [vmem:[#allocation7 + $0x58] sm:$0xff]
    %v3672 = vld [vmem:[#allocation7 + $0x60] sm:$0xff]
    %v3673 = vld [vmem:[#allocation7 + $0x68] sm:$0xff]
    %v3674 = vld [vmem:[#allocation7 + $0x70] sm:$0xff]
    %v3675 = vld [vmem:[#allocation7 + $0x78] sm:$0xff]
    %v3676 = vld [vmem:[#allocation7 + $0x80] sm:$0xff]
    %v3677 = vld [vmem:[#allocation7 + $0x88] sm:$0xff]
    %v3678 = vld [vmem:[#allocation7 + $0x90] sm:$0xff]
    %v3679 = vld [vmem:[#allocation7 + $0x98] sm:$0xff]
    %v3680 = vld [vmem:[#allocation7 + $0xa0] sm:$0xff]
    %v3681 = vld [vmem:[#allocation7 + $0xa8] sm:$0xff]
    %v3682 = vld [vmem:[#allocation7 + $0xb0] sm:$0xff]
    %v3683 = vld [vmem:[#allocation7 + $0xb8] sm:$0xff]
    %v3684 = vld [vmem:[#allocation7 + $0xc0] sm:$0xff]
    %v3685 = vld [vmem:[#allocation7 + $0xc8] sm:$0xff]
    %v3686 = vld [vmem:[#allocation7 + $0xd0] sm:$0xff]
    %v3687 = vld [vmem:[#allocation7 + $0xd8] sm:$0xff]
    %v3688 = vld [vmem:[#allocation7 + $0xe0] sm:$0xff]
    %v3689 = vld [vmem:[#allocation7 + $0xe8] sm:$0xff]
    %v3690 = vld [vmem:[#allocation7 + $0xf0] sm:$0xff]
    %v3691 = vld [vmem:[#allocation7 + $0xf8] sm:$0xff]
    %v3692 = vld [vmem:[%s14] sm:$0x1]
    %v3694 = vlaneseq
    %v3695 = vshrl.u32 %v3694, 7
    %v3696 = vsub.s32 0, %v3695
    %v3697 = vrot.slane %v3692, %v3696
    %3699 = vmatprep.subr.mxu0 0.0
    %3700 = vmatpush1.msra.mxu0 %v3660
    %3701 = vmatprep.subr.mxu0 0.0
    %3702 = vmatpush1.msra.mxu0 %v3661
    %3703 = vmatprep.subr.mxu0 0.0
    %3704 = vmatpush1.msra.mxu0 %v3662
    %3705 = vmatprep.subr.mxu0 0.0
    %3706 = vmatpush1.msra.mxu0 %v3663
    %3707 = vmatprep.subr.mxu0 0.0
    %3708 = vmatpush1.msra.mxu0 %v3664
    %3709 = vmatprep.subr.mxu0 0.0
    %3710 = vmatpush1.msra.mxu0 %v3665
    %3711 = vmatprep.subr.mxu0 0.0
    %3712 = vmatpush1.msra.mxu0 %v3666
    %3713 = vmatprep.subr.mxu0 0.0
    %3714 = vmatpush1.msra.mxu0 %v3667
    %3715 = vmatprep.subr.mxu0 0.0
    %3716 = vmatpush1.msra.mxu0 %v3668
    %3717 = vmatprep.subr.mxu0 0.0
    %3718 = vmatpush1.msra.mxu0 %v3669
    %3719 = vmatprep.subr.mxu0 0.0
    %3720 = vmatpush1.msra.mxu0 %v3670
    %3721 = vmatprep.subr.mxu0 0.0
    %3722 = vmatpush1.msra.mxu0 %v3671
    %3723 = vmatprep.subr.mxu0 0.0
    %3724 = vmatpush1.msra.mxu0 %v3672
    %3725 = vmatprep.subr.mxu0 0.0
    %3726 = vmatpush1.msra.mxu0 %v3673
    %3727 = vmatprep.subr.mxu0 0.0
    %3728 = vmatpush1.msra.mxu0 %v3674
    %3729 = vmatprep.subr.mxu0 0.0
    %3730 = vmatpush1.msra.mxu0 %v3675
    %3731 = vmatprep.subr.mxu0 0.0
    %3732 = vmatpush1.msra.mxu0 %v3676
    %3733 = vmatprep.subr.mxu0 0.0
    %3734 = vmatpush1.msra.mxu0 %v3677
    %3735 = vmatprep.subr.mxu0 0.0
    %3736 = vmatpush1.msra.mxu0 %v3678
    %3737 = vmatprep.subr.mxu0 0.0
    %3738 = vmatpush1.msra.mxu0 %v3679
    %3739 = vmatprep.subr.mxu0 0.0
    %3740 = vmatpush1.msra.mxu0 %v3680
    %3741 = vmatprep.subr.mxu0 0.0
    %3742 = vmatpush1.msra.mxu0 %v3681
    %3743 = vmatprep.subr.mxu0 0.0
    %3744 = vmatpush1.msra.mxu0 %v3682
    %3745 = vmatprep.subr.mxu0 0.0
    %3746 = vmatpush1.msra.mxu0 %v3683
    %3747 = vmatprep.subr.mxu0 0.0
    %3748 = vmatpush1.msra.mxu0 %v3684
    %3749 = vmatprep.subr.mxu0 0.0
    %3750 = vmatpush1.msra.mxu0 %v3685
    %3751 = vmatprep.subr.mxu0 0.0
    %3752 = vmatpush1.msra.mxu0 %v3686
    %3753 = vmatprep.subr.mxu0 0.0
    %3754 = vmatpush1.msra.mxu0 %v3687
    %3755 = vmatprep.subr.mxu0 0.0
    %3756 = vmatpush1.msra.mxu0 %v3688
    %3757 = vmatprep.subr.mxu0 0.0
    %3758 = vmatpush1.msra.mxu0 %v3689
    %3759 = vmatprep.subr.mxu0 0.0
    %3760 = vmatpush1.msra.mxu0 %v3690
    %3761 = vmatprep.subr.mxu0 0.0
    %3762 = vmatpush1.msra.mxu0 %v3691
    %3763 = vmatprep.mubr.f32.mxu0 %v3659
    %3764 = vmatmul.mubr.f32.gmra.mrb[0].mxu0 %v3658
    %v3765 = vpop.f32.mrb[0].mxu0
    %v3766 = vadd.f32 %v3697, %v3765
    %v3767 = vpop.f32.mrb[0].mxu0
    %3768 = vdwg.mxu0
    %3769 = vst [vmem:[%s15] sm:$0xff] %v3766
    // Predicated region
    $region78: #{classifier_forward.1} parent=1 // pred_check
      _
    $region79: #{classifier_forward.1} parent=1 // pred_check_branch
      %3771 = sbr.rel (0) target = $region81
    $region80: #{classifier_forward.1} parent=1 // pred_region
      _
    $region81: #{classifier_forward.1} parent=1 // pred_fallthru
      _
    // Predicated region
    $region82: #{classifier_forward.1} parent=1 // pred_check
      _
    $region83: #{classifier_forward.1} parent=1 // pred_check_branch
      %3773 = sbr.rel (0) target = $region85
    $region84: #{classifier_forward.1} parent=1 // pred_region
      _
    $region85: #{classifier_forward.1} parent=1 // pred_fallthru
      _
    %3774 = vsyncpa [#allocation3], 1
    %3775 = vsyncpa [#allocation5], 1
    %3776 = vsyncpa [#allocation8], 1

</llo_original>
